<compile_context>
chip_gen: v6e
topology: v6e:2x2x1
jax: 0.10.0
libtpu: 0.0.40
codegen_flags: <defaults>
</compile_context>

<pallas_src>
import functools

import jax
import jax.numpy as jnp
from jax import lax
from jax.experimental import pallas as pl
from jax.experimental.pallas import tpu as pltpu

EPS = 1e-5


def _instance_norm_relu(h):
    """InstanceNorm1d(affine=False, eps=1e-5) over the point axis + ReLU.

    h: (Bt, N, C) float32.  Single-pass moments: mean = E[x],
    var = E[x^2] - E[x]^2 (biased variance, matching PyTorch InstanceNorm1d).
    """
    n_inv = 1.0 / h.shape[1]
    s1 = jnp.sum(h, axis=1, keepdims=True)
    s2 = jnp.sum(h * h, axis=1, keepdims=True)
    mean = s1 * n_inv
    var = jnp.maximum(s2 * n_inv - mean * mean, 0.0)
    return jnp.maximum((h - mean) * lax.rsqrt(var + EPS), 0.0)


def _matmul_f32(h, w):
    """(Bt, M, C) x (C, D) -> (Bt, M, D), f32 accumulation on the MXU.

    Merges (Bt, M) into one large-M 2-D matmul when the merge keeps the
    sublane tiling aligned (M % 8 == 0, or Bt == 1); otherwise falls back to
    the rank-3 einsum lowering.
    """
    bt, m, c = h.shape
    d = w.shape[1]
    if bt == 1 or m % 8 == 0:
        out = jnp.dot(h.reshape(bt * m, c), w, preferred_element_type=jnp.float32)
        return out.reshape(bt, m, d)
    return jnp.einsum('bmc,cd->bmd', h, w, preferred_element_type=jnp.float32)


def pose_feature_kernel(x_ref, w1_ref, w2_ref, w3_ref, o_ref, h2_ref, *,
                        nt, n_chunks):
    x = x_ref[...].astype(jnp.float32)                      # (Bt, N, 3)
    w1 = w1_ref[...]                                        # (3, 64) f32
    bt, n, _ = x.shape

    # ---- Layer 1: K=3 contraction as three broadcast FMAs on the VPU. ----
    h = (x[:, :, 0:1] * w1[0:1, :][None]
         + x[:, :, 1:2] * w1[1:2, :][None]
         + x[:, :, 2:3] * w1[2:3, :][None])                 # (Bt, N, 64)
    h = _instance_norm_relu(h)

    # ---- Layer 2: MXU matmul, bf16 feeds / f32 accumulation. ----
    h = _matmul_f32(h.astype(jnp.bfloat16), w2_ref[...])    # (Bt, N, 128)
    h = _instance_norm_relu(h)

    # Stage the normalized layer-2 activation (bf16) for the streamed layer 3.
    h2_ref[...] = h.astype(jnp.bfloat16)

    # ---- Layer 3: streamed over point chunks, max-pool folded into norm. ----
    # relu((t - mean) * inv_std) is monotone in t (inv_std > 0), so the final
    # max over points commutes with normalize+ReLU.  Only per-channel sum,
    # sum-of-squares and running max of the raw pre-norm activations are
    # accumulated; the normalized (N, 1024) tensor is never materialized.
    w3 = w3_ref[...]                                        # (128, 1024) bf16

    def chunk_step(t, carry):
        s1, s2, mx = carry
        start = pl.multiple_of(t * nt, nt)
        c = h2_ref[:, pl.ds(start, nt), :]                  # (Bt, nt, 128) bf16
        h3 = _matmul_f32(c, w3)                             # (Bt, nt, 1024) f32
        s1 = s1 + jnp.sum(h3, axis=1)
        s2 = s2 + jnp.sum(h3 * h3, axis=1)
        mx = jnp.maximum(mx, jnp.max(h3, axis=1))
        return s1, s2, mx

    zeros = jnp.zeros((bt, 1024), jnp.float32)
    s1, s2, mx = lax.fori_loop(
        0, n_chunks, chunk_step,
        (zeros, zeros, jnp.full((bt, 1024), -jnp.inf, jnp.float32)))

    n_inv = 1.0 / n
    mean = s1 * n_inv
    var = jnp.maximum(s2 * n_inv - mean * mean, 0.0)
    o_ref[:, 0, :] = jnp.maximum((mx - mean) * lax.rsqrt(var + EPS), 0.0)


# --------------------------- sizing heuristics -------------------------------

def _round_up(x, m):
    return (x + m - 1) // m * m


def _physical_vmem_bytes():
    try:
        return int(pltpu.get_tpu_info().vmem_capacity_bytes)
    except Exception:
        return 64 * 1024 * 1024          # conservative (v7x per-core VMEM)


def _pick_chunk(n, target=256, min_nt=128):
    """Largest divisor of n in [min_nt, target]; n itself if none (no streaming)."""
    if n <= target:
        return n
    for nt in range(target, min_nt - 1, -1):
        if n % nt == 0:
            return nt
    return n


def _footprint_bytes(bt, n, nt):
    """Conservative per-grid-step VMEM footprint.  Counts the 128-lane padding
    of the (bt, N, 3) input block, bf16 activation copies, the streamed layer-3
    chunk, double-buffered inputs/outputs and the (double-buffered) weights."""
    n8, nt8, bt8 = _round_up(n, 8), _round_up(nt, 8), _round_up(bt, 8)
    fp = 2 * bt * n8 * 128 * 4                                  # input block (3 -> 128 lanes)
    fp += 2 * (8 * 128 * 4 + 64 * 128 * 2 + 128 * 1024 * 2)     # weights
    fp += bt * n8 * 64 * (4 + 2)                                # layer-1 act f32 + bf16 feed
    fp += bt * n8 * 128 * (4 + 2)                               # layer-2 act f32 + bf16 scratch
    fp += 2 * bt * nt8 * 1024 * 4                               # layer-3 chunk (+ squared temp)
    fp += 2 * bt8 * 1024 * 4                                    # output block
    fp += 2 * 1024 * 1024                                       # accumulators / slack
    return fp


def _pick_block_b(B, n, nt, budget, max_bt=8):
    """Largest divisor of B (<= max_bt) whose per-step footprint fits the VMEM
    budget, while keeping grid length >= 2 so both v7x TensorCores get work."""
    best = 1
    for bt in range(1, min(B, max_bt) + 1):
        if B % bt:
            continue
        if B >= 2 and B // bt < 2:
            continue
        if _footprint_bytes(bt, n, nt) <= budget:
            best = bt
    return best


# --------------------------------- wrapper -----------------------------------

def pose_feature(v, params, *, block_b=None):
    """v: (B, 3, N) float32 (PyTorch NCW layout). Returns (B, 1024, 1)."""
    w1, b1, w2, b2, w3, b3 = params
    del b1, b2, b3   # per-channel bias is a no-op under InstanceNorm1d(affine=False)
    B, c_in, N = v.shape
    assert c_in == 3

    # TODO(synk): keep the NCW (Bt, 3, N) block (lane-dense in N) and do the
    # 3xN -> Nx3 rearrangement in-kernel to avoid the 3->128 lane padding of
    # this transposed input block; for now the padding is counted honestly in
    # _footprint_bytes and limits block_b instead.
    x = jnp.transpose(v, (0, 2, 1)).astype(jnp.float32)       # (B, N, 3)
    w1 = w1.astype(jnp.float32)
    w2 = w2.astype(jnp.bfloat16)
    w3 = w3.astype(jnp.bfloat16)

    nt = _pick_chunk(N)
    n_chunks = N // nt

    phys = _physical_vmem_bytes()
    budget = (phys * 7) // 10                 # headroom below physical VMEM
    if block_b is None:
        block_b = _pick_block_b(B, N, nt, budget)
    assert B % block_b == 0
    grid = (B // block_b,)

    footprint = _footprint_bytes(block_b, N, nt)
    cp_kwargs = dict(dimension_semantics=("parallel",))
    # v5e's default scoped VMEM is only 16 MiB -> raise well before that, but
    # never request more than ~75% of physical VMEM (64 MiB on v7x).
    if footprint > 12 * 1024 * 1024:
        cp_kwargs["vmem_limit_bytes"] = min(
            (phys * 3) // 4, footprint + footprint // 4 + (8 << 20))
    # TODO(synk): if even block_b=1 exceeds the budget (very large N), stream
    # layers 1/2 over point tiles as well instead of relying on a raised limit.

    def const_spec(shape):
        return pl.BlockSpec(shape, lambda i: (0,) * len(shape))

    kernel = functools.partial(pose_feature_kernel, nt=nt, n_chunks=n_chunks)

    out = pl.pallas_call(
        kernel,
        out_shape=jax.ShapeDtypeStruct((B, 1, 1024), jnp.float32),
        grid_spec=pltpu.PrefetchScalarGridSpec(
            num_scalar_prefetch=0,
            grid=grid,
            in_specs=[
                pl.BlockSpec((block_b, N, 3), lambda i: (i, 0, 0)),   # x (NWC)
                const_spec((3, 64)),                                  # w1 (f32)
                const_spec((64, 128)),                                # w2 (bf16)
                const_spec((128, 1024)),                              # w3 (bf16)
            ],
            out_specs=pl.BlockSpec((block_b, 1, 1024), lambda i: (i, 0, 0)),
            scratch_shapes=[pltpu.VMEM((block_b, N, 128), jnp.bfloat16)],
        ),
        compiler_params=pltpu.CompilerParams(**cp_kwargs),
    )(x, w1, w2, w3)

    return jnp.transpose(out, (0, 2, 1))                      # (B, 1024, 1)


# -------------------------- reference & test harness -------------------------

def pose_feature_ref(v, params):
    """Pure-JAX f32 reference matching the PyTorch module (biases included)."""
    w1, b1, w2, b2, w3, b3 = params
    x = jnp.transpose(v, (0, 2, 1)).astype(jnp.float32)       # (B, N, 3)

    def layer(h, w, b):
        h = jnp.einsum('bnc,cd->bnd', h, w) + b[None]
        mean = jnp.mean(h, axis=1, keepdims=True)
        var = jnp.mean((h - mean) ** 2, axis=1, keepdims=True)
        return jnp.maximum((h - mean) * lax.rsqrt(var + EPS), 0.0)

    h = layer(x, w1, b1)
    h = layer(h, w2, b2)
    h = layer(h, w3, b3)
    return jnp.transpose(jnp.max(h, axis=1, keepdims=True), (0, 2, 1))


def init_params(key):
    ks = jax.random.split(key, 6)

    def lin(kw, kb, cin, cout):
        bound = 1.0 / jnp.sqrt(cin)
        w = jax.random.uniform(kw, (cin, cout), jnp.float32, -bound, bound)
        b = jax.random.uniform(kb, (1, cout), jnp.float32, -bound, bound)
        return w, b

    w1, b1 = lin(ks[0], ks[1], 3, 64)
    w2, b2 = lin(ks[2], ks[3], 64, 128)
    w3, b3 = lin(ks[4], ks[5], 128, 1024)
    return (w1, b1, w2, b2, w3, b3)


if __name__ == "__main__":
    key = jax.random.PRNGKey(0)
    kp, kv = jax.random.split(key)
    params = init_params(kp)

    # Config 1: small shapes; block_b=1, grid=2, single layer-3 chunk.
    B, N = 2, 256
    v = jax.random.normal(kv, (B, 3, N), dtype=jnp.float32)
    out = jax.block_until_ready(pose_feature(v, params))
    ref = jax.block_until_ready(pose_feature_ref(v, params))
    assert out.shape == (B, 1024, 1)
    # bf16 matmul inputs (f32 accumulation) -> looser tolerance vs f32 reference.
    assert jnp.allclose(out, ref, atol=3e-2, rtol=3e-2), \
        float(jnp.max(jnp.abs(out - ref)))

    # Config 2: exercises block_b > 1 (merged-M MXU path) and multi-chunk
    # layer-3 streaming with the folded max-pool.
    B2, N2 = 4, 384
    v2 = jax.random.normal(jax.random.PRNGKey(1), (B2, 3, N2), dtype=jnp.float32)
    out2 = jax.block_until_ready(pose_feature(v2, params))
    ref2 = jax.block_until_ready(pose_feature_ref(v2, params))
    assert out2.shape == (B2, 1024, 1)
    assert jnp.allclose(out2, ref2, atol=3e-2, rtol=3e-2), \
        float(jnp.max(jnp.abs(out2 - ref2)))

    print("KERNEL_OK")
</pallas_src>

<mosaic_0001>
module attributes {stable_mosaic.version = 11 : i64} {
  func.func @pose_feature_kernel(%arg0: i32, %arg1: memref<1x256x3xf32, #tpu.memory_space<vmem>>, %arg2: memref<3x64xf32, #tpu.memory_space<vmem>>, %arg3: memref<64x128xbf16, #tpu.memory_space<vmem>>, %arg4: memref<128x1024xbf16, #tpu.memory_space<vmem>>, %arg5: memref<1x1x1024xf32, #tpu.memory_space<vmem>>, %arg6: memref<1x256x128xbf16, #tpu.memory_space<vmem>>) attributes {dimension_semantics = [#tpu.dimension_semantics<parallel>], iteration_bounds = array<i64: 2>, scalar_prefetch = 0 : i64, scratch_operands = 1 : i64, tpu.core_type = #tpu.core_type<tc>, window_params = [{transform_indices = @transform_0, window_bounds = array<i64: 1, 256, 3>}, {pipeline_mode = #tpu.pipeline_mode<synchronous>, transform_indices = @transform_1, window_bounds = array<i64: 3, 64>}, {pipeline_mode = #tpu.pipeline_mode<synchronous>, transform_indices = @transform_2, window_bounds = array<i64: 64, 128>}, {pipeline_mode = #tpu.pipeline_mode<synchronous>, transform_indices = @transform_3, window_bounds = array<i64: 128, 1024>}, {transform_indices = @transform_4, window_bounds = array<i64: 1, 1, 1024>}]} {
    %c0 = arith.constant 0 : index
    %c0_0 = arith.constant 0 : index
    %c0_1 = arith.constant 0 : index
    %0 = vector.load %arg1[%c0, %c0_0, %c0_1] : memref<1x256x3xf32, #tpu.memory_space<vmem>>, vector<1x256x3xf32>
    %c0_2 = arith.constant 0 : index
    %c0_3 = arith.constant 0 : index
    %1 = vector.load %arg2[%c0_2, %c0_3] : memref<3x64xf32, #tpu.memory_space<vmem>>, vector<3x64xf32>
    %2 = vector.extract_strided_slice %0 {offsets = [0, 0, 0], sizes = [1, 256, 1], strides = [1, 1, 1]} : vector<1x256x3xf32> to vector<1x256x1xf32>
    %3 = vector.extract_strided_slice %1 {offsets = [0, 0], sizes = [1, 64], strides = [1, 1]} : vector<3x64xf32> to vector<1x64xf32>
    %4 = vector.shape_cast %3 : vector<1x64xf32> to vector<1x1x64xf32>
    %5 = vector.broadcast %2 : vector<1x256x1xf32> to vector<1x256x64xf32>
    %6 = vector.broadcast %4 : vector<1x1x64xf32> to vector<1x256x64xf32>
    %7 = arith.mulf %5, %6 : vector<1x256x64xf32>
    %8 = vector.extract_strided_slice %0 {offsets = [0, 0, 1], sizes = [1, 256, 1], strides = [1, 1, 1]} : vector<1x256x3xf32> to vector<1x256x1xf32>
    %9 = vector.extract_strided_slice %1 {offsets = [1, 0], sizes = [1, 64], strides = [1, 1]} : vector<3x64xf32> to vector<1x64xf32>
    %10 = vector.shape_cast %9 : vector<1x64xf32> to vector<1x1x64xf32>
    %11 = vector.broadcast %8 : vector<1x256x1xf32> to vector<1x256x64xf32>
    %12 = vector.broadcast %10 : vector<1x1x64xf32> to vector<1x256x64xf32>
    %13 = arith.mulf %11, %12 : vector<1x256x64xf32>
    %14 = arith.addf %7, %13 : vector<1x256x64xf32>
    %15 = vector.extract_strided_slice %0 {offsets = [0, 0, 2], sizes = [1, 256, 1], strides = [1, 1, 1]} : vector<1x256x3xf32> to vector<1x256x1xf32>
    %16 = vector.extract_strided_slice %1 {offsets = [2, 0], sizes = [1, 64], strides = [1, 1]} : vector<3x64xf32> to vector<1x64xf32>
    %17 = vector.shape_cast %16 : vector<1x64xf32> to vector<1x1x64xf32>
    %18 = vector.broadcast %15 : vector<1x256x1xf32> to vector<1x256x64xf32>
    %19 = vector.broadcast %17 : vector<1x1x64xf32> to vector<1x256x64xf32>
    %20 = arith.mulf %18, %19 : vector<1x256x64xf32>
    %21 = arith.addf %14, %20 : vector<1x256x64xf32>
    %cst = arith.constant dense<0.000000e+00> : vector<1x64xf32>
    %22 = vector.multi_reduction <add>, %21, %cst [1] : vector<1x256x64xf32> to vector<1x64xf32>
    %23 = vector.shape_cast %22 : vector<1x64xf32> to vector<1x1x64xf32>
    %24 = arith.mulf %21, %21 : vector<1x256x64xf32>
    %cst_4 = arith.constant dense<0.000000e+00> : vector<1x64xf32>
    %25 = vector.multi_reduction <add>, %24, %cst_4 [1] : vector<1x256x64xf32> to vector<1x64xf32>
    %26 = vector.shape_cast %25 : vector<1x64xf32> to vector<1x1x64xf32>
    %cst_5 = arith.constant 3.906250e-03 : f32
    %27 = vector.broadcast %cst_5 : f32 to vector<1x1x64xf32>
    %28 = arith.mulf %23, %27 : vector<1x1x64xf32>
    %cst_6 = arith.constant 3.906250e-03 : f32
    %29 = vector.broadcast %cst_6 : f32 to vector<1x1x64xf32>
    %30 = arith.mulf %26, %29 : vector<1x1x64xf32>
    %31 = arith.mulf %28, %28 : vector<1x1x64xf32>
    %32 = arith.subf %30, %31 : vector<1x1x64xf32>
    %cst_7 = arith.constant 0.000000e+00 : f32
    %33 = vector.broadcast %cst_7 : f32 to vector<1x1x64xf32>
    %34 = arith.maximumf %32, %33 : vector<1x1x64xf32>
    %35 = vector.broadcast %28 : vector<1x1x64xf32> to vector<1x256x64xf32>
    %36 = arith.subf %21, %35 : vector<1x256x64xf32>
    %cst_8 = arith.constant 9.99999974E-6 : f32
    %37 = vector.broadcast %cst_8 : f32 to vector<1x1x64xf32>
    %38 = arith.addf %34, %37 : vector<1x1x64xf32>
    %39 = math.rsqrt %38 : vector<1x1x64xf32>
    %40 = vector.broadcast %39 : vector<1x1x64xf32> to vector<1x256x64xf32>
    %41 = arith.mulf %36, %40 : vector<1x256x64xf32>
    %cst_9 = arith.constant 0.000000e+00 : f32
    %42 = vector.broadcast %cst_9 : f32 to vector<1x256x64xf32>
    %43 = arith.maximumf %41, %42 : vector<1x256x64xf32>
    %44 = arith.truncf %43 : vector<1x256x64xf32> to vector<1x256x64xbf16>
    %c0_10 = arith.constant 0 : index
    %c0_11 = arith.constant 0 : index
    %45 = vector.load %arg3[%c0_10, %c0_11] : memref<64x128xbf16, #tpu.memory_space<vmem>>, vector<64x128xbf16>
    %46 = vector.shape_cast %44 : vector<1x256x64xbf16> to vector<256x64xbf16>
    %cst_12 = arith.constant dense<0.000000e+00> : vector<256x128xf32>
    %47 = tpu.matmul %46, %45, %cst_12 {dimension_numbers = #tpu.dot_dimension_numbers<[1], [0], [0], [1], [0, 0, 1, 1], [], []>} : vector<256x64xbf16>, vector<64x128xbf16>, vector<256x128xf32> -> vector<256x128xf32>
    %48 = vector.shape_cast %47 : vector<256x128xf32> to vector<1x256x128xf32>
    %cst_13 = arith.constant dense<0.000000e+00> : vector<1x128xf32>
    %49 = vector.multi_reduction <add>, %48, %cst_13 [1] : vector<1x256x128xf32> to vector<1x128xf32>
    %50 = vector.shape_cast %49 : vector<1x128xf32> to vector<1x1x128xf32>
    %51 = arith.mulf %48, %48 : vector<1x256x128xf32>
    %cst_14 = arith.constant dense<0.000000e+00> : vector<1x128xf32>
    %52 = vector.multi_reduction <add>, %51, %cst_14 [1] : vector<1x256x128xf32> to vector<1x128xf32>
    %53 = vector.shape_cast %52 : vector<1x128xf32> to vector<1x1x128xf32>
    %cst_15 = arith.constant 3.906250e-03 : f32
    %54 = vector.broadcast %cst_15 : f32 to vector<1x1x128xf32>
    %55 = arith.mulf %50, %54 : vector<1x1x128xf32>
    %cst_16 = arith.constant 3.906250e-03 : f32
    %56 = vector.broadcast %cst_16 : f32 to vector<1x1x128xf32>
    %57 = arith.mulf %53, %56 : vector<1x1x128xf32>
    %58 = arith.mulf %55, %55 : vector<1x1x128xf32>
    %59 = arith.subf %57, %58 : vector<1x1x128xf32>
    %cst_17 = arith.constant 0.000000e+00 : f32
    %60 = vector.broadcast %cst_17 : f32 to vector<1x1x128xf32>
    %61 = arith.maximumf %59, %60 : vector<1x1x128xf32>
    %62 = vector.broadcast %55 : vector<1x1x128xf32> to vector<1x256x128xf32>
    %63 = arith.subf %48, %62 : vector<1x256x128xf32>
    %cst_18 = arith.constant 9.99999974E-6 : f32
    %64 = vector.broadcast %cst_18 : f32 to vector<1x1x128xf32>
    %65 = arith.addf %61, %64 : vector<1x1x128xf32>
    %66 = math.rsqrt %65 : vector<1x1x128xf32>
    %67 = vector.broadcast %66 : vector<1x1x128xf32> to vector<1x256x128xf32>
    %68 = arith.mulf %63, %67 : vector<1x256x128xf32>
    %cst_19 = arith.constant 0.000000e+00 : f32
    %69 = vector.broadcast %cst_19 : f32 to vector<1x256x128xf32>
    %70 = arith.maximumf %68, %69 : vector<1x256x128xf32>
    %71 = arith.truncf %70 : vector<1x256x128xf32> to vector<1x256x128xbf16>
    %c0_20 = arith.constant 0 : index
    %c0_21 = arith.constant 0 : index
    %c0_22 = arith.constant 0 : index
    %72 = vector.load %arg6[%c0_20, %c0_21, %c0_22] : memref<1x256x128xbf16, #tpu.memory_space<vmem>>, vector<1x256x128xbf16>
    tpu.vector_store %arg6[%c0_20, %c0_21, %c0_22], %71 {strides = array<i32>} : memref<1x256x128xbf16, #tpu.memory_space<vmem>>, vector<1x256x128xbf16>,
    %c0_23 = arith.constant 0 : index
    %c0_24 = arith.constant 0 : index
    %73 = vector.load %arg4[%c0_23, %c0_24] : memref<128x1024xbf16, #tpu.memory_space<vmem>>, vector<128x1024xbf16>
    %cst_25 = arith.constant 0.000000e+00 : f32
    %74 = vector.broadcast %cst_25 : f32 to vector<1x1024xf32>
    %cst_26 = arith.constant 0xFF800000 : f32
    %75 = vector.broadcast %cst_26 : f32 to vector<1x1024xf32>
    %c0_i32 = arith.constant 0 : i32
    %c256_i32 = arith.constant 256 : i32
    %76 = arith.muli %c0_i32, %c256_i32 : i32
    %77 = tpu.assume_multiple %76, 256 : i32
    %c0_27 = arith.constant 0 : index
    %78 = arith.index_cast %77 : i32 to index
    %c0_28 = arith.constant 0 : index
    %79 = vector.load %arg6[%c0_27, %78, %c0_28] : memref<1x256x128xbf16, #tpu.memory_space<vmem>>, vector<1x256x128xbf16>
    %80 = vector.shape_cast %79 : vector<1x256x128xbf16> to vector<256x128xbf16>
    %cst_29 = arith.constant dense<0.000000e+00> : vector<256x1024xf32>
    %81 = tpu.matmul %80, %73, %cst_29 {dimension_numbers = #tpu.dot_dimension_numbers<[1], [0], [0], [1], [0, 0, 1, 1], [], []>} : vector<256x128xbf16>, vector<128x1024xbf16>, vector<256x1024xf32> -> vector<256x1024xf32>
    %82 = vector.shape_cast %81 : vector<256x1024xf32> to vector<1x256x1024xf32>
    %cst_30 = arith.constant dense<0.000000e+00> : vector<1x1024xf32>
    %83 = vector.multi_reduction <add>, %82, %cst_30 [1] : vector<1x256x1024xf32> to vector<1x1024xf32>
    %84 = arith.addf %74, %83 : vector<1x1024xf32>
    %85 = arith.mulf %82, %82 : vector<1x256x1024xf32>
    %cst_31 = arith.constant dense<0.000000e+00> : vector<1x1024xf32>
    %86 = vector.multi_reduction <add>, %85, %cst_31 [1] : vector<1x256x1024xf32> to vector<1x1024xf32>
    %87 = arith.addf %74, %86 : vector<1x1024xf32>
    %cst_32 = arith.constant dense<0xFF800000> : vector<1x1024xf32>
    %88 = vector.multi_reduction <maximumf>, %82, %cst_32 [1] : vector<1x256x1024xf32> to vector<1x1024xf32>
    %89 = arith.maximumf %75, %88 : vector<1x1024xf32>
    %c1_i32 = arith.constant 1 : i32
    %cst_33 = arith.constant 3.906250e-03 : f32
    %90 = vector.broadcast %cst_33 : f32 to vector<1x1024xf32>
    %91 = arith.mulf %84, %90 : vector<1x1024xf32>
    %cst_34 = arith.constant 3.906250e-03 : f32
    %92 = vector.broadcast %cst_34 : f32 to vector<1x1024xf32>
    %93 = arith.mulf %87, %92 : vector<1x1024xf32>
    %94 = arith.mulf %91, %91 : vector<1x1024xf32>
    %95 = arith.subf %93, %94 : vector<1x1024xf32>
    %cst_35 = arith.constant 0.000000e+00 : f32
    %96 = vector.broadcast %cst_35 : f32 to vector<1x1024xf32>
    %97 = arith.maximumf %95, %96 : vector<1x1024xf32>
    %98 = arith.subf %89, %91 : vector<1x1024xf32>
    %cst_36 = arith.constant 9.99999974E-6 : f32
    %99 = vector.broadcast %cst_36 : f32 to vector<1x1024xf32>
    %100 = arith.addf %97, %99 : vector<1x1024xf32>
    %101 = math.rsqrt %100 : vector<1x1024xf32>
    %102 = arith.mulf %98, %101 : vector<1x1024xf32>
    %cst_37 = arith.constant 0.000000e+00 : f32
    %103 = vector.broadcast %cst_37 : f32 to vector<1x1024xf32>
    %104 = arith.maximumf %102, %103 : vector<1x1024xf32>
    %c0_38 = arith.constant 0 : index
    %c0_39 = arith.constant 0 : index
    %c0_40 = arith.constant 0 : index
    %105 = vector.load %arg5[%c0_38, %c0_39, %c0_40] : memref<1x1x1024xf32, #tpu.memory_space<vmem>>, vector<1x1x1024xf32>
    %106 = vector.shape_cast %105 : vector<1x1x1024xf32> to vector<1x1024xf32>
    %107 = vector.shape_cast %104 : vector<1x1024xf32> to vector<1x1x1024xf32>
    tpu.vector_store %arg5[%c0_38, %c0_39, %c0_40], %107 {strides = array<i32>} : memref<1x1x1024xf32, #tpu.memory_space<vmem>>, vector<1x1x1024xf32>,
    return
  }
  func.func @transform_0(%arg0: i32) -> (i32, i32, i32) {
    %c0_i32 = arith.constant 0 : i32
    %c0_i32_0 = arith.constant 0 : i32
    %c0_i32_1 = arith.constant 0 : i32
    return %arg0, %c0_i32, %c0_i32_0 : i32, i32, i32
  }
  func.func @transform_1(%arg0: i32) -> (i32, i32) {
    %c0_i32 = arith.constant 0 : i32
    %c0_i32_0 = arith.constant 0 : i32
    %c0_i32_1 = arith.constant 0 : i32
    return %c0_i32, %c0_i32_0 : i32, i32
  }
  func.func @transform_2(%arg0: i32) -> (i32, i32) {
    %c0_i32 = arith.constant 0 : i32
    %c0_i32_0 = arith.constant 0 : i32
    %c0_i32_1 = arith.constant 0 : i32
    return %c0_i32, %c0_i32_0 : i32, i32
  }
  func.func @transform_3(%arg0: i32) -> (i32, i32) {
    %c0_i32 = arith.constant 0 : i32
    %c0_i32_0 = arith.constant 0 : i32
    %c0_i32_1 = arith.constant 0 : i32
    return %c0_i32, %c0_i32_0 : i32, i32
  }
  func.func @transform_4(%arg0: i32) -> (i32, i32, i32) {
    %c0_i32 = arith.constant 0 : i32
    %c0_i32_0 = arith.constant 0 : i32
    %c0_i32_1 = arith.constant 0 : i32
    return %arg0, %c0_i32, %c0_i32_0 : i32, i32, i32
  }
}

</mosaic_0001>

<llo_original>
// kernel: tpu_custom_call.1
$region0: #{tpu_custom_call.1}
  #allocation0 [shape = 'u32[]', space=smem, size = 0x4, offset = 0x4, fixed_abs, tag = 'smem constant byte address 0x4 - core index']
  #allocation1 [shape = 'u32[144,128]{1,0:T(1,128)}', space=vmem, size = 0x12000, scoped, tag = 'internal scratch']
  #allocation2 [shape = 'bf16[1,256,128]{2,1,0:T(8,128)(2,1)}', space=vmem, size = 0x10000, scoped, tag = 'scratch operand']
  %s0 = inlined_call_operand.vmem [shape: f32[2,256,3], index: 0, kind: input, shape index: {}]
  %s1 = inlined_call_operand.vmem [shape: f32[3,64], index: 1, kind: input, shape index: {}]
  %s2 = inlined_call_operand.hbm [shape: bf16[64,128], index: 2, kind: input, shape index: {}]
  %s3 = inlined_call_operand.vmem [shape: bf16[128,1024], index: 3, kind: input, shape index: {}]
  %s4 = inlined_call_operand.hbm [shape: f32[2,1,1024], index: 4, kind: output, shape index: {}]
  %s5 = sld [smem:[#allocation0]]
  $region53: #{tpu_custom_call.1} parent=0
    _
  %s7 = ssub.s32 1, %s5
  %s8 = scalar_select 0, %s7, %s5
  $region1: #{tpu_custom_call.1} parent=0
    #allocation3 [shape = 'u8[16384]{0}', space=vmem, size = 0x4000, scoped, tag = 'input window, operand 2, single buffered']
    #allocation4 [shape = 's32[2]{0}', space=sflag, size = 0x8, scoped, tag = 'scoped memory for tpu_custom_call.1']
    #allocation5 [shape = 's32[2]{0}', space=sflag, size = 0x8, scoped, tag = 'scoped memory for tpu_custom_call.1']
    #allocation6 [shape = 'u8[8192]{0}', space=vmem, size = 0x2000, scoped, tag = 'output window, operand 0']
    %9 = vsyncpa [#allocation4], 0
    %10 = vsyncpa [#allocation5], 0
    %s11 = scalar_lea.sflag [#allocation5], 1
    %12 = vsyncpa %s11, 0
    loop: start=0, step=1, limit=4
    $region2: #{tpu_custom_call.1} parent=1 // loop_pre_header
      _
    $region3: #{tpu_custom_call.1} parent=1 // loop_header
      %s14 = sphi 0, %s18
      %p15 = scmp.ge.s32.totalorder %s14, 4
      %s24 = sphi 0, %s26
      %s27 = sphi 0, %s24
      %s28 = sphi 0, %s27
      %s44 = sphi 0, %s28
      %s48 = sphi 0, %s48
      %s50 = sphi 0, %s48
      %s51 = sphi 0, %s50
      %s65 = sphi 0, %s51
      %s69 = sphi 0, %s69
      %s71 = sphi 0, %s69
      %s72 = sphi 0, %s71
      %s86 = sphi 0, %s72
      %s90 = sphi 0, %s90
      %s92 = sphi 0, %s90
      %s93 = sphi 0, %s92
      %s107 = sphi 0, %s93
      %s113 = sphi 0, %s115
      %s116 = sphi 0, %s113
      %s117 = sphi 0, %s116
      %s133 = sphi 0, %s117
    $region4: #{tpu_custom_call.1} parent=1 // loop_header_branch
      %17 = sbr.rel (%p15) target = $region8
    $region5: #{tpu_custom_call.1} parent=1 // loop_body
      %s19 = ssub.s32 %s14, 1
      %s20 = ssub.s32 %s14, 2
      %s21 = sadd.s32 %s14, 1
      %s22 = ssub.s32 %s14, %s21
      %p23 = scmp.eq.s32.totalorder %s22, 0
      %s25 = sadd.s32 %s24, 1
      %s26 = scalar_select %p23, %s24, %s25
      %p29 = pneg %p23
      %p30 = scmp.eq.s32.totalorder %s14, 1
      %p31 = por %p29, %p30
      %p32 = scmp.ne.s32.totalorder %s24, %s27
      %p33 = scmp.eq.s32.totalorder %s14, 0
      %p34 = por %p32, %p33
      %p35 = scmp.ne.s32.totalorder %s24, %s27
      %p36 = scmp.eq.s32.totalorder %s19, 1
      %p37 = por %p35, %p36
      %p38 = scmp.ne.s32.totalorder %s27, %s28
      %p39 = scmp.eq.s32.totalorder %s19, 0
      %p40 = por %p38, %p39
      %p41 = scmp.ne.s32.totalorder %s27, %s28
      %p42 = scmp.eq.s32.totalorder %s20, 1
      %p43 = por %p41, %p42
      %p45 = scmp.ne.s32.totalorder %s28, %s44
      %p46 = scmp.eq.s32.totalorder %s20, 0
      %p47 = por %p45, %p46
      %s49 = sadd.s32 %s48, 1
      %p52 = scmp.eq.s32.totalorder %s14, 1
      %p53 = scmp.ne.s32.totalorder %s48, %s50
      %p54 = scmp.eq.s32.totalorder %s14, 0
      %p55 = por %p53, %p54
      %p56 = scmp.ne.s32.totalorder %s48, %s50
      %p57 = scmp.eq.s32.totalorder %s19, 1
      %p58 = por %p56, %p57
      %p59 = scmp.ne.s32.totalorder %s50, %s51
      %p60 = scmp.eq.s32.totalorder %s19, 0
      %p61 = por %p59, %p60
      %p62 = scmp.ne.s32.totalorder %s50, %s51
      %p63 = scmp.eq.s32.totalorder %s20, 1
      %p64 = por %p62, %p63
      %p66 = scmp.ne.s32.totalorder %s51, %s65
      %p67 = scmp.eq.s32.totalorder %s20, 0
      %p68 = por %p66, %p67
      %s70 = sadd.s32 %s69, 1
      %p73 = scmp.eq.s32.totalorder %s14, 1
      %p74 = scmp.ne.s32.totalorder %s69, %s71
      %p75 = scmp.eq.s32.totalorder %s14, 0
      %p76 = por %p74, %p75
      %p77 = scmp.ne.s32.totalorder %s69, %s71
      %p78 = scmp.eq.s32.totalorder %s19, 1
      %p79 = por %p77, %p78
      %p80 = scmp.ne.s32.totalorder %s71, %s72
      %p81 = scmp.eq.s32.totalorder %s19, 0
      %p82 = por %p80, %p81
      %p83 = scmp.ne.s32.totalorder %s71, %s72
      %p84 = scmp.eq.s32.totalorder %s20, 1
      %p85 = por %p83, %p84
      %p87 = scmp.ne.s32.totalorder %s72, %s86
      %p88 = scmp.eq.s32.totalorder %s20, 0
      %p89 = por %p87, %p88
      %s91 = sadd.s32 %s90, 1
      %p94 = scmp.eq.s32.totalorder %s14, 1
      %p95 = scmp.ne.s32.totalorder %s90, %s92
      %p96 = scmp.eq.s32.totalorder %s14, 0
      %p97 = por %p95, %p96
      %p98 = scmp.ne.s32.totalorder %s90, %s92
      %p99 = scmp.eq.s32.totalorder %s19, 1
      %p100 = por %p98, %p99
      %p101 = scmp.ne.s32.totalorder %s92, %s93
      %p102 = scmp.eq.s32.totalorder %s19, 0
      %p103 = por %p101, %p102
      %p104 = scmp.ne.s32.totalorder %s92, %s93
      %p105 = scmp.eq.s32.totalorder %s20, 1
      %p106 = por %p104, %p105
      %p108 = scmp.ne.s32.totalorder %s93, %s107
      %p109 = scmp.eq.s32.totalorder %s20, 0
      %p110 = por %p108, %p109
      %s111 = ssub.s32 %s14, %s21
      %p112 = scmp.eq.s32.totalorder %s111, 0
      %s114 = sadd.s32 %s113, 1
      %s115 = scalar_select %p112, %s113, %s114
      %p118 = pneg %p112
      %p119 = scmp.eq.s32.totalorder %s14, 1
      %p120 = por %p118, %p119
      %p121 = scmp.ne.s32.totalorder %s113, %s116
      %p122 = scmp.eq.s32.totalorder %s14, 0
      %p123 = por %p121, %p122
      %p124 = scmp.ne.s32.totalorder %s113, %s116
      %p125 = scmp.eq.s32.totalorder %s19, 1
      %p126 = por %p124, %p125
      %p127 = scmp.ne.s32.totalorder %s116, %s117
      %p128 = scmp.eq.s32.totalorder %s19, 0
      %p129 = por %p127, %p128
      %p130 = scmp.ne.s32.totalorder %s116, %s117
      %p131 = scmp.eq.s32.totalorder %s20, 1
      %p132 = por %p130, %p131
      %p134 = scmp.ne.s32.totalorder %s117, %s133
      %p135 = scmp.eq.s32.totalorder %s20, 0
      %p136 = por %p134, %p135
      %p137 = scmp.le.s32.totalorder 1, %s14
      %p138 = scmp.lt.s32.totalorder %s14, 3
      %p139 = pnand %p137, %p138
      %p140 = pneg %p139
      // Predicated region
      $region9: #{tpu_custom_call.1} parent=5 // pred_check
        _
      $region10: #{tpu_custom_call.1} parent=5 // pred_check_branch
        %142 = sbr.rel (%p139) target = $region12
      $region11: #{tpu_custom_call.1} parent=5 // pred_region
        %s143 = ssub.s32 %s14, 1
        // Predicated region
        $region13: #{tpu_custom_call.1} parent=11 // pred_check
          %p144 = pneg %p61
        $region14: #{tpu_custom_call.1} parent=11 // pred_check_branch
          %146 = sbr.rel (%p144) target = $region16
        $region15: #{tpu_custom_call.1} parent=11 // pred_region
          _
        $region16: #{tpu_custom_call.1} parent=11 // pred_fallthru
          _
        // Predicated region
        $region17: #{tpu_custom_call.1} parent=11 // pred_check
          %p147 = pneg %p82
        $region18: #{tpu_custom_call.1} parent=11 // pred_check_branch
          %149 = sbr.rel (%p147) target = $region20
        $region19: #{tpu_custom_call.1} parent=11 // pred_region
          %s151 = ssub.s32 512, 512
          %152 = vsyncadd [#allocation4], %s151
          %s153 = sshll.u32 [#allocation3], 4
          %s154 = int_to_ptr.vmem [resolvable:$true] %s153
          %159 = dma.hbm_to_vmem [thread:$0]  %s2, 512, %s154, [#allocation4], 64, 64, 4
        $region20: #{tpu_custom_call.1} parent=11 // pred_fallthru
          _
        // Predicated region
        $region21: #{tpu_custom_call.1} parent=11 // pred_check
          %p160 = pneg %p103
        $region22: #{tpu_custom_call.1} parent=11 // pred_check_branch
          %162 = sbr.rel (%p160) target = $region24
        $region23: #{tpu_custom_call.1} parent=11 // pred_region
          _
        $region24: #{tpu_custom_call.1} parent=11 // pred_fallthru
          _
      $region12: #{tpu_custom_call.1} parent=5 // pred_fallthru
        _
      %p163 = scmp.lt.s32.totalorder %s14, 2
      // Predicated region
      $region25: #{tpu_custom_call.1} parent=5 // pred_check
        %p164 = pneg %p163
      $region26: #{tpu_custom_call.1} parent=5 // pred_check_branch
        %166 = sbr.rel (%p164) target = $region28
      $region27: #{tpu_custom_call.1} parent=5 // pred_region
        // Predicated region
        $region29: #{tpu_custom_call.1} parent=27 // pred_check
          %p167 = pneg %p34
        $region30: #{tpu_custom_call.1} parent=27 // pred_check_branch
          %169 = sbr.rel (%p167) target = $region32
        $region31: #{tpu_custom_call.1} parent=27 // pred_region
          %p170 = scmp.lt.s32.totalorder %s14, 1
          %s171 = scalar_select %p170, %s14, 1
          %s172 = smul.addr %s171, 32
          %s173 = smul.addr %s172, 8
          %s174 = scalar_lea.vmem %s0, %s173
        $region32: #{tpu_custom_call.1} parent=27 // pred_fallthru
          _
      $region28: #{tpu_custom_call.1} parent=5 // pred_fallthru
        _
      %p175 = scmp.le.s32.totalorder 1, %s14
      %p176 = scmp.lt.s32.totalorder %s14, 3
      %p177 = pnand %p175, %p176
      %p178 = pneg %p177
      // Predicated region
      $region33: #{tpu_custom_call.1} parent=5 // pred_check
        _
      $region34: #{tpu_custom_call.1} parent=5 // pred_check_branch
        %180 = sbr.rel (%p177) target = $region36
      $region35: #{tpu_custom_call.1} parent=5 // pred_region
        %s181 = ssub.s32 %s14, 1
        // Predicated region
        $region37: #{tpu_custom_call.1} parent=35 // pred_check
          %p182 = pneg %p82
        $region38: #{tpu_custom_call.1} parent=35 // pred_check_branch
          %184 = sbr.rel (%p182) target = $region40
        $region39: #{tpu_custom_call.1} parent=35 // pred_region
          %185 = dma.done [#allocation4], 512
        $region40: #{tpu_custom_call.1} parent=35 // pred_fallthru
          _
        %p186 = scmp.lt.s32.totalorder %s19, 1
        %s187 = scalar_select %p186, %s19, 1
        %s188 = smul.addr %s187, 32
        %s189 = smul.addr %s188, 8
        %s190 = scalar_lea.vmem %s0, %s189
        %p191 = pneg %p40
        %p192 = pneg %p37
        %p193 = pneg %p61
        %p194 = pneg %p58
        %p195 = pneg %p82
        %p196 = pneg %p79
        %p197 = pneg %p103
        %p198 = pneg %p100
        %p199 = pneg %p129
        %p200 = pneg %p126
        %s201 = sand.u32 %s116, 1
        %s202 = scalar_lea.sflag [#allocation5], %s201
        %s203 = sand.u32 %s116, 1
        %s204 = smul.addr %s203, 8
        %s205 = scalar_lea.vmem [#allocation6], %s204
        %p206 = scmp.lt.s32.totalorder %s19, 1
        %s207 = scalar_select %p206, %s19, 1
        %s208 = smul.addr %s207, 32
        %s209 = smul.addr %s208, 8
        %s210 = scalar_lea.vmem %s0, %s209
        %v212 = vld [vmem:[%s210] sm:$0xff]
        %v213 = vld [vmem:[%s210 + $0x8] sm:$0xff]
        %v214 = vld [vmem:[%s210 + $0x10] sm:$0xff]
        %v215 = vld [vmem:[%s210 + $0x18] sm:$0xff]
        %v216 = vld [vmem:[%s210 + $0x20] sm:$0xff]
        %v217 = vld [vmem:[%s210 + $0x28] sm:$0xff]
        %v218 = vld [vmem:[%s210 + $0x30] sm:$0xff]
        %v219 = vld [vmem:[%s210 + $0x38] sm:$0xff]
        %v220 = vld [vmem:[%s210 + $0x40] sm:$0xff]
        %v221 = vld [vmem:[%s210 + $0x48] sm:$0xff]
        %v222 = vld [vmem:[%s210 + $0x50] sm:$0xff]
        %v223 = vld [vmem:[%s210 + $0x58] sm:$0xff]
        %v224 = vld [vmem:[%s210 + $0x60] sm:$0xff]
        %v225 = vld [vmem:[%s210 + $0x68] sm:$0xff]
        %v226 = vld [vmem:[%s210 + $0x70] sm:$0xff]
        %v227 = vld [vmem:[%s210 + $0x78] sm:$0xff]
        %v228 = vld [vmem:[%s210 + $0x80] sm:$0xff]
        %v229 = vld [vmem:[%s210 + $0x88] sm:$0xff]
        %v230 = vld [vmem:[%s210 + $0x90] sm:$0xff]
        %v231 = vld [vmem:[%s210 + $0x98] sm:$0xff]
        %v232 = vld [vmem:[%s210 + $0xa0] sm:$0xff]
        %v233 = vld [vmem:[%s210 + $0xa8] sm:$0xff]
        %v234 = vld [vmem:[%s210 + $0xb0] sm:$0xff]
        %v235 = vld [vmem:[%s210 + $0xb8] sm:$0xff]
        %v236 = vld [vmem:[%s210 + $0xc0] sm:$0xff]
        %v237 = vld [vmem:[%s210 + $0xc8] sm:$0xff]
        %v238 = vld [vmem:[%s210 + $0xd0] sm:$0xff]
        %v239 = vld [vmem:[%s210 + $0xd8] sm:$0xff]
        %v240 = vld [vmem:[%s210 + $0xe0] sm:$0xff]
        %v241 = vld [vmem:[%s210 + $0xe8] sm:$0xff]
        %v242 = vld [vmem:[%s210 + $0xf0] sm:$0xff]
        %v243 = vld [vmem:[%s210 + $0xf8] sm:$0xff]
        %v244 = vld [vmem:[%s1] sm:$0x7]
        %246 = vset.pattern.permute.xlu0 0
        %247 = vperm.xlu0 %246, %v212
        %v248 = vpop.permute.xlu0 %247
        %251 = vset.pattern.permute.xlu0 0
        %252 = vperm.xlu0 %251, %v213
        %v253 = vpop.permute.xlu0 %252
        %256 = vset.pattern.permute.xlu0 0
        %257 = vperm.xlu0 %256, %v214
        %v258 = vpop.permute.xlu0 %257
        %261 = vset.pattern.permute.xlu0 0
        %262 = vperm.xlu0 %261, %v215
        %v263 = vpop.permute.xlu0 %262
        %266 = vset.pattern.permute.xlu0 0
        %267 = vperm.xlu0 %266, %v216
        %v268 = vpop.permute.xlu0 %267
        %271 = vset.pattern.permute.xlu0 0
        %272 = vperm.xlu0 %271, %v217
        %v273 = vpop.permute.xlu0 %272
        %276 = vset.pattern.permute.xlu0 0
        %277 = vperm.xlu0 %276, %v218
        %v278 = vpop.permute.xlu0 %277
        %281 = vset.pattern.permute.xlu0 0
        %282 = vperm.xlu0 %281, %v219
        %v283 = vpop.permute.xlu0 %282
        %286 = vset.pattern.permute.xlu0 0
        %287 = vperm.xlu0 %286, %v220
        %v288 = vpop.permute.xlu0 %287
        %291 = vset.pattern.permute.xlu0 0
        %292 = vperm.xlu0 %291, %v221
        %v293 = vpop.permute.xlu0 %292
        %296 = vset.pattern.permute.xlu0 0
        %297 = vperm.xlu0 %296, %v222
        %v298 = vpop.permute.xlu0 %297
        %301 = vset.pattern.permute.xlu0 0
        %302 = vperm.xlu0 %301, %v223
        %v303 = vpop.permute.xlu0 %302
        %306 = vset.pattern.permute.xlu0 0
        %307 = vperm.xlu0 %306, %v224
        %v308 = vpop.permute.xlu0 %307
        %311 = vset.pattern.permute.xlu0 0
        %312 = vperm.xlu0 %311, %v225
        %v313 = vpop.permute.xlu0 %312
        %316 = vset.pattern.permute.xlu0 0
        %317 = vperm.xlu0 %316, %v226
        %v318 = vpop.permute.xlu0 %317
        %321 = vset.pattern.permute.xlu0 0
        %322 = vperm.xlu0 %321, %v227
        %v323 = vpop.permute.xlu0 %322
        %326 = vset.pattern.permute.xlu0 0
        %327 = vperm.xlu0 %326, %v228
        %v328 = vpop.permute.xlu0 %327
        %331 = vset.pattern.permute.xlu0 0
        %332 = vperm.xlu0 %331, %v229
        %v333 = vpop.permute.xlu0 %332
        %336 = vset.pattern.permute.xlu0 0
        %337 = vperm.xlu0 %336, %v230
        %v338 = vpop.permute.xlu0 %337
        %341 = vset.pattern.permute.xlu0 0
        %342 = vperm.xlu0 %341, %v231
        %v343 = vpop.permute.xlu0 %342
        %346 = vset.pattern.permute.xlu0 0
        %347 = vperm.xlu0 %346, %v232
        %v348 = vpop.permute.xlu0 %347
        %351 = vset.pattern.permute.xlu0 0
        %352 = vperm.xlu0 %351, %v233
        %v353 = vpop.permute.xlu0 %352
        %356 = vset.pattern.permute.xlu0 0
        %357 = vperm.xlu0 %356, %v234
        %v358 = vpop.permute.xlu0 %357
        %361 = vset.pattern.permute.xlu0 0
        %362 = vperm.xlu0 %361, %v235
        %v363 = vpop.permute.xlu0 %362
        %366 = vset.pattern.permute.xlu0 0
        %367 = vperm.xlu0 %366, %v236
        %v368 = vpop.permute.xlu0 %367
        %371 = vset.pattern.permute.xlu0 0
        %372 = vperm.xlu0 %371, %v237
        %v373 = vpop.permute.xlu0 %372
        %376 = vset.pattern.permute.xlu0 0
        %377 = vperm.xlu0 %376, %v238
        %v378 = vpop.permute.xlu0 %377
        %381 = vset.pattern.permute.xlu0 0
        %382 = vperm.xlu0 %381, %v239
        %v383 = vpop.permute.xlu0 %382
        %386 = vset.pattern.permute.xlu0 0
        %387 = vperm.xlu0 %386, %v240
        %v388 = vpop.permute.xlu0 %387
        %391 = vset.pattern.permute.xlu0 0
        %392 = vperm.xlu0 %391, %v241
        %v393 = vpop.permute.xlu0 %392
        %396 = vset.pattern.permute.xlu0 0
        %397 = vperm.xlu0 %396, %v242
        %v398 = vpop.permute.xlu0 %397
        %401 = vset.pattern.permute.xlu0 0
        %402 = vperm.xlu0 %401, %v243
        %v403 = vpop.permute.xlu0 %402
        %v405 = vlaneseq
        %v406 = vshrl.u32 %v405, 7
        %v407 = vsub.s32 0, %v406
        %v408 = vrot.slane %v244, %v407
        %v409 = vmul.f32 %v248, %v408
        %v410 = vmul.f32 %v253, %v408
        %v411 = vmul.f32 %v258, %v408
        %v412 = vmul.f32 %v263, %v408
        %v413 = vmul.f32 %v268, %v408
        %v414 = vmul.f32 %v273, %v408
        %v415 = vmul.f32 %v278, %v408
        %v416 = vmul.f32 %v283, %v408
        %v417 = vmul.f32 %v288, %v408
        %v418 = vmul.f32 %v293, %v408
        %v419 = vmul.f32 %v298, %v408
        %v420 = vmul.f32 %v303, %v408
        %v421 = vmul.f32 %v308, %v408
        %v422 = vmul.f32 %v313, %v408
        %v423 = vmul.f32 %v318, %v408
        %v424 = vmul.f32 %v323, %v408
        %v425 = vmul.f32 %v328, %v408
        %v426 = vmul.f32 %v333, %v408
        %v427 = vmul.f32 %v338, %v408
        %v428 = vmul.f32 %v343, %v408
        %v429 = vmul.f32 %v348, %v408
        %v430 = vmul.f32 %v353, %v408
        %v431 = vmul.f32 %v358, %v408
        %v432 = vmul.f32 %v363, %v408
        %v433 = vmul.f32 %v368, %v408
        %v434 = vmul.f32 %v373, %v408
        %v435 = vmul.f32 %v378, %v408
        %v436 = vmul.f32 %v383, %v408
        %v437 = vmul.f32 %v388, %v408
        %v438 = vmul.f32 %v393, %v408
        %v439 = vmul.f32 %v398, %v408
        %v440 = vmul.f32 %v403, %v408
        %441 = vset.pattern.permute.xlu0 1
        %442 = vperm.xlu0 %441, %v212
        %v443 = vpop.permute.xlu0 %442
        %445 = vset.pattern.permute.xlu0 1
        %446 = vperm.xlu0 %445, %v213
        %v447 = vpop.permute.xlu0 %446
        %449 = vset.pattern.permute.xlu0 1
        %450 = vperm.xlu0 %449, %v214
        %v451 = vpop.permute.xlu0 %450
        %453 = vset.pattern.permute.xlu0 1
        %454 = vperm.xlu0 %453, %v215
        %v455 = vpop.permute.xlu0 %454
        %457 = vset.pattern.permute.xlu0 1
        %458 = vperm.xlu0 %457, %v216
        %v459 = vpop.permute.xlu0 %458
        %461 = vset.pattern.permute.xlu0 1
        %462 = vperm.xlu0 %461, %v217
        %v463 = vpop.permute.xlu0 %462
        %465 = vset.pattern.permute.xlu0 1
        %466 = vperm.xlu0 %465, %v218
        %v467 = vpop.permute.xlu0 %466
        %469 = vset.pattern.permute.xlu0 1
        %470 = vperm.xlu0 %469, %v219
        %v471 = vpop.permute.xlu0 %470
        %473 = vset.pattern.permute.xlu0 1
        %474 = vperm.xlu0 %473, %v220
        %v475 = vpop.permute.xlu0 %474
        %477 = vset.pattern.permute.xlu0 1
        %478 = vperm.xlu0 %477, %v221
        %v479 = vpop.permute.xlu0 %478
        %481 = vset.pattern.permute.xlu0 1
        %482 = vperm.xlu0 %481, %v222
        %v483 = vpop.permute.xlu0 %482
        %485 = vset.pattern.permute.xlu0 1
        %486 = vperm.xlu0 %485, %v223
        %v487 = vpop.permute.xlu0 %486
        %489 = vset.pattern.permute.xlu0 1
        %490 = vperm.xlu0 %489, %v224
        %v491 = vpop.permute.xlu0 %490
        %493 = vset.pattern.permute.xlu0 1
        %494 = vperm.xlu0 %493, %v225
        %v495 = vpop.permute.xlu0 %494
        %497 = vset.pattern.permute.xlu0 1
        %498 = vperm.xlu0 %497, %v226
        %v499 = vpop.permute.xlu0 %498
        %501 = vset.pattern.permute.xlu0 1
        %502 = vperm.xlu0 %501, %v227
        %v503 = vpop.permute.xlu0 %502
        %505 = vset.pattern.permute.xlu0 1
        %506 = vperm.xlu0 %505, %v228
        %v507 = vpop.permute.xlu0 %506
        %509 = vset.pattern.permute.xlu0 1
        %510 = vperm.xlu0 %509, %v229
        %v511 = vpop.permute.xlu0 %510
        %513 = vset.pattern.permute.xlu0 1
        %514 = vperm.xlu0 %513, %v230
        %v515 = vpop.permute.xlu0 %514
        %517 = vset.pattern.permute.xlu0 1
        %518 = vperm.xlu0 %517, %v231
        %v519 = vpop.permute.xlu0 %518
        %521 = vset.pattern.permute.xlu0 1
        %522 = vperm.xlu0 %521, %v232
        %v523 = vpop.permute.xlu0 %522
        %525 = vset.pattern.permute.xlu0 1
        %526 = vperm.xlu0 %525, %v233
        %v527 = vpop.permute.xlu0 %526
        %529 = vset.pattern.permute.xlu0 1
        %530 = vperm.xlu0 %529, %v234
        %v531 = vpop.permute.xlu0 %530
        %533 = vset.pattern.permute.xlu0 1
        %534 = vperm.xlu0 %533, %v235
        %v535 = vpop.permute.xlu0 %534
        %537 = vset.pattern.permute.xlu0 1
        %538 = vperm.xlu0 %537, %v236
        %v539 = vpop.permute.xlu0 %538
        %541 = vset.pattern.permute.xlu0 1
        %542 = vperm.xlu0 %541, %v237
        %v543 = vpop.permute.xlu0 %542
        %545 = vset.pattern.permute.xlu0 1
        %546 = vperm.xlu0 %545, %v238
        %v547 = vpop.permute.xlu0 %546
        %549 = vset.pattern.permute.xlu0 1
        %550 = vperm.xlu0 %549, %v239
        %v551 = vpop.permute.xlu0 %550
        %553 = vset.pattern.permute.xlu0 1
        %554 = vperm.xlu0 %553, %v240
        %v555 = vpop.permute.xlu0 %554
        %557 = vset.pattern.permute.xlu0 1
        %558 = vperm.xlu0 %557, %v241
        %v559 = vpop.permute.xlu0 %558
        %561 = vset.pattern.permute.xlu0 1
        %562 = vperm.xlu0 %561, %v242
        %v563 = vpop.permute.xlu0 %562
        %565 = vset.pattern.permute.xlu0 1
        %566 = vperm.xlu0 %565, %v243
        %v567 = vpop.permute.xlu0 %566
        %v569 = vlaneseq
        %v570 = vshrl.u32 %v569, 7
        %v571 = vsub.s32 1, %v570
        %v572 = vrot.slane %v244, %v571
        %v573 = vmul.f32 %v443, %v572
        %v574 = vmul.f32 %v447, %v572
        %v575 = vmul.f32 %v451, %v572
        %v576 = vmul.f32 %v455, %v572
        %v577 = vmul.f32 %v459, %v572
        %v578 = vmul.f32 %v463, %v572
        %v579 = vmul.f32 %v467, %v572
        %v580 = vmul.f32 %v471, %v572
        %v581 = vmul.f32 %v475, %v572
        %v582 = vmul.f32 %v479, %v572
        %v583 = vmul.f32 %v483, %v572
        %v584 = vmul.f32 %v487, %v572
        %v585 = vmul.f32 %v491, %v572
        %v586 = vmul.f32 %v495, %v572
        %v587 = vmul.f32 %v499, %v572
        %v588 = vmul.f32 %v503, %v572
        %v589 = vmul.f32 %v507, %v572
        %v590 = vmul.f32 %v511, %v572
        %v591 = vmul.f32 %v515, %v572
        %v592 = vmul.f32 %v519, %v572
        %v593 = vmul.f32 %v523, %v572
        %v594 = vmul.f32 %v527, %v572
        %v595 = vmul.f32 %v531, %v572
        %v596 = vmul.f32 %v535, %v572
        %v597 = vmul.f32 %v539, %v572
        %v598 = vmul.f32 %v543, %v572
        %v599 = vmul.f32 %v547, %v572
        %v600 = vmul.f32 %v551, %v572
        %v601 = vmul.f32 %v555, %v572
        %v602 = vmul.f32 %v559, %v572
        %v603 = vmul.f32 %v563, %v572
        %v604 = vmul.f32 %v567, %v572
        %v605 = vadd.f32 %v409, %v573
        %v606 = vadd.f32 %v410, %v574
        %v607 = vadd.f32 %v411, %v575
        %v608 = vadd.f32 %v412, %v576
        %v609 = vadd.f32 %v413, %v577
        %v610 = vadd.f32 %v414, %v578
        %v611 = vadd.f32 %v415, %v579
        %v612 = vadd.f32 %v416, %v580
        %v613 = vadd.f32 %v417, %v581
        %v614 = vadd.f32 %v418, %v582
        %v615 = vadd.f32 %v419, %v583
        %v616 = vadd.f32 %v420, %v584
        %v617 = vadd.f32 %v421, %v585
        %v618 = vadd.f32 %v422, %v586
        %v619 = vadd.f32 %v423, %v587
        %v620 = vadd.f32 %v424, %v588
        %v621 = vadd.f32 %v425, %v589
        %v622 = vadd.f32 %v426, %v590
        %v623 = vadd.f32 %v427, %v591
        %v624 = vadd.f32 %v428, %v592
        %v625 = vadd.f32 %v429, %v593
        %v626 = vadd.f32 %v430, %v594
        %v627 = vadd.f32 %v431, %v595
        %v628 = vadd.f32 %v432, %v596
        %v629 = vadd.f32 %v433, %v597
        %v630 = vadd.f32 %v434, %v598
        %v631 = vadd.f32 %v435, %v599
        %v632 = vadd.f32 %v436, %v600
        %v633 = vadd.f32 %v437, %v601
        %v634 = vadd.f32 %v438, %v602
        %v635 = vadd.f32 %v439, %v603
        %v636 = vadd.f32 %v440, %v604
        %637 = vset.pattern.permute.xlu0 2
        %638 = vperm.xlu0 %637, %v212
        %v639 = vpop.permute.xlu0 %638
        %641 = vset.pattern.permute.xlu0 2
        %642 = vperm.xlu0 %641, %v213
        %v643 = vpop.permute.xlu0 %642
        %645 = vset.pattern.permute.xlu0 2
        %646 = vperm.xlu0 %645, %v214
        %v647 = vpop.permute.xlu0 %646
        %649 = vset.pattern.permute.xlu0 2
        %650 = vperm.xlu0 %649, %v215
        %v651 = vpop.permute.xlu0 %650
        %653 = vset.pattern.permute.xlu0 2
        %654 = vperm.xlu0 %653, %v216
        %v655 = vpop.permute.xlu0 %654
        %657 = vset.pattern.permute.xlu0 2
        %658 = vperm.xlu0 %657, %v217
        %v659 = vpop.permute.xlu0 %658
        %661 = vset.pattern.permute.xlu0 2
        %662 = vperm.xlu0 %661, %v218
        %v663 = vpop.permute.xlu0 %662
        %665 = vset.pattern.permute.xlu0 2
        %666 = vperm.xlu0 %665, %v219
        %v667 = vpop.permute.xlu0 %666
        %669 = vset.pattern.permute.xlu0 2
        %670 = vperm.xlu0 %669, %v220
        %v671 = vpop.permute.xlu0 %670
        %673 = vset.pattern.permute.xlu0 2
        %674 = vperm.xlu0 %673, %v221
        %v675 = vpop.permute.xlu0 %674
        %677 = vset.pattern.permute.xlu0 2
        %678 = vperm.xlu0 %677, %v222
        %v679 = vpop.permute.xlu0 %678
        %681 = vset.pattern.permute.xlu0 2
        %682 = vperm.xlu0 %681, %v223
        %v683 = vpop.permute.xlu0 %682
        %685 = vset.pattern.permute.xlu0 2
        %686 = vperm.xlu0 %685, %v224
        %v687 = vpop.permute.xlu0 %686
        %689 = vset.pattern.permute.xlu0 2
        %690 = vperm.xlu0 %689, %v225
        %v691 = vpop.permute.xlu0 %690
        %693 = vset.pattern.permute.xlu0 2
        %694 = vperm.xlu0 %693, %v226
        %v695 = vpop.permute.xlu0 %694
        %697 = vset.pattern.permute.xlu0 2
        %698 = vperm.xlu0 %697, %v227
        %v699 = vpop.permute.xlu0 %698
        %701 = vset.pattern.permute.xlu0 2
        %702 = vperm.xlu0 %701, %v228
        %v703 = vpop.permute.xlu0 %702
        %705 = vset.pattern.permute.xlu0 2
        %706 = vperm.xlu0 %705, %v229
        %v707 = vpop.permute.xlu0 %706
        %709 = vset.pattern.permute.xlu0 2
        %710 = vperm.xlu0 %709, %v230
        %v711 = vpop.permute.xlu0 %710
        %713 = vset.pattern.permute.xlu0 2
        %714 = vperm.xlu0 %713, %v231
        %v715 = vpop.permute.xlu0 %714
        %717 = vset.pattern.permute.xlu0 2
        %718 = vperm.xlu0 %717, %v232
        %v719 = vpop.permute.xlu0 %718
        %721 = vset.pattern.permute.xlu0 2
        %722 = vperm.xlu0 %721, %v233
        %v723 = vpop.permute.xlu0 %722
        %725 = vset.pattern.permute.xlu0 2
        %726 = vperm.xlu0 %725, %v234
        %v727 = vpop.permute.xlu0 %726
        %729 = vset.pattern.permute.xlu0 2
        %730 = vperm.xlu0 %729, %v235
        %v731 = vpop.permute.xlu0 %730
        %733 = vset.pattern.permute.xlu0 2
        %734 = vperm.xlu0 %733, %v236
        %v735 = vpop.permute.xlu0 %734
        %737 = vset.pattern.permute.xlu0 2
        %738 = vperm.xlu0 %737, %v237
        %v739 = vpop.permute.xlu0 %738
        %741 = vset.pattern.permute.xlu0 2
        %742 = vperm.xlu0 %741, %v238
        %v743 = vpop.permute.xlu0 %742
        %745 = vset.pattern.permute.xlu0 2
        %746 = vperm.xlu0 %745, %v239
        %v747 = vpop.permute.xlu0 %746
        %749 = vset.pattern.permute.xlu0 2
        %750 = vperm.xlu0 %749, %v240
        %v751 = vpop.permute.xlu0 %750
        %753 = vset.pattern.permute.xlu0 2
        %754 = vperm.xlu0 %753, %v241
        %v755 = vpop.permute.xlu0 %754
        %757 = vset.pattern.permute.xlu0 2
        %758 = vperm.xlu0 %757, %v242
        %v759 = vpop.permute.xlu0 %758
        %761 = vset.pattern.permute.xlu0 2
        %762 = vperm.xlu0 %761, %v243
        %v763 = vpop.permute.xlu0 %762
        %v765 = vlaneseq
        %v766 = vshrl.u32 %v765, 7
        %v767 = vsub.s32 2, %v766
        %v768 = vrot.slane %v244, %v767
        %v769 = vmul.f32 %v639, %v768
        %v770 = vmul.f32 %v643, %v768
        %v771 = vmul.f32 %v647, %v768
        %v772 = vmul.f32 %v651, %v768
        %v773 = vmul.f32 %v655, %v768
        %v774 = vmul.f32 %v659, %v768
        %v775 = vmul.f32 %v663, %v768
        %v776 = vmul.f32 %v667, %v768
        %v777 = vmul.f32 %v671, %v768
        %v778 = vmul.f32 %v675, %v768
        %v779 = vmul.f32 %v679, %v768
        %v780 = vmul.f32 %v683, %v768
        %v781 = vmul.f32 %v687, %v768
        %v782 = vmul.f32 %v691, %v768
        %v783 = vmul.f32 %v695, %v768
        %v784 = vmul.f32 %v699, %v768
        %v785 = vmul.f32 %v703, %v768
        %v786 = vmul.f32 %v707, %v768
        %v787 = vmul.f32 %v711, %v768
        %v788 = vmul.f32 %v715, %v768
        %v789 = vmul.f32 %v719, %v768
        %v790 = vmul.f32 %v723, %v768
        %v791 = vmul.f32 %v727, %v768
        %v792 = vmul.f32 %v731, %v768
        %v793 = vmul.f32 %v735, %v768
        %v794 = vmul.f32 %v739, %v768
        %v795 = vmul.f32 %v743, %v768
        %v796 = vmul.f32 %v747, %v768
        %v797 = vmul.f32 %v751, %v768
        %v798 = vmul.f32 %v755, %v768
        %v799 = vmul.f32 %v759, %v768
        %v800 = vmul.f32 %v763, %v768
        %v801 = vadd.f32 %v605, %v769
        %v802 = vadd.f32 %v606, %v770
        %v803 = vadd.f32 %v607, %v771
        %v804 = vadd.f32 %v608, %v772
        %v805 = vadd.f32 %v609, %v773
        %v806 = vadd.f32 %v610, %v774
        %v807 = vadd.f32 %v611, %v775
        %v808 = vadd.f32 %v612, %v776
        %v809 = vadd.f32 %v613, %v777
        %v810 = vadd.f32 %v614, %v778
        %v811 = vadd.f32 %v615, %v779
        %v812 = vadd.f32 %v616, %v780
        %v813 = vadd.f32 %v617, %v781
        %v814 = vadd.f32 %v618, %v782
        %v815 = vadd.f32 %v619, %v783
        %v816 = vadd.f32 %v620, %v784
        %v817 = vadd.f32 %v621, %v785
        %v818 = vadd.f32 %v622, %v786
        %v819 = vadd.f32 %v623, %v787
        %v820 = vadd.f32 %v624, %v788
        %v821 = vadd.f32 %v625, %v789
        %v822 = vadd.f32 %v626, %v790
        %v823 = vadd.f32 %v627, %v791
        %v824 = vadd.f32 %v628, %v792
        %v825 = vadd.f32 %v629, %v793
        %v826 = vadd.f32 %v630, %v794
        %v827 = vadd.f32 %v631, %v795
        %v828 = vadd.f32 %v632, %v796
        %v829 = vadd.f32 %v633, %v797
        %v830 = vadd.f32 %v634, %v798
        %v831 = vadd.f32 %v635, %v799
        %v832 = vadd.f32 %v636, %v800
        %vm833 = vcmask 523264
        %v834 = vsel %vm833, %v801, 0.0
        %v835 = vsel %vm833, %v802, 0.0
        %v836 = vadd.f32 %v834, %v835
        %v837 = vsel %vm833, %v803, 0.0
        %v838 = vadd.f32 %v836, %v837
        %v839 = vsel %vm833, %v804, 0.0
        %v840 = vadd.f32 %v838, %v839
        %v841 = vsel %vm833, %v805, 0.0
        %v842 = vadd.f32 %v840, %v841
        %v843 = vsel %vm833, %v806, 0.0
        %v844 = vadd.f32 %v842, %v843
        %v845 = vsel %vm833, %v807, 0.0
        %v846 = vadd.f32 %v844, %v845
        %v847 = vsel %vm833, %v808, 0.0
        %v848 = vadd.f32 %v846, %v847
        %v849 = vsel %vm833, %v809, 0.0
        %v850 = vadd.f32 %v848, %v849
        %v851 = vsel %vm833, %v810, 0.0
        %v852 = vadd.f32 %v850, %v851
        %v853 = vsel %vm833, %v811, 0.0
        %v854 = vadd.f32 %v852, %v853
        %v855 = vsel %vm833, %v812, 0.0
        %v856 = vadd.f32 %v854, %v855
        %v857 = vsel %vm833, %v813, 0.0
        %v858 = vadd.f32 %v856, %v857
        %v859 = vsel %vm833, %v814, 0.0
        %v860 = vadd.f32 %v858, %v859
        %v861 = vsel %vm833, %v815, 0.0
        %v862 = vadd.f32 %v860, %v861
        %v863 = vsel %vm833, %v816, 0.0
        %v864 = vadd.f32 %v862, %v863
        %v865 = vsel %vm833, %v817, 0.0
        %v866 = vadd.f32 %v864, %v865
        %v867 = vsel %vm833, %v818, 0.0
        %v868 = vadd.f32 %v866, %v867
        %v869 = vsel %vm833, %v819, 0.0
        %v870 = vadd.f32 %v868, %v869
        %v871 = vsel %vm833, %v820, 0.0
        %v872 = vadd.f32 %v870, %v871
        %v873 = vsel %vm833, %v821, 0.0
        %v874 = vadd.f32 %v872, %v873
        %v875 = vsel %vm833, %v822, 0.0
        %v876 = vadd.f32 %v874, %v875
        %v877 = vsel %vm833, %v823, 0.0
        %v878 = vadd.f32 %v876, %v877
        %v879 = vsel %vm833, %v824, 0.0
        %v880 = vadd.f32 %v878, %v879
        %v881 = vsel %vm833, %v825, 0.0
        %v882 = vadd.f32 %v880, %v881
        %v883 = vsel %vm833, %v826, 0.0
        %v884 = vadd.f32 %v882, %v883
        %v885 = vsel %vm833, %v827, 0.0
        %v886 = vadd.f32 %v884, %v885
        %v887 = vsel %vm833, %v828, 0.0
        %v888 = vadd.f32 %v886, %v887
        %v889 = vsel %vm833, %v829, 0.0
        %v890 = vadd.f32 %v888, %v889
        %v891 = vsel %vm833, %v830, 0.0
        %v892 = vadd.f32 %v890, %v891
        %v893 = vsel %vm833, %v831, 0.0
        %v894 = vadd.f32 %v892, %v893
        %v895 = vsel %vm833, %v832, 0.0
        %v896 = vadd.f32 %v894, %v895
        %v897 = vrot.slane %v896, 4
        %v898 = vadd.f32 %v896, %v897
        %v899 = vrot.slane %v898, 2
        %v900 = vadd.f32 %v898, %v899
        %v901 = vrot.slane %v900, 1
        %v902 = vadd.f32 %v900, %v901
        %v903 = vmul.f32 %v801, %v801
        %v904 = vmul.f32 %v802, %v802
        %v905 = vmul.f32 %v803, %v803
        %v906 = vmul.f32 %v804, %v804
        %v907 = vmul.f32 %v805, %v805
        %v908 = vmul.f32 %v806, %v806
        %v909 = vmul.f32 %v807, %v807
        %v910 = vmul.f32 %v808, %v808
        %v911 = vmul.f32 %v809, %v809
        %v912 = vmul.f32 %v810, %v810
        %v913 = vmul.f32 %v811, %v811
        %v914 = vmul.f32 %v812, %v812
        %v915 = vmul.f32 %v813, %v813
        %v916 = vmul.f32 %v814, %v814
        %v917 = vmul.f32 %v815, %v815
        %v918 = vmul.f32 %v816, %v816
        %v919 = vmul.f32 %v817, %v817
        %v920 = vmul.f32 %v818, %v818
        %v921 = vmul.f32 %v819, %v819
        %v922 = vmul.f32 %v820, %v820
        %v923 = vmul.f32 %v821, %v821
        %v924 = vmul.f32 %v822, %v822
        %v925 = vmul.f32 %v823, %v823
        %v926 = vmul.f32 %v824, %v824
        %v927 = vmul.f32 %v825, %v825
        %v928 = vmul.f32 %v826, %v826
        %v929 = vmul.f32 %v827, %v827
        %v930 = vmul.f32 %v828, %v828
        %v931 = vmul.f32 %v829, %v829
        %v932 = vmul.f32 %v830, %v830
        %v933 = vmul.f32 %v831, %v831
        %v934 = vmul.f32 %v832, %v832
        %v935 = vsel %vm833, %v903, 0.0
        %v936 = vsel %vm833, %v904, 0.0
        %v937 = vadd.f32 %v935, %v936
        %v938 = vsel %vm833, %v905, 0.0
        %v939 = vadd.f32 %v937, %v938
        %v940 = vsel %vm833, %v906, 0.0
        %v941 = vadd.f32 %v939, %v940
        %v942 = vsel %vm833, %v907, 0.0
        %v943 = vadd.f32 %v941, %v942
        %v944 = vsel %vm833, %v908, 0.0
        %v945 = vadd.f32 %v943, %v944
        %v946 = vsel %vm833, %v909, 0.0
        %v947 = vadd.f32 %v945, %v946
        %v948 = vsel %vm833, %v910, 0.0
        %v949 = vadd.f32 %v947, %v948
        %v950 = vsel %vm833, %v911, 0.0
        %v951 = vadd.f32 %v949, %v950
        %v952 = vsel %vm833, %v912, 0.0
        %v953 = vadd.f32 %v951, %v952
        %v954 = vsel %vm833, %v913, 0.0
        %v955 = vadd.f32 %v953, %v954
        %v956 = vsel %vm833, %v914, 0.0
        %v957 = vadd.f32 %v955, %v956
        %v958 = vsel %vm833, %v915, 0.0
        %v959 = vadd.f32 %v957, %v958
        %v960 = vsel %vm833, %v916, 0.0
        %v961 = vadd.f32 %v959, %v960
        %v962 = vsel %vm833, %v917, 0.0
        %v963 = vadd.f32 %v961, %v962
        %v964 = vsel %vm833, %v918, 0.0
        %v965 = vadd.f32 %v963, %v964
        %v966 = vsel %vm833, %v919, 0.0
        %v967 = vadd.f32 %v965, %v966
        %v968 = vsel %vm833, %v920, 0.0
        %v969 = vadd.f32 %v967, %v968
        %v970 = vsel %vm833, %v921, 0.0
        %v971 = vadd.f32 %v969, %v970
        %v972 = vsel %vm833, %v922, 0.0
        %v973 = vadd.f32 %v971, %v972
        %v974 = vsel %vm833, %v923, 0.0
        %v975 = vadd.f32 %v973, %v974
        %v976 = vsel %vm833, %v924, 0.0
        %v977 = vadd.f32 %v975, %v976
        %v978 = vsel %vm833, %v925, 0.0
        %v979 = vadd.f32 %v977, %v978
        %v980 = vsel %vm833, %v926, 0.0
        %v981 = vadd.f32 %v979, %v980
        %v982 = vsel %vm833, %v927, 0.0
        %v983 = vadd.f32 %v981, %v982
        %v984 = vsel %vm833, %v928, 0.0
        %v985 = vadd.f32 %v983, %v984
        %v986 = vsel %vm833, %v929, 0.0
        %v987 = vadd.f32 %v985, %v986
        %v988 = vsel %vm833, %v930, 0.0
        %v989 = vadd.f32 %v987, %v988
        %v990 = vsel %vm833, %v931, 0.0
        %v991 = vadd.f32 %v989, %v990
        %v992 = vsel %vm833, %v932, 0.0
        %v993 = vadd.f32 %v991, %v992
        %v994 = vsel %vm833, %v933, 0.0
        %v995 = vadd.f32 %v993, %v994
        %v996 = vsel %vm833, %v934, 0.0
        %v997 = vadd.f32 %v995, %v996
        %v998 = vrot.slane %v997, 4
        %v999 = vadd.f32 %v997, %v998
        %v1000 = vrot.slane %v999, 2
        %v1001 = vadd.f32 %v999, %v1000
        %v1002 = vrot.slane %v1001, 1
        %v1003 = vadd.f32 %v1001, %v1002
        %v1004 = vmul.f32 %v902, 0.00390625
        %v1005 = vmul.f32 %v1003, 0.00390625
        %v1006 = vmul.f32 %v1004, %v1004
        %v1007 = vsub.f32 %v1005, %v1006
        %v1008 = vmax.f32 %v1007, 0.0
        %v1009 = vsub.f32 %v801, %v1004
        %v1010 = vsub.f32 %v802, %v1004
        %v1011 = vsub.f32 %v803, %v1004
        %v1012 = vsub.f32 %v804, %v1004
        %v1013 = vsub.f32 %v805, %v1004
        %v1014 = vsub.f32 %v806, %v1004
        %v1015 = vsub.f32 %v807, %v1004
        %v1016 = vsub.f32 %v808, %v1004
        %v1017 = vsub.f32 %v809, %v1004
        %v1018 = vsub.f32 %v810, %v1004
        %v1019 = vsub.f32 %v811, %v1004
        %v1020 = vsub.f32 %v812, %v1004
        %v1021 = vsub.f32 %v813, %v1004
        %v1022 = vsub.f32 %v814, %v1004
        %v1023 = vsub.f32 %v815, %v1004
        %v1024 = vsub.f32 %v816, %v1004
        %v1025 = vsub.f32 %v817, %v1004
        %v1026 = vsub.f32 %v818, %v1004
        %v1027 = vsub.f32 %v819, %v1004
        %v1028 = vsub.f32 %v820, %v1004
        %v1029 = vsub.f32 %v821, %v1004
        %v1030 = vsub.f32 %v822, %v1004
        %v1031 = vsub.f32 %v823, %v1004
        %v1032 = vsub.f32 %v824, %v1004
        %v1033 = vsub.f32 %v825, %v1004
        %v1034 = vsub.f32 %v826, %v1004
        %v1035 = vsub.f32 %v827, %v1004
        %v1036 = vsub.f32 %v828, %v1004
        %v1037 = vsub.f32 %v829, %v1004
        %v1038 = vsub.f32 %v830, %v1004
        %v1039 = vsub.f32 %v831, %v1004
        %v1040 = vsub.f32 %v832, %v1004
        %v1041 = vadd.f32 %v1008, 1e-05
        %v1042 = vrsqrt.pop %v1041
        %v1043 = vmul.f32 %v1009, %v1042
        %v1044 = vmul.f32 %v1010, %v1042
        %v1045 = vmul.f32 %v1011, %v1042
        %v1046 = vmul.f32 %v1012, %v1042
        %v1047 = vmul.f32 %v1013, %v1042
        %v1048 = vmul.f32 %v1014, %v1042
        %v1049 = vmul.f32 %v1015, %v1042
        %v1050 = vmul.f32 %v1016, %v1042
        %v1051 = vmul.f32 %v1017, %v1042
        %v1052 = vmul.f32 %v1018, %v1042
        %v1053 = vmul.f32 %v1019, %v1042
        %v1054 = vmul.f32 %v1020, %v1042
        %v1055 = vmul.f32 %v1021, %v1042
        %v1056 = vmul.f32 %v1022, %v1042
        %v1057 = vmul.f32 %v1023, %v1042
        %v1058 = vmul.f32 %v1024, %v1042
        %v1059 = vmul.f32 %v1025, %v1042
        %v1060 = vmul.f32 %v1026, %v1042
        %v1061 = vmul.f32 %v1027, %v1042
        %v1062 = vmul.f32 %v1028, %v1042
        %v1063 = vmul.f32 %v1029, %v1042
        %v1064 = vmul.f32 %v1030, %v1042
        %v1065 = vmul.f32 %v1031, %v1042
        %v1066 = vmul.f32 %v1032, %v1042
        %v1067 = vmul.f32 %v1033, %v1042
        %v1068 = vmul.f32 %v1034, %v1042
        %v1069 = vmul.f32 %v1035, %v1042
        %v1070 = vmul.f32 %v1036, %v1042
        %v1071 = vmul.f32 %v1037, %v1042
        %v1072 = vmul.f32 %v1038, %v1042
        %v1073 = vmul.f32 %v1039, %v1042
        %v1074 = vmul.f32 %v1040, %v1042
        %v1075 = vmax.f32 %v1043, 0.0
        %v1076 = vmax.f32 %v1044, 0.0
        %v1077 = vmax.f32 %v1045, 0.0
        %v1078 = vmax.f32 %v1046, 0.0
        %v1079 = vmax.f32 %v1047, 0.0
        %v1080 = vmax.f32 %v1048, 0.0
        %v1081 = vmax.f32 %v1049, 0.0
        %v1082 = vmax.f32 %v1050, 0.0
        %v1083 = vmax.f32 %v1051, 0.0
        %v1084 = vmax.f32 %v1052, 0.0
        %v1085 = vmax.f32 %v1053, 0.0
        %v1086 = vmax.f32 %v1054, 0.0
        %v1087 = vmax.f32 %v1055, 0.0
        %v1088 = vmax.f32 %v1056, 0.0
        %v1089 = vmax.f32 %v1057, 0.0
        %v1090 = vmax.f32 %v1058, 0.0
        %v1091 = vmax.f32 %v1059, 0.0
        %v1092 = vmax.f32 %v1060, 0.0
        %v1093 = vmax.f32 %v1061, 0.0
        %v1094 = vmax.f32 %v1062, 0.0
        %v1095 = vmax.f32 %v1063, 0.0
        %v1096 = vmax.f32 %v1064, 0.0
        %v1097 = vmax.f32 %v1065, 0.0
        %v1098 = vmax.f32 %v1066, 0.0
        %v1099 = vmax.f32 %v1067, 0.0
        %v1100 = vmax.f32 %v1068, 0.0
        %v1101 = vmax.f32 %v1069, 0.0
        %v1102 = vmax.f32 %v1070, 0.0
        %v1103 = vmax.f32 %v1071, 0.0
        %v1104 = vmax.f32 %v1072, 0.0
        %v1105 = vmax.f32 %v1073, 0.0
        %v1106 = vmax.f32 %v1074, 0.0
        %v1107 = vpack.c.bf16 %v1076, %v1075
        %v1108 = vpack.c.bf16 %v1078, %v1077
        %v1109 = vpack.c.bf16 %v1080, %v1079
        %v1110 = vpack.c.bf16 %v1082, %v1081
        %v1111 = vpack.c.bf16 %v1084, %v1083
        %v1112 = vpack.c.bf16 %v1086, %v1085
        %v1113 = vpack.c.bf16 %v1088, %v1087
        %v1114 = vpack.c.bf16 %v1090, %v1089
        %v1115 = vpack.c.bf16 %v1092, %v1091
        %v1116 = vpack.c.bf16 %v1094, %v1093
        %v1117 = vpack.c.bf16 %v1096, %v1095
        %v1118 = vpack.c.bf16 %v1098, %v1097
        %v1119 = vpack.c.bf16 %v1100, %v1099
        %v1120 = vpack.c.bf16 %v1102, %v1101
        %v1121 = vpack.c.bf16 %v1104, %v1103
        %v1122 = vpack.c.bf16 %v1106, %v1105
        %v1123 = vld [vmem:[#allocation3] sm:$0xf]
        %v1124 = vld [vmem:[#allocation3 + $0x4] sm:$0xf]
        %v1125 = vld [vmem:[#allocation3 + $0x8] sm:$0xf]
        %v1126 = vld [vmem:[#allocation3 + $0xc] sm:$0xf]
        %v1127 = vld [vmem:[#allocation3 + $0x10] sm:$0xf]
        %v1128 = vld [vmem:[#allocation3 + $0x14] sm:$0xf]
        %v1129 = vld [vmem:[#allocation3 + $0x18] sm:$0xf]
        %v1130 = vld [vmem:[#allocation3 + $0x1c] sm:$0xf]
        %v1139 = vunpack.c.l.b16 %v1123
        %v1140 = vunpack.c.l.b16 %v1124
        %v1141 = vunpack.c.l.b16 %v1125
        %v1142 = vunpack.c.l.b16 %v1126
        %v1143 = vunpack.c.l.b16 %v1127
        %v1144 = vunpack.c.l.b16 %v1128
        %v1145 = vunpack.c.l.b16 %v1129
        %v1146 = vunpack.c.l.b16 %v1130
        %v1147 = vpack.c.b16 %v1140, %v1139
        %v1148 = vpack.c.b16 %v1142, %v1141
        %v1149 = vpack.c.b16 %v1144, %v1143
        %v1150 = vpack.c.b16 %v1146, %v1145
        %v1156 = vsel %vm833, %v1107, 0
        %v1159 = vsel %vm833, %v1108, 0
        %v1162 = vsel %vm833, %v1109, 0
        %v1165 = vsel %vm833, %v1110, 0
        %v1168 = vsel %vm833, %v1111, 0
        %v1171 = vsel %vm833, %v1112, 0
        %v1174 = vsel %vm833, %v1113, 0
        %v1177 = vsel %vm833, %v1114, 0
        %v1180 = vsel %vm833, %v1115, 0
        %v1183 = vsel %vm833, %v1116, 0
        %v1186 = vsel %vm833, %v1117, 0
        %v1189 = vsel %vm833, %v1118, 0
        %v1192 = vsel %vm833, %v1119, 0
        %v1195 = vsel %vm833, %v1120, 0
        %v1198 = vsel %vm833, %v1121, 0
        %v1201 = vsel %vm833, %v1122, 0
        %1203 = vmatprep.subr.bf16.mxu0 0
        %1204 = vmatpush1.bf16.msra.mxu0 0
        %1205 = vmatprep.subr.bf16.mxu0 0
        %1206 = vmatpush1.bf16.msra.mxu0 0
        %1207 = vmatprep.subr.bf16.mxu0 0
        %1208 = vmatpush1.bf16.msra.mxu0 0
        %1209 = vmatprep.subr.bf16.mxu0 0
        %1210 = vmatpush1.bf16.msra.mxu0 0
        %1211 = vmatprep.subr.bf16.mxu0 0
        %1212 = vmatpush1.bf16.msra.mxu0 %v1150
        %1213 = vmatprep.subr.bf16.mxu0 0
        %1214 = vmatpush1.bf16.msra.mxu0 %v1149
        %1215 = vmatprep.subr.bf16.mxu0 0
        %1216 = vmatpush1.bf16.msra.mxu0 %v1148
        %1217 = vmatprep.subr.bf16.mxu0 0
        %1218 = vmatpush1.bf16.msra.mxu0 %v1147
        %1219 = vmatprep.subr.bf16.mxu0 0
        %1220 = vmatpush2.bf16.msra.mxu0 0
        %1221 = vmatprep.subr.bf16.mxu0 0
        %1222 = vmatpush2.bf16.msra.mxu0 0
        %1223 = vmatprep.subr.bf16.mxu0 0
        %1224 = vmatpush2.bf16.msra.mxu0 0
        %1225 = vmatprep.subr.bf16.mxu0 0
        %1226 = vmatpush2.bf16.msra.mxu0 0
        %1227 = vmatprep.subr.bf16.mxu0 0
        %1228 = vmatpush2.bf16.msra.mxu0 0
        %1229 = vmatprep.subr.bf16.mxu0 0
        %1230 = vmatpush2.bf16.msra.mxu0 0
        %1231 = vmatprep.subr.bf16.mxu0 0
        %1232 = vmatpush2.bf16.msra.mxu0 0
        %1233 = vmatprep.subr.bf16.mxu0 0
        %1234 = vmatpush2.bf16.msra.mxu0 0
        %1235 = vmatprep.mubr.bf16.mxu0 0
        %1236 = vmatmul.mubr.bf16.gmra.mxu0 %v1156
        %v1237 = vpop.f32.mrf.mxu0
        %v1238 = vadd.f32 0.0, %v1237
        %v1239 = vpop.f32.mrf.mxu0
        %v1240 = vpop.f32.mrf.mxu0
        %v1241 = vadd.f32 0.0, %v1240
        %v1242 = vpop.f32.mrf.mxu0
        %1243 = vmatprep.mubr.bf16.mxu0 0
        %1244 = vmatmul.mubr.bf16.gmra.mxu0 %v1159
        %v1245 = vpop.f32.mrf.mxu0
        %v1246 = vadd.f32 0.0, %v1245
        %v1247 = vpop.f32.mrf.mxu0
        %v1248 = vpop.f32.mrf.mxu0
        %v1249 = vadd.f32 0.0, %v1248
        %v1250 = vpop.f32.mrf.mxu0
        %1251 = vmatprep.mubr.bf16.mxu0 0
        %1252 = vmatmul.mubr.bf16.gmra.mxu0 %v1162
        %v1253 = vpop.f32.mrf.mxu0
        %v1254 = vadd.f32 0.0, %v1253
        %v1255 = vpop.f32.mrf.mxu0
        %v1256 = vpop.f32.mrf.mxu0
        %v1257 = vadd.f32 0.0, %v1256
        %v1258 = vpop.f32.mrf.mxu0
        %1259 = vmatprep.mubr.bf16.mxu0 0
        %1260 = vmatmul.mubr.bf16.gmra.mxu0 %v1165
        %v1261 = vpop.f32.mrf.mxu0
        %v1262 = vadd.f32 0.0, %v1261
        %v1263 = vpop.f32.mrf.mxu0
        %v1264 = vpop.f32.mrf.mxu0
        %v1265 = vadd.f32 0.0, %v1264
        %v1266 = vpop.f32.mrf.mxu0
        %1267 = vmatprep.mubr.bf16.mxu0 0
        %1268 = vmatmul.mubr.bf16.gmra.mxu0 %v1168
        %v1269 = vpop.f32.mrf.mxu0
        %v1270 = vadd.f32 0.0, %v1269
        %v1271 = vpop.f32.mrf.mxu0
        %v1272 = vpop.f32.mrf.mxu0
        %v1273 = vadd.f32 0.0, %v1272
        %v1274 = vpop.f32.mrf.mxu0
        %1275 = vmatprep.mubr.bf16.mxu0 0
        %1276 = vmatmul.mubr.bf16.gmra.mxu0 %v1171
        %v1277 = vpop.f32.mrf.mxu0
        %v1278 = vadd.f32 0.0, %v1277
        %v1279 = vpop.f32.mrf.mxu0
        %v1280 = vpop.f32.mrf.mxu0
        %v1281 = vadd.f32 0.0, %v1280
        %v1282 = vpop.f32.mrf.mxu0
        %1283 = vmatprep.mubr.bf16.mxu0 0
        %1284 = vmatmul.mubr.bf16.gmra.mxu0 %v1174
        %v1285 = vpop.f32.mrf.mxu0
        %v1286 = vadd.f32 0.0, %v1285
        %v1287 = vpop.f32.mrf.mxu0
        %v1288 = vpop.f32.mrf.mxu0
        %v1289 = vadd.f32 0.0, %v1288
        %v1290 = vpop.f32.mrf.mxu0
        %1291 = vmatprep.mubr.bf16.mxu0 0
        %1292 = vmatmul.mubr.bf16.gmra.mxu0 %v1177
        %v1293 = vpop.f32.mrf.mxu0
        %v1294 = vadd.f32 0.0, %v1293
        %v1295 = vpop.f32.mrf.mxu0
        %v1296 = vpop.f32.mrf.mxu0
        %v1297 = vadd.f32 0.0, %v1296
        %v1298 = vpop.f32.mrf.mxu0
        %1299 = vmatprep.mubr.bf16.mxu0 0
        %1300 = vmatmul.mubr.bf16.gmra.mxu0 %v1180
        %v1301 = vpop.f32.mrf.mxu0
        %v1302 = vadd.f32 0.0, %v1301
        %v1303 = vpop.f32.mrf.mxu0
        %v1304 = vpop.f32.mrf.mxu0
        %v1305 = vadd.f32 0.0, %v1304
        %v1306 = vpop.f32.mrf.mxu0
        %1307 = vmatprep.mubr.bf16.mxu0 0
        %1308 = vmatmul.mubr.bf16.gmra.mxu0 %v1183
        %v1309 = vpop.f32.mrf.mxu0
        %v1310 = vadd.f32 0.0, %v1309
        %v1311 = vpop.f32.mrf.mxu0
        %v1312 = vpop.f32.mrf.mxu0
        %v1313 = vadd.f32 0.0, %v1312
        %v1314 = vpop.f32.mrf.mxu0
        %1315 = vmatprep.mubr.bf16.mxu0 0
        %1316 = vmatmul.mubr.bf16.gmra.mxu0 %v1186
        %v1317 = vpop.f32.mrf.mxu0
        %v1318 = vadd.f32 0.0, %v1317
        %v1319 = vpop.f32.mrf.mxu0
        %v1320 = vpop.f32.mrf.mxu0
        %v1321 = vadd.f32 0.0, %v1320
        %v1322 = vpop.f32.mrf.mxu0
        %1323 = vmatprep.mubr.bf16.mxu0 0
        %1324 = vmatmul.mubr.bf16.gmra.mxu0 %v1189
        %v1325 = vpop.f32.mrf.mxu0
        %v1326 = vadd.f32 0.0, %v1325
        %v1327 = vpop.f32.mrf.mxu0
        %v1328 = vpop.f32.mrf.mxu0
        %v1329 = vadd.f32 0.0, %v1328
        %v1330 = vpop.f32.mrf.mxu0
        %1331 = vmatprep.mubr.bf16.mxu0 0
        %1332 = vmatmul.mubr.bf16.gmra.mxu0 %v1192
        %v1333 = vpop.f32.mrf.mxu0
        %v1334 = vadd.f32 0.0, %v1333
        %v1335 = vpop.f32.mrf.mxu0
        %v1336 = vpop.f32.mrf.mxu0
        %v1337 = vadd.f32 0.0, %v1336
        %v1338 = vpop.f32.mrf.mxu0
        %1339 = vmatprep.mubr.bf16.mxu0 0
        %1340 = vmatmul.mubr.bf16.gmra.mxu0 %v1195
        %v1341 = vpop.f32.mrf.mxu0
        %v1342 = vadd.f32 0.0, %v1341
        %v1343 = vpop.f32.mrf.mxu0
        %v1344 = vpop.f32.mrf.mxu0
        %v1345 = vadd.f32 0.0, %v1344
        %v1346 = vpop.f32.mrf.mxu0
        %1347 = vmatprep.mubr.bf16.mxu0 0
        %1348 = vmatmul.mubr.bf16.gmra.mxu0 %v1198
        %v1349 = vpop.f32.mrf.mxu0
        %v1350 = vadd.f32 0.0, %v1349
        %v1351 = vpop.f32.mrf.mxu0
        %v1352 = vpop.f32.mrf.mxu0
        %v1353 = vadd.f32 0.0, %v1352
        %v1354 = vpop.f32.mrf.mxu0
        %1355 = vmatprep.mubr.bf16.mxu0 0
        %1356 = vmatmul.mubr.bf16.gmra.mxu0 %v1201
        %v1357 = vpop.f32.mrf.mxu0
        %v1358 = vadd.f32 0.0, %v1357
        %v1359 = vpop.f32.mrf.mxu0
        %v1360 = vpop.f32.mrf.mxu0
        %v1361 = vadd.f32 0.0, %v1360
        %v1362 = vpop.f32.mrf.mxu0
        %1363 = vdwg.mxu0
        %v1364 = vadd.f32 %v1238, %v1241
        %v1365 = vadd.f32 %v1364, %v1246
        %v1366 = vadd.f32 %v1365, %v1249
        %v1367 = vadd.f32 %v1366, %v1254
        %v1368 = vadd.f32 %v1367, %v1257
        %v1369 = vadd.f32 %v1368, %v1262
        %v1370 = vadd.f32 %v1369, %v1265
        %v1371 = vadd.f32 %v1370, %v1270
        %v1372 = vadd.f32 %v1371, %v1273
        %v1373 = vadd.f32 %v1372, %v1278
        %v1374 = vadd.f32 %v1373, %v1281
        %v1375 = vadd.f32 %v1374, %v1286
        %v1376 = vadd.f32 %v1375, %v1289
        %v1377 = vadd.f32 %v1376, %v1294
        %v1378 = vadd.f32 %v1377, %v1297
        %v1379 = vadd.f32 %v1378, %v1302
        %v1380 = vadd.f32 %v1379, %v1305
        %v1381 = vadd.f32 %v1380, %v1310
        %v1382 = vadd.f32 %v1381, %v1313
        %v1383 = vadd.f32 %v1382, %v1318
        %v1384 = vadd.f32 %v1383, %v1321
        %v1385 = vadd.f32 %v1384, %v1326
        %v1386 = vadd.f32 %v1385, %v1329
        %v1387 = vadd.f32 %v1386, %v1334
        %v1388 = vadd.f32 %v1387, %v1337
        %v1389 = vadd.f32 %v1388, %v1342
        %v1390 = vadd.f32 %v1389, %v1345
        %v1391 = vadd.f32 %v1390, %v1350
        %v1392 = vadd.f32 %v1391, %v1353
        %v1393 = vadd.f32 %v1392, %v1358
        %v1394 = vadd.f32 %v1393, %v1361
        %v1395 = vrot.slane %v1394, 4
        %v1396 = vadd.f32 %v1394, %v1395
        %v1397 = vrot.slane %v1396, 2
        %v1398 = vadd.f32 %v1396, %v1397
        %v1399 = vrot.slane %v1398, 1
        %v1400 = vadd.f32 %v1398, %v1399
        %v1401 = vmul.f32 %v1238, %v1238
        %v1402 = vmul.f32 %v1241, %v1241
        %v1403 = vmul.f32 %v1246, %v1246
        %v1404 = vmul.f32 %v1249, %v1249
        %v1405 = vmul.f32 %v1254, %v1254
        %v1406 = vmul.f32 %v1257, %v1257
        %v1407 = vmul.f32 %v1262, %v1262
        %v1408 = vmul.f32 %v1265, %v1265
        %v1409 = vmul.f32 %v1270, %v1270
        %v1410 = vmul.f32 %v1273, %v1273
        %v1411 = vmul.f32 %v1278, %v1278
        %v1412 = vmul.f32 %v1281, %v1281
        %v1413 = vmul.f32 %v1286, %v1286
        %v1414 = vmul.f32 %v1289, %v1289
        %v1415 = vmul.f32 %v1294, %v1294
        %v1416 = vmul.f32 %v1297, %v1297
        %v1417 = vmul.f32 %v1302, %v1302
        %v1418 = vmul.f32 %v1305, %v1305
        %v1419 = vmul.f32 %v1310, %v1310
        %v1420 = vmul.f32 %v1313, %v1313
        %v1421 = vmul.f32 %v1318, %v1318
        %v1422 = vmul.f32 %v1321, %v1321
        %v1423 = vmul.f32 %v1326, %v1326
        %v1424 = vmul.f32 %v1329, %v1329
        %v1425 = vmul.f32 %v1334, %v1334
        %v1426 = vmul.f32 %v1337, %v1337
        %v1427 = vmul.f32 %v1342, %v1342
        %v1428 = vmul.f32 %v1345, %v1345
        %v1429 = vmul.f32 %v1350, %v1350
        %v1430 = vmul.f32 %v1353, %v1353
        %v1431 = vmul.f32 %v1358, %v1358
        %v1432 = vmul.f32 %v1361, %v1361
        %v1433 = vadd.f32 %v1401, %v1402
        %v1434 = vadd.f32 %v1433, %v1403
        %v1435 = vadd.f32 %v1434, %v1404
        %v1436 = vadd.f32 %v1435, %v1405
        %v1437 = vadd.f32 %v1436, %v1406
        %v1438 = vadd.f32 %v1437, %v1407
        %v1439 = vadd.f32 %v1438, %v1408
        %v1440 = vadd.f32 %v1439, %v1409
        %v1441 = vadd.f32 %v1440, %v1410
        %v1442 = vadd.f32 %v1441, %v1411
        %v1443 = vadd.f32 %v1442, %v1412
        %v1444 = vadd.f32 %v1443, %v1413
        %v1445 = vadd.f32 %v1444, %v1414
        %v1446 = vadd.f32 %v1445, %v1415
        %v1447 = vadd.f32 %v1446, %v1416
        %v1448 = vadd.f32 %v1447, %v1417
        %v1449 = vadd.f32 %v1448, %v1418
        %v1450 = vadd.f32 %v1449, %v1419
        %v1451 = vadd.f32 %v1450, %v1420
        %v1452 = vadd.f32 %v1451, %v1421
        %v1453 = vadd.f32 %v1452, %v1422
        %v1454 = vadd.f32 %v1453, %v1423
        %v1455 = vadd.f32 %v1454, %v1424
        %v1456 = vadd.f32 %v1455, %v1425
        %v1457 = vadd.f32 %v1456, %v1426
        %v1458 = vadd.f32 %v1457, %v1427
        %v1459 = vadd.f32 %v1458, %v1428
        %v1460 = vadd.f32 %v1459, %v1429
        %v1461 = vadd.f32 %v1460, %v1430
        %v1462 = vadd.f32 %v1461, %v1431
        %v1463 = vadd.f32 %v1462, %v1432
        %v1464 = vrot.slane %v1463, 4
        %v1465 = vadd.f32 %v1463, %v1464
        %v1466 = vrot.slane %v1465, 2
        %v1467 = vadd.f32 %v1465, %v1466
        %v1468 = vrot.slane %v1467, 1
        %v1469 = vadd.f32 %v1467, %v1468
        %v1470 = vmul.f32 %v1400, 0.00390625
        %v1471 = vmul.f32 %v1469, 0.00390625
        %v1472 = vmul.f32 %v1470, %v1470
        %v1473 = vsub.f32 %v1471, %v1472
        %v1474 = vmax.f32 %v1473, 0.0
        %v1475 = vsub.f32 %v1238, %v1470
        %v1476 = vsub.f32 %v1241, %v1470
        %v1477 = vsub.f32 %v1246, %v1470
        %v1478 = vsub.f32 %v1249, %v1470
        %v1479 = vsub.f32 %v1254, %v1470
        %v1480 = vsub.f32 %v1257, %v1470
        %v1481 = vsub.f32 %v1262, %v1470
        %v1482 = vsub.f32 %v1265, %v1470
        %v1483 = vsub.f32 %v1270, %v1470
        %v1484 = vsub.f32 %v1273, %v1470
        %v1485 = vsub.f32 %v1278, %v1470
        %v1486 = vsub.f32 %v1281, %v1470
        %v1487 = vsub.f32 %v1286, %v1470
        %v1488 = vsub.f32 %v1289, %v1470
        %v1489 = vsub.f32 %v1294, %v1470
        %v1490 = vsub.f32 %v1297, %v1470
        %v1491 = vsub.f32 %v1302, %v1470
        %v1492 = vsub.f32 %v1305, %v1470
        %v1493 = vsub.f32 %v1310, %v1470
        %v1494 = vsub.f32 %v1313, %v1470
        %v1495 = vsub.f32 %v1318, %v1470
        %v1496 = vsub.f32 %v1321, %v1470
        %v1497 = vsub.f32 %v1326, %v1470
        %v1498 = vsub.f32 %v1329, %v1470
        %v1499 = vsub.f32 %v1334, %v1470
        %v1500 = vsub.f32 %v1337, %v1470
        %v1501 = vsub.f32 %v1342, %v1470
        %v1502 = vsub.f32 %v1345, %v1470
        %v1503 = vsub.f32 %v1350, %v1470
        %v1504 = vsub.f32 %v1353, %v1470
        %v1505 = vsub.f32 %v1358, %v1470
        %v1506 = vsub.f32 %v1361, %v1470
        %v1507 = vadd.f32 %v1474, 1e-05
        %v1508 = vrsqrt.pop %v1507
        %v1509 = vmul.f32 %v1475, %v1508
        %v1510 = vmul.f32 %v1476, %v1508
        %v1511 = vmul.f32 %v1477, %v1508
        %v1512 = vmul.f32 %v1478, %v1508
        %v1513 = vmul.f32 %v1479, %v1508
        %v1514 = vmul.f32 %v1480, %v1508
        %v1515 = vmul.f32 %v1481, %v1508
        %v1516 = vmul.f32 %v1482, %v1508
        %v1517 = vmul.f32 %v1483, %v1508
        %v1518 = vmul.f32 %v1484, %v1508
        %v1519 = vmul.f32 %v1485, %v1508
        %v1520 = vmul.f32 %v1486, %v1508
        %v1521 = vmul.f32 %v1487, %v1508
        %v1522 = vmul.f32 %v1488, %v1508
        %v1523 = vmul.f32 %v1489, %v1508
        %v1524 = vmul.f32 %v1490, %v1508
        %v1525 = vmul.f32 %v1491, %v1508
        %v1526 = vmul.f32 %v1492, %v1508
        %v1527 = vmul.f32 %v1493, %v1508
        %v1528 = vmul.f32 %v1494, %v1508
        %v1529 = vmul.f32 %v1495, %v1508
        %v1530 = vmul.f32 %v1496, %v1508
        %v1531 = vmul.f32 %v1497, %v1508
        %v1532 = vmul.f32 %v1498, %v1508
        %v1533 = vmul.f32 %v1499, %v1508
        %v1534 = vmul.f32 %v1500, %v1508
        %v1535 = vmul.f32 %v1501, %v1508
        %v1536 = vmul.f32 %v1502, %v1508
        %v1537 = vmul.f32 %v1503, %v1508
        %v1538 = vmul.f32 %v1504, %v1508
        %v1539 = vmul.f32 %v1505, %v1508
        %v1540 = vmul.f32 %v1506, %v1508
        %v1541 = vmax.f32 %v1509, 0.0
        %v1542 = vmax.f32 %v1510, 0.0
        %v1543 = vmax.f32 %v1511, 0.0
        %v1544 = vmax.f32 %v1512, 0.0
        %v1545 = vmax.f32 %v1513, 0.0
        %v1546 = vmax.f32 %v1514, 0.0
        %v1547 = vmax.f32 %v1515, 0.0
        %v1548 = vmax.f32 %v1516, 0.0
        %v1549 = vmax.f32 %v1517, 0.0
        %v1550 = vmax.f32 %v1518, 0.0
        %v1551 = vmax.f32 %v1519, 0.0
        %v1552 = vmax.f32 %v1520, 0.0
        %v1553 = vmax.f32 %v1521, 0.0
        %v1554 = vmax.f32 %v1522, 0.0
        %v1555 = vmax.f32 %v1523, 0.0
        %v1556 = vmax.f32 %v1524, 0.0
        %v1557 = vmax.f32 %v1525, 0.0
        %v1558 = vmax.f32 %v1526, 0.0
        %v1559 = vmax.f32 %v1527, 0.0
        %v1560 = vmax.f32 %v1528, 0.0
        %v1561 = vmax.f32 %v1529, 0.0
        %v1562 = vmax.f32 %v1530, 0.0
        %v1563 = vmax.f32 %v1531, 0.0
        %v1564 = vmax.f32 %v1532, 0.0
        %v1565 = vmax.f32 %v1533, 0.0
        %v1566 = vmax.f32 %v1534, 0.0
        %v1567 = vmax.f32 %v1535, 0.0
        %v1568 = vmax.f32 %v1536, 0.0
        %v1569 = vmax.f32 %v1537, 0.0
        %v1570 = vmax.f32 %v1538, 0.0
        %v1571 = vmax.f32 %v1539, 0.0
        %v1572 = vmax.f32 %v1540, 0.0
        %v1573 = vpack.c.bf16 %v1542, %v1541
        %v1574 = vpack.c.bf16 %v1544, %v1543
        %v1575 = vpack.c.bf16 %v1546, %v1545
        %v1576 = vpack.c.bf16 %v1548, %v1547
        %v1577 = vpack.c.bf16 %v1550, %v1549
        %v1578 = vpack.c.bf16 %v1552, %v1551
        %v1579 = vpack.c.bf16 %v1554, %v1553
        %v1580 = vpack.c.bf16 %v1556, %v1555
        %v1581 = vpack.c.bf16 %v1558, %v1557
        %v1582 = vpack.c.bf16 %v1560, %v1559
        %v1583 = vpack.c.bf16 %v1562, %v1561
        %v1584 = vpack.c.bf16 %v1564, %v1563
        %v1585 = vpack.c.bf16 %v1566, %v1565
        %v1586 = vpack.c.bf16 %v1568, %v1567
        %v1587 = vpack.c.bf16 %v1570, %v1569
        %v1588 = vpack.c.bf16 %v1572, %v1571
        %v1605 = vunpack.c.l.b16 %v1573
        %v1606 = vunpack.c.h.b16 %v1573
        %v1607 = vunpack.c.l.b16 %v1574
        %v1608 = vunpack.c.h.b16 %v1574
        %v1609 = vunpack.c.l.b16 %v1575
        %v1610 = vunpack.c.h.b16 %v1575
        %v1611 = vunpack.c.l.b16 %v1576
        %v1612 = vunpack.c.h.b16 %v1576
        %v1613 = vunpack.c.l.b16 %v1577
        %v1614 = vunpack.c.h.b16 %v1577
        %v1615 = vunpack.c.l.b16 %v1578
        %v1616 = vunpack.c.h.b16 %v1578
        %v1617 = vunpack.c.l.b16 %v1579
        %v1618 = vunpack.c.h.b16 %v1579
        %v1619 = vunpack.c.l.b16 %v1580
        %v1620 = vunpack.c.h.b16 %v1580
        %v1621 = vunpack.c.l.b16 %v1581
        %v1622 = vunpack.c.h.b16 %v1581
        %v1623 = vunpack.c.l.b16 %v1582
        %v1624 = vunpack.c.h.b16 %v1582
        %v1625 = vunpack.c.l.b16 %v1583
        %v1626 = vunpack.c.h.b16 %v1583
        %v1627 = vunpack.c.l.b16 %v1584
        %v1628 = vunpack.c.h.b16 %v1584
        %v1629 = vunpack.c.l.b16 %v1585
        %v1630 = vunpack.c.h.b16 %v1585
        %v1631 = vunpack.c.l.b16 %v1586
        %v1632 = vunpack.c.h.b16 %v1586
        %v1633 = vunpack.c.l.b16 %v1587
        %v1634 = vunpack.c.h.b16 %v1587
        %v1635 = vunpack.c.l.b16 %v1588
        %v1636 = vunpack.c.h.b16 %v1588
        %v1637 = vpack.c.b16 %v1605, %v1605
        %v1638 = vpack.c.b16 %v1606, %v1606
        %v1639 = vpack.c.b16 %v1607, %v1607
        %v1640 = vpack.c.b16 %v1608, %v1608
        %v1641 = vpack.c.b16 %v1609, %v1609
        %v1642 = vpack.c.b16 %v1610, %v1610
        %v1643 = vpack.c.b16 %v1611, %v1611
        %v1644 = vpack.c.b16 %v1612, %v1612
        %v1645 = vpack.c.b16 %v1613, %v1613
        %v1646 = vpack.c.b16 %v1614, %v1614
        %v1647 = vpack.c.b16 %v1615, %v1615
        %v1648 = vpack.c.b16 %v1616, %v1616
        %v1649 = vpack.c.b16 %v1617, %v1617
        %v1650 = vpack.c.b16 %v1618, %v1618
        %v1651 = vpack.c.b16 %v1619, %v1619
        %v1652 = vpack.c.b16 %v1620, %v1620
        %v1653 = vpack.c.b16 %v1621, %v1621
        %v1654 = vpack.c.b16 %v1622, %v1622
        %v1655 = vpack.c.b16 %v1623, %v1623
        %v1656 = vpack.c.b16 %v1624, %v1624
        %v1657 = vpack.c.b16 %v1625, %v1625
        %v1658 = vpack.c.b16 %v1626, %v1626
        %v1659 = vpack.c.b16 %v1627, %v1627
        %v1660 = vpack.c.b16 %v1628, %v1628
        %v1661 = vpack.c.b16 %v1629, %v1629
        %v1662 = vpack.c.b16 %v1630, %v1630
        %v1663 = vpack.c.b16 %v1631, %v1631
        %v1664 = vpack.c.b16 %v1632, %v1632
        %v1665 = vpack.c.b16 %v1633, %v1633
        %v1666 = vpack.c.b16 %v1634, %v1634
        %v1667 = vpack.c.b16 %v1635, %v1635
        %v1668 = vpack.c.b16 %v1636, %v1636
        %1701 = vst [vmem:[#allocation2] sm:$0xf] %v1637
        %1702 = vst [vmem:[#allocation2 + $0x4] sm:$0xf] %v1638
        %1703 = vst [vmem:[#allocation2 + $0x8] sm:$0xf] %v1639
        %1704 = vst [vmem:[#allocation2 + $0xc] sm:$0xf] %v1640
        %1705 = vst [vmem:[#allocation2 + $0x10] sm:$0xf] %v1641
        %1706 = vst [vmem:[#allocation2 + $0x14] sm:$0xf] %v1642
        %1707 = vst [vmem:[#allocation2 + $0x18] sm:$0xf] %v1643
        %1708 = vst [vmem:[#allocation2 + $0x1c] sm:$0xf] %v1644
        %1709 = vst [vmem:[#allocation2 + $0x20] sm:$0xf] %v1645
        %1710 = vst [vmem:[#allocation2 + $0x24] sm:$0xf] %v1646
        %1711 = vst [vmem:[#allocation2 + $0x28] sm:$0xf] %v1647
        %1712 = vst [vmem:[#allocation2 + $0x2c] sm:$0xf] %v1648
        %1713 = vst [vmem:[#allocation2 + $0x30] sm:$0xf] %v1649
        %1714 = vst [vmem:[#allocation2 + $0x34] sm:$0xf] %v1650
        %1715 = vst [vmem:[#allocation2 + $0x38] sm:$0xf] %v1651
        %1716 = vst [vmem:[#allocation2 + $0x3c] sm:$0xf] %v1652
        %1717 = vst [vmem:[#allocation2 + $0x40] sm:$0xf] %v1653
        %1718 = vst [vmem:[#allocation2 + $0x44] sm:$0xf] %v1654
        %1719 = vst [vmem:[#allocation2 + $0x48] sm:$0xf] %v1655
        %1720 = vst [vmem:[#allocation2 + $0x4c] sm:$0xf] %v1656
        %1721 = vst [vmem:[#allocation2 + $0x50] sm:$0xf] %v1657
        %1722 = vst [vmem:[#allocation2 + $0x54] sm:$0xf] %v1658
        %1723 = vst [vmem:[#allocation2 + $0x58] sm:$0xf] %v1659
        %1724 = vst [vmem:[#allocation2 + $0x5c] sm:$0xf] %v1660
        %1725 = vst [vmem:[#allocation2 + $0x60] sm:$0xf] %v1661
        %1726 = vst [vmem:[#allocation2 + $0x64] sm:$0xf] %v1662
        %1727 = vst [vmem:[#allocation2 + $0x68] sm:$0xf] %v1663
        %1728 = vst [vmem:[#allocation2 + $0x6c] sm:$0xf] %v1664
        %1729 = vst [vmem:[#allocation2 + $0x70] sm:$0xf] %v1665
        %1730 = vst [vmem:[#allocation2 + $0x74] sm:$0xf] %v1666
        %1731 = vst [vmem:[#allocation2 + $0x78] sm:$0xf] %v1667
        %1732 = vst [vmem:[#allocation2 + $0x7c] sm:$0xf] %v1668
        %v1733 = vld [vmem:[%s3] sm:$0xff]
        %v1734 = vld [vmem:[%s3 + $0x8] sm:$0xff]
        %v1735 = vld [vmem:[%s3 + $0x10] sm:$0xff]
        %v1736 = vld [vmem:[%s3 + $0x18] sm:$0xff]
        %v1737 = vld [vmem:[%s3 + $0x20] sm:$0xff]
        %v1738 = vld [vmem:[%s3 + $0x28] sm:$0xff]
        %v1739 = vld [vmem:[%s3 + $0x30] sm:$0xff]
        %v1740 = vld [vmem:[%s3 + $0x38] sm:$0xff]
        %v1741 = vld [vmem:[%s3 + $0x40] sm:$0xff]
        %v1742 = vld [vmem:[%s3 + $0x48] sm:$0xff]
        %v1743 = vld [vmem:[%s3 + $0x50] sm:$0xff]
        %v1744 = vld [vmem:[%s3 + $0x58] sm:$0xff]
        %v1745 = vld [vmem:[%s3 + $0x60] sm:$0xff]
        %v1746 = vld [vmem:[%s3 + $0x68] sm:$0xff]
        %v1747 = vld [vmem:[%s3 + $0x70] sm:$0xff]
        %v1748 = vld [vmem:[%s3 + $0x78] sm:$0xff]
        %v1749 = vld [vmem:[%s3 + $0x80] sm:$0xff]
        %v1750 = vld [vmem:[%s3 + $0x88] sm:$0xff]
        %v1751 = vld [vmem:[%s3 + $0x90] sm:$0xff]
        %v1752 = vld [vmem:[%s3 + $0x98] sm:$0xff]
        %v1753 = vld [vmem:[%s3 + $0xa0] sm:$0xff]
        %v1754 = vld [vmem:[%s3 + $0xa8] sm:$0xff]
        %v1755 = vld [vmem:[%s3 + $0xb0] sm:$0xff]
        %v1756 = vld [vmem:[%s3 + $0xb8] sm:$0xff]
        %v1757 = vld [vmem:[%s3 + $0xc0] sm:$0xff]
        %v1758 = vld [vmem:[%s3 + $0xc8] sm:$0xff]
        %v1759 = vld [vmem:[%s3 + $0xd0] sm:$0xff]
        %v1760 = vld [vmem:[%s3 + $0xd8] sm:$0xff]
        %v1761 = vld [vmem:[%s3 + $0xe0] sm:$0xff]
        %v1762 = vld [vmem:[%s3 + $0xe8] sm:$0xff]
        %v1763 = vld [vmem:[%s3 + $0xf0] sm:$0xff]
        %v1764 = vld [vmem:[%s3 + $0xf8] sm:$0xff]
        %v1765 = vld [vmem:[%s3 + $0x100] sm:$0xff]
        %v1766 = vld [vmem:[%s3 + $0x108] sm:$0xff]
        %v1767 = vld [vmem:[%s3 + $0x110] sm:$0xff]
        %v1768 = vld [vmem:[%s3 + $0x118] sm:$0xff]
        %v1769 = vld [vmem:[%s3 + $0x120] sm:$0xff]
        %v1770 = vld [vmem:[%s3 + $0x128] sm:$0xff]
        %v1771 = vld [vmem:[%s3 + $0x130] sm:$0xff]
        %v1772 = vld [vmem:[%s3 + $0x138] sm:$0xff]
        %v1773 = vld [vmem:[%s3 + $0x140] sm:$0xff]
        %v1774 = vld [vmem:[%s3 + $0x148] sm:$0xff]
        %v1775 = vld [vmem:[%s3 + $0x150] sm:$0xff]
        %v1776 = vld [vmem:[%s3 + $0x158] sm:$0xff]
        %v1777 = vld [vmem:[%s3 + $0x160] sm:$0xff]
        %v1778 = vld [vmem:[%s3 + $0x168] sm:$0xff]
        %v1779 = vld [vmem:[%s3 + $0x170] sm:$0xff]
        %v1780 = vld [vmem:[%s3 + $0x178] sm:$0xff]
        %v1781 = vld [vmem:[%s3 + $0x180] sm:$0xff]
        %v1782 = vld [vmem:[%s3 + $0x188] sm:$0xff]
        %v1783 = vld [vmem:[%s3 + $0x190] sm:$0xff]
        %v1784 = vld [vmem:[%s3 + $0x198] sm:$0xff]
        %v1785 = vld [vmem:[%s3 + $0x1a0] sm:$0xff]
        %v1786 = vld [vmem:[%s3 + $0x1a8] sm:$0xff]
        %v1787 = vld [vmem:[%s3 + $0x1b0] sm:$0xff]
        %v1788 = vld [vmem:[%s3 + $0x1b8] sm:$0xff]
        %v1789 = vld [vmem:[%s3 + $0x1c0] sm:$0xff]
        %v1790 = vld [vmem:[%s3 + $0x1c8] sm:$0xff]
        %v1791 = vld [vmem:[%s3 + $0x1d0] sm:$0xff]
        %v1792 = vld [vmem:[%s3 + $0x1d8] sm:$0xff]
        %v1793 = vld [vmem:[%s3 + $0x1e0] sm:$0xff]
        %v1794 = vld [vmem:[%s3 + $0x1e8] sm:$0xff]
        %v1795 = vld [vmem:[%s3 + $0x1f0] sm:$0xff]
        %v1796 = vld [vmem:[%s3 + $0x1f8] sm:$0xff]
        %v1797 = vld [vmem:[#allocation2] sm:$0xf]
        %v1798 = vld [vmem:[#allocation2 + $0x4] sm:$0xf]
        %v1799 = vld [vmem:[#allocation2 + $0x8] sm:$0xf]
        %v1800 = vld [vmem:[#allocation2 + $0xc] sm:$0xf]
        %v1801 = vld [vmem:[#allocation2 + $0x10] sm:$0xf]
        %v1802 = vld [vmem:[#allocation2 + $0x14] sm:$0xf]
        %v1803 = vld [vmem:[#allocation2 + $0x18] sm:$0xf]
        %v1804 = vld [vmem:[#allocation2 + $0x1c] sm:$0xf]
        %v1805 = vld [vmem:[#allocation2 + $0x20] sm:$0xf]
        %v1806 = vld [vmem:[#allocation2 + $0x24] sm:$0xf]
        %v1807 = vld [vmem:[#allocation2 + $0x28] sm:$0xf]
        %v1808 = vld [vmem:[#allocation2 + $0x2c] sm:$0xf]
        %v1809 = vld [vmem:[#allocation2 + $0x30] sm:$0xf]
        %v1810 = vld [vmem:[#allocation2 + $0x34] sm:$0xf]
        %v1811 = vld [vmem:[#allocation2 + $0x38] sm:$0xf]
        %v1812 = vld [vmem:[#allocation2 + $0x3c] sm:$0xf]
        %v1813 = vld [vmem:[#allocation2 + $0x40] sm:$0xf]
        %v1814 = vld [vmem:[#allocation2 + $0x44] sm:$0xf]
        %v1815 = vld [vmem:[#allocation2 + $0x48] sm:$0xf]
        %v1816 = vld [vmem:[#allocation2 + $0x4c] sm:$0xf]
        %v1817 = vld [vmem:[#allocation2 + $0x50] sm:$0xf]
        %v1818 = vld [vmem:[#allocation2 + $0x54] sm:$0xf]
        %v1819 = vld [vmem:[#allocation2 + $0x58] sm:$0xf]
        %v1820 = vld [vmem:[#allocation2 + $0x5c] sm:$0xf]
        %v1821 = vld [vmem:[#allocation2 + $0x60] sm:$0xf]
        %v1822 = vld [vmem:[#allocation2 + $0x64] sm:$0xf]
        %v1823 = vld [vmem:[#allocation2 + $0x68] sm:$0xf]
        %v1824 = vld [vmem:[#allocation2 + $0x6c] sm:$0xf]
        %v1825 = vld [vmem:[#allocation2 + $0x70] sm:$0xf]
        %v1826 = vld [vmem:[#allocation2 + $0x74] sm:$0xf]
        %v1827 = vld [vmem:[#allocation2 + $0x78] sm:$0xf]
        %v1828 = vld [vmem:[#allocation2 + $0x7c] sm:$0xf]
        %v1861 = vunpack.c.l.b16 %v1797
        %v1862 = vunpack.c.l.b16 %v1798
        %v1863 = vunpack.c.l.b16 %v1799
        %v1864 = vunpack.c.l.b16 %v1800
        %v1865 = vunpack.c.l.b16 %v1801
        %v1866 = vunpack.c.l.b16 %v1802
        %v1867 = vunpack.c.l.b16 %v1803
        %v1868 = vunpack.c.l.b16 %v1804
        %v1869 = vunpack.c.l.b16 %v1805
        %v1870 = vunpack.c.l.b16 %v1806
        %v1871 = vunpack.c.l.b16 %v1807
        %v1872 = vunpack.c.l.b16 %v1808
        %v1873 = vunpack.c.l.b16 %v1809
        %v1874 = vunpack.c.l.b16 %v1810
        %v1875 = vunpack.c.l.b16 %v1811
        %v1876 = vunpack.c.l.b16 %v1812
        %v1877 = vunpack.c.l.b16 %v1813
        %v1878 = vunpack.c.l.b16 %v1814
        %v1879 = vunpack.c.l.b16 %v1815
        %v1880 = vunpack.c.l.b16 %v1816
        %v1881 = vunpack.c.l.b16 %v1817
        %v1882 = vunpack.c.l.b16 %v1818
        %v1883 = vunpack.c.l.b16 %v1819
        %v1884 = vunpack.c.l.b16 %v1820
        %v1885 = vunpack.c.l.b16 %v1821
        %v1886 = vunpack.c.l.b16 %v1822
        %v1887 = vunpack.c.l.b16 %v1823
        %v1888 = vunpack.c.l.b16 %v1824
        %v1889 = vunpack.c.l.b16 %v1825
        %v1890 = vunpack.c.l.b16 %v1826
        %v1891 = vunpack.c.l.b16 %v1827
        %v1892 = vunpack.c.l.b16 %v1828
        %v1893 = vpack.c.b16 %v1862, %v1861
        %v1894 = vpack.c.b16 %v1864, %v1863
        %v1895 = vpack.c.b16 %v1866, %v1865
        %v1896 = vpack.c.b16 %v1868, %v1867
        %v1897 = vpack.c.b16 %v1870, %v1869
        %v1898 = vpack.c.b16 %v1872, %v1871
        %v1899 = vpack.c.b16 %v1874, %v1873
        %v1900 = vpack.c.b16 %v1876, %v1875
        %v1901 = vpack.c.b16 %v1878, %v1877
        %v1902 = vpack.c.b16 %v1880, %v1879
        %v1903 = vpack.c.b16 %v1882, %v1881
        %v1904 = vpack.c.b16 %v1884, %v1883
        %v1905 = vpack.c.b16 %v1886, %v1885
        %v1906 = vpack.c.b16 %v1888, %v1887
        %v1907 = vpack.c.b16 %v1890, %v1889
        %v1908 = vpack.c.b16 %v1892, %v1891
        %v1989 = vunpack.c.l.b16 %v1733
        %v1990 = vunpack.c.h.b16 %v1733
        %v1991 = vunpack.c.l.b16 %v1734
        %v1992 = vunpack.c.h.b16 %v1734
        %v1993 = vunpack.c.l.b16 %v1735
        %v1994 = vunpack.c.h.b16 %v1735
        %v1995 = vunpack.c.l.b16 %v1736
        %v1996 = vunpack.c.h.b16 %v1736
        %v1997 = vunpack.c.l.b16 %v1737
        %v1998 = vunpack.c.h.b16 %v1737
        %v1999 = vunpack.c.l.b16 %v1738
        %v2000 = vunpack.c.h.b16 %v1738
        %v2001 = vunpack.c.l.b16 %v1739
        %v2002 = vunpack.c.h.b16 %v1739
        %v2003 = vunpack.c.l.b16 %v1740
        %v2004 = vunpack.c.h.b16 %v1740
        %v2005 = vunpack.c.l.b16 %v1741
        %v2006 = vunpack.c.h.b16 %v1741
        %v2007 = vunpack.c.l.b16 %v1742
        %v2008 = vunpack.c.h.b16 %v1742
        %v2009 = vunpack.c.l.b16 %v1743
        %v2010 = vunpack.c.h.b16 %v1743
        %v2011 = vunpack.c.l.b16 %v1744
        %v2012 = vunpack.c.h.b16 %v1744
        %v2013 = vunpack.c.l.b16 %v1745
        %v2014 = vunpack.c.h.b16 %v1745
        %v2015 = vunpack.c.l.b16 %v1746
        %v2016 = vunpack.c.h.b16 %v1746
        %v2017 = vunpack.c.l.b16 %v1747
        %v2018 = vunpack.c.h.b16 %v1747
        %v2019 = vunpack.c.l.b16 %v1748
        %v2020 = vunpack.c.h.b16 %v1748
        %v2021 = vunpack.c.l.b16 %v1749
        %v2022 = vunpack.c.h.b16 %v1749
        %v2023 = vunpack.c.l.b16 %v1750
        %v2024 = vunpack.c.h.b16 %v1750
        %v2025 = vunpack.c.l.b16 %v1751
        %v2026 = vunpack.c.h.b16 %v1751
        %v2027 = vunpack.c.l.b16 %v1752
        %v2028 = vunpack.c.h.b16 %v1752
        %v2029 = vunpack.c.l.b16 %v1753
        %v2030 = vunpack.c.h.b16 %v1753
        %v2031 = vunpack.c.l.b16 %v1754
        %v2032 = vunpack.c.h.b16 %v1754
        %v2033 = vunpack.c.l.b16 %v1755
        %v2034 = vunpack.c.h.b16 %v1755
        %v2035 = vunpack.c.l.b16 %v1756
        %v2036 = vunpack.c.h.b16 %v1756
        %v2037 = vunpack.c.l.b16 %v1757
        %v2038 = vunpack.c.h.b16 %v1757
        %v2039 = vunpack.c.l.b16 %v1758
        %v2040 = vunpack.c.h.b16 %v1758
        %v2041 = vunpack.c.l.b16 %v1759
        %v2042 = vunpack.c.h.b16 %v1759
        %v2043 = vunpack.c.l.b16 %v1760
        %v2044 = vunpack.c.h.b16 %v1760
        %v2045 = vunpack.c.l.b16 %v1761
        %v2046 = vunpack.c.h.b16 %v1761
        %v2047 = vunpack.c.l.b16 %v1762
        %v2048 = vunpack.c.h.b16 %v1762
        %v2049 = vunpack.c.l.b16 %v1763
        %v2050 = vunpack.c.h.b16 %v1763
        %v2051 = vunpack.c.l.b16 %v1764
        %v2052 = vunpack.c.h.b16 %v1764
        %v2053 = vunpack.c.l.b16 %v1765
        %v2054 = vunpack.c.h.b16 %v1765
        %v2055 = vunpack.c.l.b16 %v1766
        %v2056 = vunpack.c.h.b16 %v1766
        %v2057 = vunpack.c.l.b16 %v1767
        %v2058 = vunpack.c.h.b16 %v1767
        %v2059 = vunpack.c.l.b16 %v1768
        %v2060 = vunpack.c.h.b16 %v1768
        %v2061 = vunpack.c.l.b16 %v1769
        %v2062 = vunpack.c.h.b16 %v1769
        %v2063 = vunpack.c.l.b16 %v1770
        %v2064 = vunpack.c.h.b16 %v1770
        %v2065 = vunpack.c.l.b16 %v1771
        %v2066 = vunpack.c.h.b16 %v1771
        %v2067 = vunpack.c.l.b16 %v1772
        %v2068 = vunpack.c.h.b16 %v1772
        %v2069 = vunpack.c.l.b16 %v1773
        %v2070 = vunpack.c.h.b16 %v1773
        %v2071 = vunpack.c.l.b16 %v1774
        %v2072 = vunpack.c.h.b16 %v1774
        %v2073 = vunpack.c.l.b16 %v1775
        %v2074 = vunpack.c.h.b16 %v1775
        %v2075 = vunpack.c.l.b16 %v1776
        %v2076 = vunpack.c.h.b16 %v1776
        %v2077 = vunpack.c.l.b16 %v1777
        %v2078 = vunpack.c.h.b16 %v1777
        %v2079 = vunpack.c.l.b16 %v1778
        %v2080 = vunpack.c.h.b16 %v1778
        %v2081 = vunpack.c.l.b16 %v1779
        %v2082 = vunpack.c.h.b16 %v1779
        %v2083 = vunpack.c.l.b16 %v1780
        %v2084 = vunpack.c.h.b16 %v1780
        %v2085 = vunpack.c.l.b16 %v1781
        %v2086 = vunpack.c.h.b16 %v1781
        %v2087 = vunpack.c.l.b16 %v1782
        %v2088 = vunpack.c.h.b16 %v1782
        %v2089 = vunpack.c.l.b16 %v1783
        %v2090 = vunpack.c.h.b16 %v1783
        %v2091 = vunpack.c.l.b16 %v1784
        %v2092 = vunpack.c.h.b16 %v1784
        %v2093 = vunpack.c.l.b16 %v1785
        %v2094 = vunpack.c.h.b16 %v1785
        %v2095 = vunpack.c.l.b16 %v1786
        %v2096 = vunpack.c.h.b16 %v1786
        %v2097 = vunpack.c.l.b16 %v1787
        %v2098 = vunpack.c.h.b16 %v1787
        %v2099 = vunpack.c.l.b16 %v1788
        %v2100 = vunpack.c.h.b16 %v1788
        %v2101 = vunpack.c.l.b16 %v1789
        %v2102 = vunpack.c.h.b16 %v1789
        %v2103 = vunpack.c.l.b16 %v1790
        %v2104 = vunpack.c.h.b16 %v1790
        %v2105 = vunpack.c.l.b16 %v1791
        %v2106 = vunpack.c.h.b16 %v1791
        %v2107 = vunpack.c.l.b16 %v1792
        %v2108 = vunpack.c.h.b16 %v1792
        %v2109 = vunpack.c.l.b16 %v1793
        %v2110 = vunpack.c.h.b16 %v1793
        %v2111 = vunpack.c.l.b16 %v1794
        %v2112 = vunpack.c.h.b16 %v1794
        %v2113 = vunpack.c.l.b16 %v1795
        %v2114 = vunpack.c.h.b16 %v1795
        %v2115 = vunpack.c.l.b16 %v1796
        %v2116 = vunpack.c.h.b16 %v1796
        %v2117 = vpack.c.b16 %v1997, %v1989
        %v2118 = vpack.c.b16 %v1998, %v1990
        %v2119 = vpack.c.b16 %v1999, %v1991
        %v2120 = vpack.c.b16 %v2000, %v1992
        %v2121 = vpack.c.b16 %v2001, %v1993
        %v2122 = vpack.c.b16 %v2002, %v1994
        %v2123 = vpack.c.b16 %v2003, %v1995
        %v2124 = vpack.c.b16 %v2004, %v1996
        %v2125 = vpack.c.b16 %v2013, %v2005
        %v2126 = vpack.c.b16 %v2014, %v2006
        %v2127 = vpack.c.b16 %v2015, %v2007
        %v2128 = vpack.c.b16 %v2016, %v2008
        %v2129 = vpack.c.b16 %v2017, %v2009
        %v2130 = vpack.c.b16 %v2018, %v2010
        %v2131 = vpack.c.b16 %v2019, %v2011
        %v2132 = vpack.c.b16 %v2020, %v2012
        %v2133 = vpack.c.b16 %v2029, %v2021
        %v2134 = vpack.c.b16 %v2030, %v2022
        %v2135 = vpack.c.b16 %v2031, %v2023
        %v2136 = vpack.c.b16 %v2032, %v2024
        %v2137 = vpack.c.b16 %v2033, %v2025
        %v2138 = vpack.c.b16 %v2034, %v2026
        %v2139 = vpack.c.b16 %v2035, %v2027
        %v2140 = vpack.c.b16 %v2036, %v2028
        %v2141 = vpack.c.b16 %v2045, %v2037
        %v2142 = vpack.c.b16 %v2046, %v2038
        %v2143 = vpack.c.b16 %v2047, %v2039
        %v2144 = vpack.c.b16 %v2048, %v2040
        %v2145 = vpack.c.b16 %v2049, %v2041
        %v2146 = vpack.c.b16 %v2050, %v2042
        %v2147 = vpack.c.b16 %v2051, %v2043
        %v2148 = vpack.c.b16 %v2052, %v2044
        %v2149 = vpack.c.b16 %v2061, %v2053
        %v2150 = vpack.c.b16 %v2062, %v2054
        %v2151 = vpack.c.b16 %v2063, %v2055
        %v2152 = vpack.c.b16 %v2064, %v2056
        %v2153 = vpack.c.b16 %v2065, %v2057
        %v2154 = vpack.c.b16 %v2066, %v2058
        %v2155 = vpack.c.b16 %v2067, %v2059
        %v2156 = vpack.c.b16 %v2068, %v2060
        %v2157 = vpack.c.b16 %v2077, %v2069
        %v2158 = vpack.c.b16 %v2078, %v2070
        %v2159 = vpack.c.b16 %v2079, %v2071
        %v2160 = vpack.c.b16 %v2080, %v2072
        %v2161 = vpack.c.b16 %v2081, %v2073
        %v2162 = vpack.c.b16 %v2082, %v2074
        %v2163 = vpack.c.b16 %v2083, %v2075
        %v2164 = vpack.c.b16 %v2084, %v2076
        %v2165 = vpack.c.b16 %v2093, %v2085
        %v2166 = vpack.c.b16 %v2094, %v2086
        %v2167 = vpack.c.b16 %v2095, %v2087
        %v2168 = vpack.c.b16 %v2096, %v2088
        %v2169 = vpack.c.b16 %v2097, %v2089
        %v2170 = vpack.c.b16 %v2098, %v2090
        %v2171 = vpack.c.b16 %v2099, %v2091
        %v2172 = vpack.c.b16 %v2100, %v2092
        %v2173 = vpack.c.b16 %v2109, %v2101
        %v2174 = vpack.c.b16 %v2110, %v2102
        %v2175 = vpack.c.b16 %v2111, %v2103
        %v2176 = vpack.c.b16 %v2112, %v2104
        %v2177 = vpack.c.b16 %v2113, %v2105
        %v2178 = vpack.c.b16 %v2114, %v2106
        %v2179 = vpack.c.b16 %v2115, %v2107
        %v2180 = vpack.c.b16 %v2116, %v2108
        %2245 = vmatprep.subr.bf16.mxu0 %v2174
        %2246 = vmatpush1.bf16.msra.mxu0 %v2173
        %2247 = vmatprep.subr.bf16.mxu0 %v2166
        %2248 = vmatpush1.bf16.msra.mxu0 %v2165
        %2249 = vmatprep.subr.bf16.mxu0 %v2158
        %2250 = vmatpush1.bf16.msra.mxu0 %v2157
        %2251 = vmatprep.subr.bf16.mxu0 %v2150
        %2252 = vmatpush1.bf16.msra.mxu0 %v2149
        %2253 = vmatprep.subr.bf16.mxu0 %v2142
        %2254 = vmatpush1.bf16.msra.mxu0 %v2141
        %2255 = vmatprep.subr.bf16.mxu0 %v2134
        %2256 = vmatpush1.bf16.msra.mxu0 %v2133
        %2257 = vmatprep.subr.bf16.mxu0 %v2126
        %2258 = vmatpush1.bf16.msra.mxu0 %v2125
        %2259 = vmatprep.subr.bf16.mxu0 %v2118
        %2260 = vmatpush1.bf16.msra.mxu0 %v2117
        %2261 = vmatprep.subr.bf16.mxu0 0
        %2262 = vmatpush2.bf16.msra.mxu0 0
        %2263 = vmatprep.subr.bf16.mxu0 0
        %2264 = vmatpush2.bf16.msra.mxu0 0
        %2265 = vmatprep.subr.bf16.mxu0 0
        %2266 = vmatpush2.bf16.msra.mxu0 0
        %2267 = vmatprep.subr.bf16.mxu0 0
        %2268 = vmatpush2.bf16.msra.mxu0 0
        %2269 = vmatprep.subr.bf16.mxu0 0
        %2270 = vmatpush2.bf16.msra.mxu0 0
        %2271 = vmatprep.subr.bf16.mxu0 0
        %2272 = vmatpush2.bf16.msra.mxu0 0
        %2273 = vmatprep.subr.bf16.mxu0 0
        %2274 = vmatpush2.bf16.msra.mxu0 0
        %2275 = vmatprep.subr.bf16.mxu0 0
        %2276 = vmatpush2.bf16.msra.mxu0 0
        %2277 = vmatprep.mubr.bf16.mxu0 0
        %2278 = vmatmul.mubr.bf16.gmra.mxu0 %v1893
        %v2279 = vpop.f32.mrf.mxu0
        %v2280 = vadd.f32 0.0, %v2279
        %v2281 = vpop.f32.mrf.mxu0
        %v2282 = vadd.f32 0.0, %v2281
        %v2283 = vpop.f32.mrf.mxu0
        %v2284 = vadd.f32 0.0, %v2283
        %v2285 = vpop.f32.mrf.mxu0
        %v2286 = vadd.f32 0.0, %v2285
        %2287 = vmatprep.mubr.bf16.mxu0 0
        %2288 = vmatmul.mubr.bf16.gmra.mxu0 %v1894
        %v2289 = vpop.f32.mrf.mxu0
        %v2290 = vadd.f32 0.0, %v2289
        %v2291 = vpop.f32.mrf.mxu0
        %v2292 = vadd.f32 0.0, %v2291
        %v2293 = vpop.f32.mrf.mxu0
        %v2294 = vadd.f32 0.0, %v2293
        %v2295 = vpop.f32.mrf.mxu0
        %v2296 = vadd.f32 0.0, %v2295
        %2297 = vmatprep.mubr.bf16.mxu0 0
        %2298 = vmatmul.mubr.bf16.gmra.mxu0 %v1895
        %v2299 = vpop.f32.mrf.mxu0
        %v2300 = vadd.f32 0.0, %v2299
        %v2301 = vpop.f32.mrf.mxu0
        %v2302 = vadd.f32 0.0, %v2301
        %v2303 = vpop.f32.mrf.mxu0
        %v2304 = vadd.f32 0.0, %v2303
        %v2305 = vpop.f32.mrf.mxu0
        %v2306 = vadd.f32 0.0, %v2305
        %2307 = vmatprep.mubr.bf16.mxu0 0
        %2308 = vmatmul.mubr.bf16.gmra.mxu0 %v1896
        %v2309 = vpop.f32.mrf.mxu0
        %v2310 = vadd.f32 0.0, %v2309
        %v2311 = vpop.f32.mrf.mxu0
        %v2312 = vadd.f32 0.0, %v2311
        %v2313 = vpop.f32.mrf.mxu0
        %v2314 = vadd.f32 0.0, %v2313
        %v2315 = vpop.f32.mrf.mxu0
        %v2316 = vadd.f32 0.0, %v2315
        %2317 = vmatprep.mubr.bf16.mxu0 0
        %2318 = vmatmul.mubr.bf16.gmra.mxu0 %v1897
        %v2319 = vpop.f32.mrf.mxu0
        %v2320 = vadd.f32 0.0, %v2319
        %v2321 = vpop.f32.mrf.mxu0
        %v2322 = vadd.f32 0.0, %v2321
        %v2323 = vpop.f32.mrf.mxu0
        %v2324 = vadd.f32 0.0, %v2323
        %v2325 = vpop.f32.mrf.mxu0
        %v2326 = vadd.f32 0.0, %v2325
        %2327 = vmatprep.mubr.bf16.mxu0 0
        %2328 = vmatmul.mubr.bf16.gmra.mxu0 %v1898
        %v2329 = vpop.f32.mrf.mxu0
        %v2330 = vadd.f32 0.0, %v2329
        %v2331 = vpop.f32.mrf.mxu0
        %v2332 = vadd.f32 0.0, %v2331
        %v2333 = vpop.f32.mrf.mxu0
        %v2334 = vadd.f32 0.0, %v2333
        %v2335 = vpop.f32.mrf.mxu0
        %v2336 = vadd.f32 0.0, %v2335
        %2337 = vmatprep.mubr.bf16.mxu0 0
        %2338 = vmatmul.mubr.bf16.gmra.mxu0 %v1899
        %v2339 = vpop.f32.mrf.mxu0
        %v2340 = vadd.f32 0.0, %v2339
        %v2341 = vpop.f32.mrf.mxu0
        %v2342 = vadd.f32 0.0, %v2341
        %v2343 = vpop.f32.mrf.mxu0
        %v2344 = vadd.f32 0.0, %v2343
        %v2345 = vpop.f32.mrf.mxu0
        %v2346 = vadd.f32 0.0, %v2345
        %2347 = vmatprep.mubr.bf16.mxu0 0
        %2348 = vmatmul.mubr.bf16.gmra.mxu0 %v1900
        %v2349 = vpop.f32.mrf.mxu0
        %v2350 = vadd.f32 0.0, %v2349
        %v2351 = vpop.f32.mrf.mxu0
        %v2352 = vadd.f32 0.0, %v2351
        %v2353 = vpop.f32.mrf.mxu0
        %v2354 = vadd.f32 0.0, %v2353
        %v2355 = vpop.f32.mrf.mxu0
        %v2356 = vadd.f32 0.0, %v2355
        %2357 = vmatprep.mubr.bf16.mxu0 0
        %2358 = vmatmul.mubr.bf16.gmra.mxu0 %v1901
        %v2359 = vpop.f32.mrf.mxu0
        %v2360 = vadd.f32 0.0, %v2359
        %v2361 = vpop.f32.mrf.mxu0
        %v2362 = vadd.f32 0.0, %v2361
        %v2363 = vpop.f32.mrf.mxu0
        %v2364 = vadd.f32 0.0, %v2363
        %v2365 = vpop.f32.mrf.mxu0
        %v2366 = vadd.f32 0.0, %v2365
        %2367 = vmatprep.mubr.bf16.mxu0 0
        %2368 = vmatmul.mubr.bf16.gmra.mxu0 %v1902
        %v2369 = vpop.f32.mrf.mxu0
        %v2370 = vadd.f32 0.0, %v2369
        %v2371 = vpop.f32.mrf.mxu0
        %v2372 = vadd.f32 0.0, %v2371
        %v2373 = vpop.f32.mrf.mxu0
        %v2374 = vadd.f32 0.0, %v2373
        %v2375 = vpop.f32.mrf.mxu0
        %v2376 = vadd.f32 0.0, %v2375
        %2377 = vmatprep.mubr.bf16.mxu0 0
        %2378 = vmatmul.mubr.bf16.gmra.mxu0 %v1903
        %v2379 = vpop.f32.mrf.mxu0
        %v2380 = vadd.f32 0.0, %v2379
        %v2381 = vpop.f32.mrf.mxu0
        %v2382 = vadd.f32 0.0, %v2381
        %v2383 = vpop.f32.mrf.mxu0
        %v2384 = vadd.f32 0.0, %v2383
        %v2385 = vpop.f32.mrf.mxu0
        %v2386 = vadd.f32 0.0, %v2385
        %2387 = vmatprep.mubr.bf16.mxu0 0
        %2388 = vmatmul.mubr.bf16.gmra.mxu0 %v1904
        %v2389 = vpop.f32.mrf.mxu0
        %v2390 = vadd.f32 0.0, %v2389
        %v2391 = vpop.f32.mrf.mxu0
        %v2392 = vadd.f32 0.0, %v2391
        %v2393 = vpop.f32.mrf.mxu0
        %v2394 = vadd.f32 0.0, %v2393
        %v2395 = vpop.f32.mrf.mxu0
        %v2396 = vadd.f32 0.0, %v2395
        %2397 = vmatprep.mubr.bf16.mxu0 0
        %2398 = vmatmul.mubr.bf16.gmra.mxu0 %v1905
        %v2399 = vpop.f32.mrf.mxu0
        %v2400 = vadd.f32 0.0, %v2399
        %v2401 = vpop.f32.mrf.mxu0
        %v2402 = vadd.f32 0.0, %v2401
        %v2403 = vpop.f32.mrf.mxu0
        %v2404 = vadd.f32 0.0, %v2403
        %v2405 = vpop.f32.mrf.mxu0
        %v2406 = vadd.f32 0.0, %v2405
        %2407 = vmatprep.mubr.bf16.mxu0 0
        %2408 = vmatmul.mubr.bf16.gmra.mxu0 %v1906
        %v2409 = vpop.f32.mrf.mxu0
        %v2410 = vadd.f32 0.0, %v2409
        %v2411 = vpop.f32.mrf.mxu0
        %v2412 = vadd.f32 0.0, %v2411
        %v2413 = vpop.f32.mrf.mxu0
        %v2414 = vadd.f32 0.0, %v2413
        %v2415 = vpop.f32.mrf.mxu0
        %v2416 = vadd.f32 0.0, %v2415
        %2417 = vmatprep.mubr.bf16.mxu0 0
        %2418 = vmatmul.mubr.bf16.gmra.mxu0 %v1907
        %v2419 = vpop.f32.mrf.mxu0
        %v2420 = vadd.f32 0.0, %v2419
        %v2421 = vpop.f32.mrf.mxu0
        %v2422 = vadd.f32 0.0, %v2421
        %v2423 = vpop.f32.mrf.mxu0
        %v2424 = vadd.f32 0.0, %v2423
        %v2425 = vpop.f32.mrf.mxu0
        %v2426 = vadd.f32 0.0, %v2425
        %2427 = vmatprep.mubr.bf16.mxu0 0
        %2428 = vmatmul.mubr.bf16.gmra.mxu0 %v1908
        %v2429 = vpop.f32.mrf.mxu0
        %v2430 = vadd.f32 0.0, %v2429
        %v2431 = vpop.f32.mrf.mxu0
        %v2432 = vadd.f32 0.0, %v2431
        %v2433 = vpop.f32.mrf.mxu0
        %v2434 = vadd.f32 0.0, %v2433
        %v2435 = vpop.f32.mrf.mxu0
        %v2436 = vadd.f32 0.0, %v2435
        %2437 = vdwg.mxu0
        %2438 = vmatprep.subr.bf16.mxu0 %v2176
        %2439 = vmatpush1.bf16.msra.mxu0 %v2175
        %2440 = vmatprep.subr.bf16.mxu0 %v2168
        %2441 = vmatpush1.bf16.msra.mxu0 %v2167
        %2442 = vmatprep.subr.bf16.mxu0 %v2160
        %2443 = vmatpush1.bf16.msra.mxu0 %v2159
        %2444 = vmatprep.subr.bf16.mxu0 %v2152
        %2445 = vmatpush1.bf16.msra.mxu0 %v2151
        %2446 = vmatprep.subr.bf16.mxu0 %v2144
        %2447 = vmatpush1.bf16.msra.mxu0 %v2143
        %2448 = vmatprep.subr.bf16.mxu0 %v2136
        %2449 = vmatpush1.bf16.msra.mxu0 %v2135
        %2450 = vmatprep.subr.bf16.mxu0 %v2128
        %2451 = vmatpush1.bf16.msra.mxu0 %v2127
        %2452 = vmatprep.subr.bf16.mxu0 %v2120
        %2453 = vmatpush1.bf16.msra.mxu0 %v2119
        %2454 = vmatprep.subr.bf16.mxu0 0
        %2455 = vmatpush2.bf16.msra.mxu0 0
        %2456 = vmatprep.subr.bf16.mxu0 0
        %2457 = vmatpush2.bf16.msra.mxu0 0
        %2458 = vmatprep.subr.bf16.mxu0 0
        %2459 = vmatpush2.bf16.msra.mxu0 0
        %2460 = vmatprep.subr.bf16.mxu0 0
        %2461 = vmatpush2.bf16.msra.mxu0 0
        %2462 = vmatprep.subr.bf16.mxu0 0
        %2463 = vmatpush2.bf16.msra.mxu0 0
        %2464 = vmatprep.subr.bf16.mxu0 0
        %2465 = vmatpush2.bf16.msra.mxu0 0
        %2466 = vmatprep.subr.bf16.mxu0 0
        %2467 = vmatpush2.bf16.msra.mxu0 0
        %2468 = vmatprep.subr.bf16.mxu0 0
        %2469 = vmatpush2.bf16.msra.mxu0 0
        %2470 = vmatprep.mubr.bf16.mxu0 0
        %2471 = vmatmul.mubr.bf16.gmra.mxu0 %v1893
        %v2472 = vpop.f32.mrf.mxu0
        %v2473 = vadd.f32 0.0, %v2472
        %v2474 = vpop.f32.mrf.mxu0
        %v2475 = vadd.f32 0.0, %v2474
        %v2476 = vpop.f32.mrf.mxu0
        %v2477 = vadd.f32 0.0, %v2476
        %v2478 = vpop.f32.mrf.mxu0
        %v2479 = vadd.f32 0.0, %v2478
        %2480 = vmatprep.mubr.bf16.mxu0 0
        %2481 = vmatmul.mubr.bf16.gmra.mxu0 %v1894
        %v2482 = vpop.f32.mrf.mxu0
        %v2483 = vadd.f32 0.0, %v2482
        %v2484 = vpop.f32.mrf.mxu0
        %v2485 = vadd.f32 0.0, %v2484
        %v2486 = vpop.f32.mrf.mxu0
        %v2487 = vadd.f32 0.0, %v2486
        %v2488 = vpop.f32.mrf.mxu0
        %v2489 = vadd.f32 0.0, %v2488
        %2490 = vmatprep.mubr.bf16.mxu0 0
        %2491 = vmatmul.mubr.bf16.gmra.mxu0 %v1895
        %v2492 = vpop.f32.mrf.mxu0
        %v2493 = vadd.f32 0.0, %v2492
        %v2494 = vpop.f32.mrf.mxu0
        %v2495 = vadd.f32 0.0, %v2494
        %v2496 = vpop.f32.mrf.mxu0
        %v2497 = vadd.f32 0.0, %v2496
        %v2498 = vpop.f32.mrf.mxu0
        %v2499 = vadd.f32 0.0, %v2498
        %2500 = vmatprep.mubr.bf16.mxu0 0
        %2501 = vmatmul.mubr.bf16.gmra.mxu0 %v1896
        %v2502 = vpop.f32.mrf.mxu0
        %v2503 = vadd.f32 0.0, %v2502
        %v2504 = vpop.f32.mrf.mxu0
        %v2505 = vadd.f32 0.0, %v2504
        %v2506 = vpop.f32.mrf.mxu0
        %v2507 = vadd.f32 0.0, %v2506
        %v2508 = vpop.f32.mrf.mxu0
        %v2509 = vadd.f32 0.0, %v2508
        %2510 = vmatprep.mubr.bf16.mxu0 0
        %2511 = vmatmul.mubr.bf16.gmra.mxu0 %v1897
        %v2512 = vpop.f32.mrf.mxu0
        %v2513 = vadd.f32 0.0, %v2512
        %v2514 = vpop.f32.mrf.mxu0
        %v2515 = vadd.f32 0.0, %v2514
        %v2516 = vpop.f32.mrf.mxu0
        %v2517 = vadd.f32 0.0, %v2516
        %v2518 = vpop.f32.mrf.mxu0
        %v2519 = vadd.f32 0.0, %v2518
        %2520 = vmatprep.mubr.bf16.mxu0 0
        %2521 = vmatmul.mubr.bf16.gmra.mxu0 %v1898
        %v2522 = vpop.f32.mrf.mxu0
        %v2523 = vadd.f32 0.0, %v2522
        %v2524 = vpop.f32.mrf.mxu0
        %v2525 = vadd.f32 0.0, %v2524
        %v2526 = vpop.f32.mrf.mxu0
        %v2527 = vadd.f32 0.0, %v2526
        %v2528 = vpop.f32.mrf.mxu0
        %v2529 = vadd.f32 0.0, %v2528
        %2530 = vmatprep.mubr.bf16.mxu0 0
        %2531 = vmatmul.mubr.bf16.gmra.mxu0 %v1899
        %v2532 = vpop.f32.mrf.mxu0
        %v2533 = vadd.f32 0.0, %v2532
        %v2534 = vpop.f32.mrf.mxu0
        %v2535 = vadd.f32 0.0, %v2534
        %v2536 = vpop.f32.mrf.mxu0
        %v2537 = vadd.f32 0.0, %v2536
        %v2538 = vpop.f32.mrf.mxu0
        %v2539 = vadd.f32 0.0, %v2538
        %2540 = vmatprep.mubr.bf16.mxu0 0
        %2541 = vmatmul.mubr.bf16.gmra.mxu0 %v1900
        %v2542 = vpop.f32.mrf.mxu0
        %v2543 = vadd.f32 0.0, %v2542
        %v2544 = vpop.f32.mrf.mxu0
        %v2545 = vadd.f32 0.0, %v2544
        %v2546 = vpop.f32.mrf.mxu0
        %v2547 = vadd.f32 0.0, %v2546
        %v2548 = vpop.f32.mrf.mxu0
        %v2549 = vadd.f32 0.0, %v2548
        %2550 = vmatprep.mubr.bf16.mxu0 0
        %2551 = vmatmul.mubr.bf16.gmra.mxu0 %v1901
        %v2552 = vpop.f32.mrf.mxu0
        %v2553 = vadd.f32 0.0, %v2552
        %v2554 = vpop.f32.mrf.mxu0
        %v2555 = vadd.f32 0.0, %v2554
        %v2556 = vpop.f32.mrf.mxu0
        %v2557 = vadd.f32 0.0, %v2556
        %v2558 = vpop.f32.mrf.mxu0
        %v2559 = vadd.f32 0.0, %v2558
        %2560 = vmatprep.mubr.bf16.mxu0 0
        %2561 = vmatmul.mubr.bf16.gmra.mxu0 %v1902
        %v2562 = vpop.f32.mrf.mxu0
        %v2563 = vadd.f32 0.0, %v2562
        %v2564 = vpop.f32.mrf.mxu0
        %v2565 = vadd.f32 0.0, %v2564
        %v2566 = vpop.f32.mrf.mxu0
        %v2567 = vadd.f32 0.0, %v2566
        %v2568 = vpop.f32.mrf.mxu0
        %v2569 = vadd.f32 0.0, %v2568
        %2570 = vmatprep.mubr.bf16.mxu0 0
        %2571 = vmatmul.mubr.bf16.gmra.mxu0 %v1903
        %v2572 = vpop.f32.mrf.mxu0
        %v2573 = vadd.f32 0.0, %v2572
        %v2574 = vpop.f32.mrf.mxu0
        %v2575 = vadd.f32 0.0, %v2574
        %v2576 = vpop.f32.mrf.mxu0
        %v2577 = vadd.f32 0.0, %v2576
        %v2578 = vpop.f32.mrf.mxu0
        %v2579 = vadd.f32 0.0, %v2578
        %2580 = vmatprep.mubr.bf16.mxu0 0
        %2581 = vmatmul.mubr.bf16.gmra.mxu0 %v1904
        %v2582 = vpop.f32.mrf.mxu0
        %v2583 = vadd.f32 0.0, %v2582
        %v2584 = vpop.f32.mrf.mxu0
        %v2585 = vadd.f32 0.0, %v2584
        %v2586 = vpop.f32.mrf.mxu0
        %v2587 = vadd.f32 0.0, %v2586
        %v2588 = vpop.f32.mrf.mxu0
        %v2589 = vadd.f32 0.0, %v2588
        %2590 = vmatprep.mubr.bf16.mxu0 0
        %2591 = vmatmul.mubr.bf16.gmra.mxu0 %v1905
        %v2592 = vpop.f32.mrf.mxu0
        %v2593 = vadd.f32 0.0, %v2592
        %v2594 = vpop.f32.mrf.mxu0
        %v2595 = vadd.f32 0.0, %v2594
        %v2596 = vpop.f32.mrf.mxu0
        %v2597 = vadd.f32 0.0, %v2596
        %v2598 = vpop.f32.mrf.mxu0
        %v2599 = vadd.f32 0.0, %v2598
        %2600 = vmatprep.mubr.bf16.mxu0 0
        %2601 = vmatmul.mubr.bf16.gmra.mxu0 %v1906
        %v2602 = vpop.f32.mrf.mxu0
        %v2603 = vadd.f32 0.0, %v2602
        %v2604 = vpop.f32.mrf.mxu0
        %v2605 = vadd.f32 0.0, %v2604
        %v2606 = vpop.f32.mrf.mxu0
        %v2607 = vadd.f32 0.0, %v2606
        %v2608 = vpop.f32.mrf.mxu0
        %v2609 = vadd.f32 0.0, %v2608
        %2610 = vmatprep.mubr.bf16.mxu0 0
        %2611 = vmatmul.mubr.bf16.gmra.mxu0 %v1907
        %v2612 = vpop.f32.mrf.mxu0
        %v2613 = vadd.f32 0.0, %v2612
        %v2614 = vpop.f32.mrf.mxu0
        %v2615 = vadd.f32 0.0, %v2614
        %v2616 = vpop.f32.mrf.mxu0
        %v2617 = vadd.f32 0.0, %v2616
        %v2618 = vpop.f32.mrf.mxu0
        %v2619 = vadd.f32 0.0, %v2618
        %2620 = vmatprep.mubr.bf16.mxu0 0
        %2621 = vmatmul.mubr.bf16.gmra.mxu0 %v1908
        %v2622 = vpop.f32.mrf.mxu0
        %v2623 = vadd.f32 0.0, %v2622
        %v2624 = vpop.f32.mrf.mxu0
        %v2625 = vadd.f32 0.0, %v2624
        %v2626 = vpop.f32.mrf.mxu0
        %v2627 = vadd.f32 0.0, %v2626
        %v2628 = vpop.f32.mrf.mxu0
        %v2629 = vadd.f32 0.0, %v2628
        %2630 = vdwg.mxu0
        %2631 = vmatprep.subr.bf16.mxu0 %v2178
        %2632 = vmatpush1.bf16.msra.mxu0 %v2177
        %2633 = vmatprep.subr.bf16.mxu0 %v2170
        %2634 = vmatpush1.bf16.msra.mxu0 %v2169
        %2635 = vmatprep.subr.bf16.mxu0 %v2162
        %2636 = vmatpush1.bf16.msra.mxu0 %v2161
        %2637 = vmatprep.subr.bf16.mxu0 %v2154
        %2638 = vmatpush1.bf16.msra.mxu0 %v2153
        %2639 = vmatprep.subr.bf16.mxu0 %v2146
        %2640 = vmatpush1.bf16.msra.mxu0 %v2145
        %2641 = vmatprep.subr.bf16.mxu0 %v2138
        %2642 = vmatpush1.bf16.msra.mxu0 %v2137
        %2643 = vmatprep.subr.bf16.mxu0 %v2130
        %2644 = vmatpush1.bf16.msra.mxu0 %v2129
        %2645 = vmatprep.subr.bf16.mxu0 %v2122
        %2646 = vmatpush1.bf16.msra.mxu0 %v2121
        %2647 = vmatprep.subr.bf16.mxu0 0
        %2648 = vmatpush2.bf16.msra.mxu0 0
        %2649 = vmatprep.subr.bf16.mxu0 0
        %2650 = vmatpush2.bf16.msra.mxu0 0
        %2651 = vmatprep.subr.bf16.mxu0 0
        %2652 = vmatpush2.bf16.msra.mxu0 0
        %2653 = vmatprep.subr.bf16.mxu0 0
        %2654 = vmatpush2.bf16.msra.mxu0 0
        %2655 = vmatprep.subr.bf16.mxu0 0
        %2656 = vmatpush2.bf16.msra.mxu0 0
        %2657 = vmatprep.subr.bf16.mxu0 0
        %2658 = vmatpush2.bf16.msra.mxu0 0
        %2659 = vmatprep.subr.bf16.mxu0 0
        %2660 = vmatpush2.bf16.msra.mxu0 0
        %2661 = vmatprep.subr.bf16.mxu0 0
        %2662 = vmatpush2.bf16.msra.mxu0 0
        %2663 = vmatprep.mubr.bf16.mxu0 0
        %2664 = vmatmul.mubr.bf16.gmra.mxu0 %v1893
        %v2665 = vpop.f32.mrf.mxu0
        %v2666 = vadd.f32 0.0, %v2665
        %v2667 = vpop.f32.mrf.mxu0
        %v2668 = vadd.f32 0.0, %v2667
        %v2669 = vpop.f32.mrf.mxu0
        %v2670 = vadd.f32 0.0, %v2669
        %v2671 = vpop.f32.mrf.mxu0
        %v2672 = vadd.f32 0.0, %v2671
        %2673 = vmatprep.mubr.bf16.mxu0 0
        %2674 = vmatmul.mubr.bf16.gmra.mxu0 %v1894
        %v2675 = vpop.f32.mrf.mxu0
        %v2676 = vadd.f32 0.0, %v2675
        %v2677 = vpop.f32.mrf.mxu0
        %v2678 = vadd.f32 0.0, %v2677
        %v2679 = vpop.f32.mrf.mxu0
        %v2680 = vadd.f32 0.0, %v2679
        %v2681 = vpop.f32.mrf.mxu0
        %v2682 = vadd.f32 0.0, %v2681
        %2683 = vmatprep.mubr.bf16.mxu0 0
        %2684 = vmatmul.mubr.bf16.gmra.mxu0 %v1895
        %v2685 = vpop.f32.mrf.mxu0
        %v2686 = vadd.f32 0.0, %v2685
        %v2687 = vpop.f32.mrf.mxu0
        %v2688 = vadd.f32 0.0, %v2687
        %v2689 = vpop.f32.mrf.mxu0
        %v2690 = vadd.f32 0.0, %v2689
        %v2691 = vpop.f32.mrf.mxu0
        %v2692 = vadd.f32 0.0, %v2691
        %2693 = vmatprep.mubr.bf16.mxu0 0
        %2694 = vmatmul.mubr.bf16.gmra.mxu0 %v1896
        %v2695 = vpop.f32.mrf.mxu0
        %v2696 = vadd.f32 0.0, %v2695
        %v2697 = vpop.f32.mrf.mxu0
        %v2698 = vadd.f32 0.0, %v2697
        %v2699 = vpop.f32.mrf.mxu0
        %v2700 = vadd.f32 0.0, %v2699
        %v2701 = vpop.f32.mrf.mxu0
        %v2702 = vadd.f32 0.0, %v2701
        %2703 = vmatprep.mubr.bf16.mxu0 0
        %2704 = vmatmul.mubr.bf16.gmra.mxu0 %v1897
        %v2705 = vpop.f32.mrf.mxu0
        %v2706 = vadd.f32 0.0, %v2705
        %v2707 = vpop.f32.mrf.mxu0
        %v2708 = vadd.f32 0.0, %v2707
        %v2709 = vpop.f32.mrf.mxu0
        %v2710 = vadd.f32 0.0, %v2709
        %v2711 = vpop.f32.mrf.mxu0
        %v2712 = vadd.f32 0.0, %v2711
        %2713 = vmatprep.mubr.bf16.mxu0 0
        %2714 = vmatmul.mubr.bf16.gmra.mxu0 %v1898
        %v2715 = vpop.f32.mrf.mxu0
        %v2716 = vadd.f32 0.0, %v2715
        %v2717 = vpop.f32.mrf.mxu0
        %v2718 = vadd.f32 0.0, %v2717
        %v2719 = vpop.f32.mrf.mxu0
        %v2720 = vadd.f32 0.0, %v2719
        %v2721 = vpop.f32.mrf.mxu0
        %v2722 = vadd.f32 0.0, %v2721
        %2723 = vmatprep.mubr.bf16.mxu0 0
        %2724 = vmatmul.mubr.bf16.gmra.mxu0 %v1899
        %v2725 = vpop.f32.mrf.mxu0
        %v2726 = vadd.f32 0.0, %v2725
        %v2727 = vpop.f32.mrf.mxu0
        %v2728 = vadd.f32 0.0, %v2727
        %v2729 = vpop.f32.mrf.mxu0
        %v2730 = vadd.f32 0.0, %v2729
        %v2731 = vpop.f32.mrf.mxu0
        %v2732 = vadd.f32 0.0, %v2731
        %2733 = vmatprep.mubr.bf16.mxu0 0
        %2734 = vmatmul.mubr.bf16.gmra.mxu0 %v1900
        %v2735 = vpop.f32.mrf.mxu0
        %v2736 = vadd.f32 0.0, %v2735
        %v2737 = vpop.f32.mrf.mxu0
        %v2738 = vadd.f32 0.0, %v2737
        %v2739 = vpop.f32.mrf.mxu0
        %v2740 = vadd.f32 0.0, %v2739
        %v2741 = vpop.f32.mrf.mxu0
        %v2742 = vadd.f32 0.0, %v2741
        %2743 = vmatprep.mubr.bf16.mxu0 0
        %2744 = vmatmul.mubr.bf16.gmra.mxu0 %v1901
        %v2745 = vpop.f32.mrf.mxu0
        %v2746 = vadd.f32 0.0, %v2745
        %v2747 = vpop.f32.mrf.mxu0
        %v2748 = vadd.f32 0.0, %v2747
        %v2749 = vpop.f32.mrf.mxu0
        %v2750 = vadd.f32 0.0, %v2749
        %v2751 = vpop.f32.mrf.mxu0
        %v2752 = vadd.f32 0.0, %v2751
        %2753 = vmatprep.mubr.bf16.mxu0 0
        %2754 = vmatmul.mubr.bf16.gmra.mxu0 %v1902
        %v2755 = vpop.f32.mrf.mxu0
        %v2756 = vadd.f32 0.0, %v2755
        %v2757 = vpop.f32.mrf.mxu0
        %v2758 = vadd.f32 0.0, %v2757
        %v2759 = vpop.f32.mrf.mxu0
        %v2760 = vadd.f32 0.0, %v2759
        %v2761 = vpop.f32.mrf.mxu0
        %v2762 = vadd.f32 0.0, %v2761
        %2763 = vmatprep.mubr.bf16.mxu0 0
        %2764 = vmatmul.mubr.bf16.gmra.mxu0 %v1903
        %v2765 = vpop.f32.mrf.mxu0
        %v2766 = vadd.f32 0.0, %v2765
        %v2767 = vpop.f32.mrf.mxu0
        %v2768 = vadd.f32 0.0, %v2767
        %v2769 = vpop.f32.mrf.mxu0
        %v2770 = vadd.f32 0.0, %v2769
        %v2771 = vpop.f32.mrf.mxu0
        %v2772 = vadd.f32 0.0, %v2771
        %2773 = vmatprep.mubr.bf16.mxu0 0
        %2774 = vmatmul.mubr.bf16.gmra.mxu0 %v1904
        %v2775 = vpop.f32.mrf.mxu0
        %v2776 = vadd.f32 0.0, %v2775
        %v2777 = vpop.f32.mrf.mxu0
        %v2778 = vadd.f32 0.0, %v2777
        %v2779 = vpop.f32.mrf.mxu0
        %v2780 = vadd.f32 0.0, %v2779
        %v2781 = vpop.f32.mrf.mxu0
        %v2782 = vadd.f32 0.0, %v2781
        %2783 = vmatprep.mubr.bf16.mxu0 0
        %2784 = vmatmul.mubr.bf16.gmra.mxu0 %v1905
        %v2785 = vpop.f32.mrf.mxu0
        %v2786 = vadd.f32 0.0, %v2785
        %v2787 = vpop.f32.mrf.mxu0
        %v2788 = vadd.f32 0.0, %v2787
        %v2789 = vpop.f32.mrf.mxu0
        %v2790 = vadd.f32 0.0, %v2789
        %v2791 = vpop.f32.mrf.mxu0
        %v2792 = vadd.f32 0.0, %v2791
        %2793 = vmatprep.mubr.bf16.mxu0 0
        %2794 = vmatmul.mubr.bf16.gmra.mxu0 %v1906
        %v2795 = vpop.f32.mrf.mxu0
        %v2796 = vadd.f32 0.0, %v2795
        %v2797 = vpop.f32.mrf.mxu0
        %v2798 = vadd.f32 0.0, %v2797
        %v2799 = vpop.f32.mrf.mxu0
        %v2800 = vadd.f32 0.0, %v2799
        %v2801 = vpop.f32.mrf.mxu0
        %v2802 = vadd.f32 0.0, %v2801
        %2803 = vmatprep.mubr.bf16.mxu0 0
        %2804 = vmatmul.mubr.bf16.gmra.mxu0 %v1907
        %v2805 = vpop.f32.mrf.mxu0
        %v2806 = vadd.f32 0.0, %v2805
        %v2807 = vpop.f32.mrf.mxu0
        %v2808 = vadd.f32 0.0, %v2807
        %v2809 = vpop.f32.mrf.mxu0
        %v2810 = vadd.f32 0.0, %v2809
        %v2811 = vpop.f32.mrf.mxu0
        %v2812 = vadd.f32 0.0, %v2811
        %2813 = vmatprep.mubr.bf16.mxu0 0
        %2814 = vmatmul.mubr.bf16.gmra.mxu0 %v1908
        %v2815 = vpop.f32.mrf.mxu0
        %v2816 = vadd.f32 0.0, %v2815
        %v2817 = vpop.f32.mrf.mxu0
        %v2818 = vadd.f32 0.0, %v2817
        %v2819 = vpop.f32.mrf.mxu0
        %v2820 = vadd.f32 0.0, %v2819
        %v2821 = vpop.f32.mrf.mxu0
        %v2822 = vadd.f32 0.0, %v2821
        %2823 = vdwg.mxu0
        %2824 = vmatprep.subr.bf16.mxu0 %v2180
        %2825 = vmatpush1.bf16.msra.mxu0 %v2179
        %2826 = vmatprep.subr.bf16.mxu0 %v2172
        %2827 = vmatpush1.bf16.msra.mxu0 %v2171
        %2828 = vmatprep.subr.bf16.mxu0 %v2164
        %2829 = vmatpush1.bf16.msra.mxu0 %v2163
        %2830 = vmatprep.subr.bf16.mxu0 %v2156
        %2831 = vmatpush1.bf16.msra.mxu0 %v2155
        %2832 = vmatprep.subr.bf16.mxu0 %v2148
        %2833 = vmatpush1.bf16.msra.mxu0 %v2147
        %2834 = vmatprep.subr.bf16.mxu0 %v2140
        %2835 = vmatpush1.bf16.msra.mxu0 %v2139
        %2836 = vmatprep.subr.bf16.mxu0 %v2132
        %2837 = vmatpush1.bf16.msra.mxu0 %v2131
        %2838 = vmatprep.subr.bf16.mxu0 %v2124
        %2839 = vmatpush1.bf16.msra.mxu0 %v2123
        %2840 = vmatprep.subr.bf16.mxu0 0
        %2841 = vmatpush2.bf16.msra.mxu0 0
        %2842 = vmatprep.subr.bf16.mxu0 0
        %2843 = vmatpush2.bf16.msra.mxu0 0
        %2844 = vmatprep.subr.bf16.mxu0 0
        %2845 = vmatpush2.bf16.msra.mxu0 0
        %2846 = vmatprep.subr.bf16.mxu0 0
        %2847 = vmatpush2.bf16.msra.mxu0 0
        %2848 = vmatprep.subr.bf16.mxu0 0
        %2849 = vmatpush2.bf16.msra.mxu0 0
        %2850 = vmatprep.subr.bf16.mxu0 0
        %2851 = vmatpush2.bf16.msra.mxu0 0
        %2852 = vmatprep.subr.bf16.mxu0 0
        %2853 = vmatpush2.bf16.msra.mxu0 0
        %2854 = vmatprep.subr.bf16.mxu0 0
        %2855 = vmatpush2.bf16.msra.mxu0 0
        %2856 = vmatprep.mubr.bf16.mxu0 0
        %2857 = vmatmul.mubr.bf16.gmra.mxu0 %v1893
        %v2858 = vpop.f32.mrf.mxu0
        %v2859 = vadd.f32 0.0, %v2858
        %v2860 = vpop.f32.mrf.mxu0
        %v2861 = vadd.f32 0.0, %v2860
        %v2862 = vpop.f32.mrf.mxu0
        %v2863 = vadd.f32 0.0, %v2862
        %v2864 = vpop.f32.mrf.mxu0
        %v2865 = vadd.f32 0.0, %v2864
        %2866 = vmatprep.mubr.bf16.mxu0 0
        %2867 = vmatmul.mubr.bf16.gmra.mxu0 %v1894
        %v2868 = vpop.f32.mrf.mxu0
        %v2869 = vadd.f32 0.0, %v2868
        %v2870 = vpop.f32.mrf.mxu0
        %v2871 = vadd.f32 0.0, %v2870
        %v2872 = vpop.f32.mrf.mxu0
        %v2873 = vadd.f32 0.0, %v2872
        %v2874 = vpop.f32.mrf.mxu0
        %v2875 = vadd.f32 0.0, %v2874
        %2876 = vmatprep.mubr.bf16.mxu0 0
        %2877 = vmatmul.mubr.bf16.gmra.mxu0 %v1895
        %v2878 = vpop.f32.mrf.mxu0
        %v2879 = vadd.f32 0.0, %v2878
        %v2880 = vpop.f32.mrf.mxu0
        %v2881 = vadd.f32 0.0, %v2880
        %v2882 = vpop.f32.mrf.mxu0
        %v2883 = vadd.f32 0.0, %v2882
        %v2884 = vpop.f32.mrf.mxu0
        %v2885 = vadd.f32 0.0, %v2884
        %2886 = vmatprep.mubr.bf16.mxu0 0
        %2887 = vmatmul.mubr.bf16.gmra.mxu0 %v1896
        %v2888 = vpop.f32.mrf.mxu0
        %v2889 = vadd.f32 0.0, %v2888
        %v2890 = vpop.f32.mrf.mxu0
        %v2891 = vadd.f32 0.0, %v2890
        %v2892 = vpop.f32.mrf.mxu0
        %v2893 = vadd.f32 0.0, %v2892
        %v2894 = vpop.f32.mrf.mxu0
        %v2895 = vadd.f32 0.0, %v2894
        %2896 = vmatprep.mubr.bf16.mxu0 0
        %2897 = vmatmul.mubr.bf16.gmra.mxu0 %v1897
        %v2898 = vpop.f32.mrf.mxu0
        %v2899 = vadd.f32 0.0, %v2898
        %v2900 = vpop.f32.mrf.mxu0
        %v2901 = vadd.f32 0.0, %v2900
        %v2902 = vpop.f32.mrf.mxu0
        %v2903 = vadd.f32 0.0, %v2902
        %v2904 = vpop.f32.mrf.mxu0
        %v2905 = vadd.f32 0.0, %v2904
        %2906 = vmatprep.mubr.bf16.mxu0 0
        %2907 = vmatmul.mubr.bf16.gmra.mxu0 %v1898
        %v2908 = vpop.f32.mrf.mxu0
        %v2909 = vadd.f32 0.0, %v2908
        %v2910 = vpop.f32.mrf.mxu0
        %v2911 = vadd.f32 0.0, %v2910
        %v2912 = vpop.f32.mrf.mxu0
        %v2913 = vadd.f32 0.0, %v2912
        %v2914 = vpop.f32.mrf.mxu0
        %v2915 = vadd.f32 0.0, %v2914
        %2916 = vmatprep.mubr.bf16.mxu0 0
        %2917 = vmatmul.mubr.bf16.gmra.mxu0 %v1899
        %v2918 = vpop.f32.mrf.mxu0
        %v2919 = vadd.f32 0.0, %v2918
        %v2920 = vpop.f32.mrf.mxu0
        %v2921 = vadd.f32 0.0, %v2920
        %v2922 = vpop.f32.mrf.mxu0
        %v2923 = vadd.f32 0.0, %v2922
        %v2924 = vpop.f32.mrf.mxu0
        %v2925 = vadd.f32 0.0, %v2924
        %2926 = vmatprep.mubr.bf16.mxu0 0
        %2927 = vmatmul.mubr.bf16.gmra.mxu0 %v1900
        %v2928 = vpop.f32.mrf.mxu0
        %v2929 = vadd.f32 0.0, %v2928
        %v2930 = vpop.f32.mrf.mxu0
        %v2931 = vadd.f32 0.0, %v2930
        %v2932 = vpop.f32.mrf.mxu0
        %v2933 = vadd.f32 0.0, %v2932
        %v2934 = vpop.f32.mrf.mxu0
        %v2935 = vadd.f32 0.0, %v2934
        %2936 = vmatprep.mubr.bf16.mxu0 0
        %2937 = vmatmul.mubr.bf16.gmra.mxu0 %v1901
        %v2938 = vpop.f32.mrf.mxu0
        %v2939 = vadd.f32 0.0, %v2938
        %v2940 = vpop.f32.mrf.mxu0
        %v2941 = vadd.f32 0.0, %v2940
        %v2942 = vpop.f32.mrf.mxu0
        %v2943 = vadd.f32 0.0, %v2942
        %v2944 = vpop.f32.mrf.mxu0
        %v2945 = vadd.f32 0.0, %v2944
        %2946 = vmatprep.mubr.bf16.mxu0 0
        %2947 = vmatmul.mubr.bf16.gmra.mxu0 %v1902
        %v2948 = vpop.f32.mrf.mxu0
        %v2949 = vadd.f32 0.0, %v2948
        %v2950 = vpop.f32.mrf.mxu0
        %v2951 = vadd.f32 0.0, %v2950
        %v2952 = vpop.f32.mrf.mxu0
        %v2953 = vadd.f32 0.0, %v2952
        %v2954 = vpop.f32.mrf.mxu0
        %v2955 = vadd.f32 0.0, %v2954
        %2956 = vmatprep.mubr.bf16.mxu0 0
        %2957 = vmatmul.mubr.bf16.gmra.mxu0 %v1903
        %v2958 = vpop.f32.mrf.mxu0
        %v2959 = vadd.f32 0.0, %v2958
        %v2960 = vpop.f32.mrf.mxu0
        %v2961 = vadd.f32 0.0, %v2960
        %v2962 = vpop.f32.mrf.mxu0
        %v2963 = vadd.f32 0.0, %v2962
        %v2964 = vpop.f32.mrf.mxu0
        %v2965 = vadd.f32 0.0, %v2964
        %2966 = vmatprep.mubr.bf16.mxu0 0
        %2967 = vmatmul.mubr.bf16.gmra.mxu0 %v1904
        %v2968 = vpop.f32.mrf.mxu0
        %v2969 = vadd.f32 0.0, %v2968
        %v2970 = vpop.f32.mrf.mxu0
        %v2971 = vadd.f32 0.0, %v2970
        %v2972 = vpop.f32.mrf.mxu0
        %v2973 = vadd.f32 0.0, %v2972
        %v2974 = vpop.f32.mrf.mxu0
        %v2975 = vadd.f32 0.0, %v2974
        %2976 = vmatprep.mubr.bf16.mxu0 0
        %2977 = vmatmul.mubr.bf16.gmra.mxu0 %v1905
        %v2978 = vpop.f32.mrf.mxu0
        %v2979 = vadd.f32 0.0, %v2978
        %v2980 = vpop.f32.mrf.mxu0
        %v2981 = vadd.f32 0.0, %v2980
        %v2982 = vpop.f32.mrf.mxu0
        %v2983 = vadd.f32 0.0, %v2982
        %v2984 = vpop.f32.mrf.mxu0
        %v2985 = vadd.f32 0.0, %v2984
        %2986 = vmatprep.mubr.bf16.mxu0 0
        %2987 = vmatmul.mubr.bf16.gmra.mxu0 %v1906
        %v2988 = vpop.f32.mrf.mxu0
        %v2989 = vadd.f32 0.0, %v2988
        %v2990 = vpop.f32.mrf.mxu0
        %v2991 = vadd.f32 0.0, %v2990
        %v2992 = vpop.f32.mrf.mxu0
        %v2993 = vadd.f32 0.0, %v2992
        %v2994 = vpop.f32.mrf.mxu0
        %v2995 = vadd.f32 0.0, %v2994
        %2996 = vmatprep.mubr.bf16.mxu0 0
        %2997 = vmatmul.mubr.bf16.gmra.mxu0 %v1907
        %v2998 = vpop.f32.mrf.mxu0
        %v2999 = vadd.f32 0.0, %v2998
        %v3000 = vpop.f32.mrf.mxu0
        %v3001 = vadd.f32 0.0, %v3000
        %v3002 = vpop.f32.mrf.mxu0
        %v3003 = vadd.f32 0.0, %v3002
        %v3004 = vpop.f32.mrf.mxu0
        %v3005 = vadd.f32 0.0, %v3004
        %3006 = vmatprep.mubr.bf16.mxu0 0
        %3007 = vmatmul.mubr.bf16.gmra.mxu0 %v1908
        %v3008 = vpop.f32.mrf.mxu0
        %v3009 = vadd.f32 0.0, %v3008
        %v3010 = vpop.f32.mrf.mxu0
        %v3011 = vadd.f32 0.0, %v3010
        %v3012 = vpop.f32.mrf.mxu0
        %v3013 = vadd.f32 0.0, %v3012
        %v3014 = vpop.f32.mrf.mxu0
        %v3015 = vadd.f32 0.0, %v3014
        %3016 = vdwg.mxu0
        %v3017 = vadd.f32 %v2280, %v2284
        %v3018 = vadd.f32 %v3017, %v2290
        %v3019 = vadd.f32 %v3018, %v2294
        %v3020 = vadd.f32 %v3019, %v2300
        %v3021 = vadd.f32 %v3020, %v2304
        %v3022 = vadd.f32 %v3021, %v2310
        %v3023 = vadd.f32 %v3022, %v2314
        %v3024 = vadd.f32 %v3023, %v2320
        %v3025 = vadd.f32 %v3024, %v2324
        %v3026 = vadd.f32 %v3025, %v2330
        %v3027 = vadd.f32 %v3026, %v2334
        %v3028 = vadd.f32 %v3027, %v2340
        %v3029 = vadd.f32 %v3028, %v2344
        %v3030 = vadd.f32 %v3029, %v2350
        %v3031 = vadd.f32 %v3030, %v2354
        %v3032 = vadd.f32 %v3031, %v2360
        %v3033 = vadd.f32 %v3032, %v2364
        %v3034 = vadd.f32 %v3033, %v2370
        %v3035 = vadd.f32 %v3034, %v2374
        %v3036 = vadd.f32 %v3035, %v2380
        %v3037 = vadd.f32 %v3036, %v2384
        %v3038 = vadd.f32 %v3037, %v2390
        %v3039 = vadd.f32 %v3038, %v2394
        %v3040 = vadd.f32 %v3039, %v2400
        %v3041 = vadd.f32 %v3040, %v2404
        %v3042 = vadd.f32 %v3041, %v2410
        %v3043 = vadd.f32 %v3042, %v2414
        %v3044 = vadd.f32 %v3043, %v2420
        %v3045 = vadd.f32 %v3044, %v2424
        %v3046 = vadd.f32 %v3045, %v2430
        %v3047 = vadd.f32 %v3046, %v2434
        %v3048 = vrot.slane %v3047, 4
        %v3049 = vadd.f32 %v3047, %v3048
        %v3050 = vrot.slane %v3049, 2
        %v3051 = vadd.f32 %v3049, %v3050
        %v3052 = vrot.slane %v3051, 1
        %v3053 = vadd.f32 %v3051, %v3052
        %v3054 = vadd.f32 %v2282, %v2286
        %v3055 = vadd.f32 %v3054, %v2292
        %v3056 = vadd.f32 %v3055, %v2296
        %v3057 = vadd.f32 %v3056, %v2302
        %v3058 = vadd.f32 %v3057, %v2306
        %v3059 = vadd.f32 %v3058, %v2312
        %v3060 = vadd.f32 %v3059, %v2316
        %v3061 = vadd.f32 %v3060, %v2322
        %v3062 = vadd.f32 %v3061, %v2326
        %v3063 = vadd.f32 %v3062, %v2332
        %v3064 = vadd.f32 %v3063, %v2336
        %v3065 = vadd.f32 %v3064, %v2342
        %v3066 = vadd.f32 %v3065, %v2346
        %v3067 = vadd.f32 %v3066, %v2352
        %v3068 = vadd.f32 %v3067, %v2356
        %v3069 = vadd.f32 %v3068, %v2362
        %v3070 = vadd.f32 %v3069, %v2366
        %v3071 = vadd.f32 %v3070, %v2372
        %v3072 = vadd.f32 %v3071, %v2376
        %v3073 = vadd.f32 %v3072, %v2382
        %v3074 = vadd.f32 %v3073, %v2386
        %v3075 = vadd.f32 %v3074, %v2392
        %v3076 = vadd.f32 %v3075, %v2396
        %v3077 = vadd.f32 %v3076, %v2402
        %v3078 = vadd.f32 %v3077, %v2406
        %v3079 = vadd.f32 %v3078, %v2412
        %v3080 = vadd.f32 %v3079, %v2416
        %v3081 = vadd.f32 %v3080, %v2422
        %v3082 = vadd.f32 %v3081, %v2426
        %v3083 = vadd.f32 %v3082, %v2432
        %v3084 = vadd.f32 %v3083, %v2436
        %v3085 = vrot.slane %v3084, 4
        %v3086 = vadd.f32 %v3084, %v3085
        %v3087 = vrot.slane %v3086, 2
        %v3088 = vadd.f32 %v3086, %v3087
        %v3089 = vrot.slane %v3088, 1
        %v3090 = vadd.f32 %v3088, %v3089
        %v3091 = vadd.f32 %v2473, %v2477
        %v3092 = vadd.f32 %v3091, %v2483
        %v3093 = vadd.f32 %v3092, %v2487
        %v3094 = vadd.f32 %v3093, %v2493
        %v3095 = vadd.f32 %v3094, %v2497
        %v3096 = vadd.f32 %v3095, %v2503
        %v3097 = vadd.f32 %v3096, %v2507
        %v3098 = vadd.f32 %v3097, %v2513
        %v3099 = vadd.f32 %v3098, %v2517
        %v3100 = vadd.f32 %v3099, %v2523
        %v3101 = vadd.f32 %v3100, %v2527
        %v3102 = vadd.f32 %v3101, %v2533
        %v3103 = vadd.f32 %v3102, %v2537
        %v3104 = vadd.f32 %v3103, %v2543
        %v3105 = vadd.f32 %v3104, %v2547
        %v3106 = vadd.f32 %v3105, %v2553
        %v3107 = vadd.f32 %v3106, %v2557
        %v3108 = vadd.f32 %v3107, %v2563
        %v3109 = vadd.f32 %v3108, %v2567
        %v3110 = vadd.f32 %v3109, %v2573
        %v3111 = vadd.f32 %v3110, %v2577
        %v3112 = vadd.f32 %v3111, %v2583
        %v3113 = vadd.f32 %v3112, %v2587
        %v3114 = vadd.f32 %v3113, %v2593
        %v3115 = vadd.f32 %v3114, %v2597
        %v3116 = vadd.f32 %v3115, %v2603
        %v3117 = vadd.f32 %v3116, %v2607
        %v3118 = vadd.f32 %v3117, %v2613
        %v3119 = vadd.f32 %v3118, %v2617
        %v3120 = vadd.f32 %v3119, %v2623
        %v3121 = vadd.f32 %v3120, %v2627
        %v3122 = vrot.slane %v3121, 4
        %v3123 = vadd.f32 %v3121, %v3122
        %v3124 = vrot.slane %v3123, 2
        %v3125 = vadd.f32 %v3123, %v3124
        %v3126 = vrot.slane %v3125, 1
        %v3127 = vadd.f32 %v3125, %v3126
        %v3128 = vadd.f32 %v2475, %v2479
        %v3129 = vadd.f32 %v3128, %v2485
        %v3130 = vadd.f32 %v3129, %v2489
        %v3131 = vadd.f32 %v3130, %v2495
        %v3132 = vadd.f32 %v3131, %v2499
        %v3133 = vadd.f32 %v3132, %v2505
        %v3134 = vadd.f32 %v3133, %v2509
        %v3135 = vadd.f32 %v3134, %v2515
        %v3136 = vadd.f32 %v3135, %v2519
        %v3137 = vadd.f32 %v3136, %v2525
        %v3138 = vadd.f32 %v3137, %v2529
        %v3139 = vadd.f32 %v3138, %v2535
        %v3140 = vadd.f32 %v3139, %v2539
        %v3141 = vadd.f32 %v3140, %v2545
        %v3142 = vadd.f32 %v3141, %v2549
        %v3143 = vadd.f32 %v3142, %v2555
        %v3144 = vadd.f32 %v3143, %v2559
        %v3145 = vadd.f32 %v3144, %v2565
        %v3146 = vadd.f32 %v3145, %v2569
        %v3147 = vadd.f32 %v3146, %v2575
        %v3148 = vadd.f32 %v3147, %v2579
        %v3149 = vadd.f32 %v3148, %v2585
        %v3150 = vadd.f32 %v3149, %v2589
        %v3151 = vadd.f32 %v3150, %v2595
        %v3152 = vadd.f32 %v3151, %v2599
        %v3153 = vadd.f32 %v3152, %v2605
        %v3154 = vadd.f32 %v3153, %v2609
        %v3155 = vadd.f32 %v3154, %v2615
        %v3156 = vadd.f32 %v3155, %v2619
        %v3157 = vadd.f32 %v3156, %v2625
        %v3158 = vadd.f32 %v3157, %v2629
        %v3159 = vrot.slane %v3158, 4
        %v3160 = vadd.f32 %v3158, %v3159
        %v3161 = vrot.slane %v3160, 2
        %v3162 = vadd.f32 %v3160, %v3161
        %v3163 = vrot.slane %v3162, 1
        %v3164 = vadd.f32 %v3162, %v3163
        %v3165 = vadd.f32 %v2666, %v2670
        %v3166 = vadd.f32 %v3165, %v2676
        %v3167 = vadd.f32 %v3166, %v2680
        %v3168 = vadd.f32 %v3167, %v2686
        %v3169 = vadd.f32 %v3168, %v2690
        %v3170 = vadd.f32 %v3169, %v2696
        %v3171 = vadd.f32 %v3170, %v2700
        %v3172 = vadd.f32 %v3171, %v2706
        %v3173 = vadd.f32 %v3172, %v2710
        %v3174 = vadd.f32 %v3173, %v2716
        %v3175 = vadd.f32 %v3174, %v2720
        %v3176 = vadd.f32 %v3175, %v2726
        %v3177 = vadd.f32 %v3176, %v2730
        %v3178 = vadd.f32 %v3177, %v2736
        %v3179 = vadd.f32 %v3178, %v2740
        %v3180 = vadd.f32 %v3179, %v2746
        %v3181 = vadd.f32 %v3180, %v2750
        %v3182 = vadd.f32 %v3181, %v2756
        %v3183 = vadd.f32 %v3182, %v2760
        %v3184 = vadd.f32 %v3183, %v2766
        %v3185 = vadd.f32 %v3184, %v2770
        %v3186 = vadd.f32 %v3185, %v2776
        %v3187 = vadd.f32 %v3186, %v2780
        %v3188 = vadd.f32 %v3187, %v2786
        %v3189 = vadd.f32 %v3188, %v2790
        %v3190 = vadd.f32 %v3189, %v2796
        %v3191 = vadd.f32 %v3190, %v2800
        %v3192 = vadd.f32 %v3191, %v2806
        %v3193 = vadd.f32 %v3192, %v2810
        %v3194 = vadd.f32 %v3193, %v2816
        %v3195 = vadd.f32 %v3194, %v2820
        %v3196 = vrot.slane %v3195, 4
        %v3197 = vadd.f32 %v3195, %v3196
        %v3198 = vrot.slane %v3197, 2
        %v3199 = vadd.f32 %v3197, %v3198
        %v3200 = vrot.slane %v3199, 1
        %v3201 = vadd.f32 %v3199, %v3200
        %v3202 = vadd.f32 %v2668, %v2672
        %v3203 = vadd.f32 %v3202, %v2678
        %v3204 = vadd.f32 %v3203, %v2682
        %v3205 = vadd.f32 %v3204, %v2688
        %v3206 = vadd.f32 %v3205, %v2692
        %v3207 = vadd.f32 %v3206, %v2698
        %v3208 = vadd.f32 %v3207, %v2702
        %v3209 = vadd.f32 %v3208, %v2708
        %v3210 = vadd.f32 %v3209, %v2712
        %v3211 = vadd.f32 %v3210, %v2718
        %v3212 = vadd.f32 %v3211, %v2722
        %v3213 = vadd.f32 %v3212, %v2728
        %v3214 = vadd.f32 %v3213, %v2732
        %v3215 = vadd.f32 %v3214, %v2738
        %v3216 = vadd.f32 %v3215, %v2742
        %v3217 = vadd.f32 %v3216, %v2748
        %v3218 = vadd.f32 %v3217, %v2752
        %v3219 = vadd.f32 %v3218, %v2758
        %v3220 = vadd.f32 %v3219, %v2762
        %v3221 = vadd.f32 %v3220, %v2768
        %v3222 = vadd.f32 %v3221, %v2772
        %v3223 = vadd.f32 %v3222, %v2778
        %v3224 = vadd.f32 %v3223, %v2782
        %v3225 = vadd.f32 %v3224, %v2788
        %v3226 = vadd.f32 %v3225, %v2792
        %v3227 = vadd.f32 %v3226, %v2798
        %v3228 = vadd.f32 %v3227, %v2802
        %v3229 = vadd.f32 %v3228, %v2808
        %v3230 = vadd.f32 %v3229, %v2812
        %v3231 = vadd.f32 %v3230, %v2818
        %v3232 = vadd.f32 %v3231, %v2822
        %v3233 = vrot.slane %v3232, 4
        %v3234 = vadd.f32 %v3232, %v3233
        %v3235 = vrot.slane %v3234, 2
        %v3236 = vadd.f32 %v3234, %v3235
        %v3237 = vrot.slane %v3236, 1
        %v3238 = vadd.f32 %v3236, %v3237
        %v3239 = vadd.f32 %v2859, %v2863
        %v3240 = vadd.f32 %v3239, %v2869
        %v3241 = vadd.f32 %v3240, %v2873
        %v3242 = vadd.f32 %v3241, %v2879
        %v3243 = vadd.f32 %v3242, %v2883
        %v3244 = vadd.f32 %v3243, %v2889
        %v3245 = vadd.f32 %v3244, %v2893
        %v3246 = vadd.f32 %v3245, %v2899
        %v3247 = vadd.f32 %v3246, %v2903
        %v3248 = vadd.f32 %v3247, %v2909
        %v3249 = vadd.f32 %v3248, %v2913
        %v3250 = vadd.f32 %v3249, %v2919
        %v3251 = vadd.f32 %v3250, %v2923
        %v3252 = vadd.f32 %v3251, %v2929
        %v3253 = vadd.f32 %v3252, %v2933
        %v3254 = vadd.f32 %v3253, %v2939
        %v3255 = vadd.f32 %v3254, %v2943
        %v3256 = vadd.f32 %v3255, %v2949
        %v3257 = vadd.f32 %v3256, %v2953
        %v3258 = vadd.f32 %v3257, %v2959
        %v3259 = vadd.f32 %v3258, %v2963
        %v3260 = vadd.f32 %v3259, %v2969
        %v3261 = vadd.f32 %v3260, %v2973
        %v3262 = vadd.f32 %v3261, %v2979
        %v3263 = vadd.f32 %v3262, %v2983
        %v3264 = vadd.f32 %v3263, %v2989
        %v3265 = vadd.f32 %v3264, %v2993
        %v3266 = vadd.f32 %v3265, %v2999
        %v3267 = vadd.f32 %v3266, %v3003
        %v3268 = vadd.f32 %v3267, %v3009
        %v3269 = vadd.f32 %v3268, %v3013
        %v3270 = vrot.slane %v3269, 4
        %v3271 = vadd.f32 %v3269, %v3270
        %v3272 = vrot.slane %v3271, 2
        %v3273 = vadd.f32 %v3271, %v3272
        %v3274 = vrot.slane %v3273, 1
        %v3275 = vadd.f32 %v3273, %v3274
        %v3276 = vadd.f32 %v2861, %v2865
        %v3277 = vadd.f32 %v3276, %v2871
        %v3278 = vadd.f32 %v3277, %v2875
        %v3279 = vadd.f32 %v3278, %v2881
        %v3280 = vadd.f32 %v3279, %v2885
        %v3281 = vadd.f32 %v3280, %v2891
        %v3282 = vadd.f32 %v3281, %v2895
        %v3283 = vadd.f32 %v3282, %v2901
        %v3284 = vadd.f32 %v3283, %v2905
        %v3285 = vadd.f32 %v3284, %v2911
        %v3286 = vadd.f32 %v3285, %v2915
        %v3287 = vadd.f32 %v3286, %v2921
        %v3288 = vadd.f32 %v3287, %v2925
        %v3289 = vadd.f32 %v3288, %v2931
        %v3290 = vadd.f32 %v3289, %v2935
        %v3291 = vadd.f32 %v3290, %v2941
        %v3292 = vadd.f32 %v3291, %v2945
        %v3293 = vadd.f32 %v3292, %v2951
        %v3294 = vadd.f32 %v3293, %v2955
        %v3295 = vadd.f32 %v3294, %v2961
        %v3296 = vadd.f32 %v3295, %v2965
        %v3297 = vadd.f32 %v3296, %v2971
        %v3298 = vadd.f32 %v3297, %v2975
        %v3299 = vadd.f32 %v3298, %v2981
        %v3300 = vadd.f32 %v3299, %v2985
        %v3301 = vadd.f32 %v3300, %v2991
        %v3302 = vadd.f32 %v3301, %v2995
        %v3303 = vadd.f32 %v3302, %v3001
        %v3304 = vadd.f32 %v3303, %v3005
        %v3305 = vadd.f32 %v3304, %v3011
        %v3306 = vadd.f32 %v3305, %v3015
        %v3307 = vrot.slane %v3306, 4
        %v3308 = vadd.f32 %v3306, %v3307
        %v3309 = vrot.slane %v3308, 2
        %v3310 = vadd.f32 %v3308, %v3309
        %v3311 = vrot.slane %v3310, 1
        %v3312 = vadd.f32 %v3310, %v3311
        %v3313 = vadd.f32 %v3053, 0.0
        %v3314 = vadd.f32 %v3090, 0.0
        %v3315 = vadd.f32 %v3127, 0.0
        %v3316 = vadd.f32 %v3164, 0.0
        %v3317 = vadd.f32 %v3201, 0.0
        %v3318 = vadd.f32 %v3238, 0.0
        %v3319 = vadd.f32 %v3275, 0.0
        %v3320 = vadd.f32 %v3312, 0.0
        %v3321 = vmul.f32 %v2280, %v2280
        %v3322 = vmul.f32 %v2282, %v2282
        %v3323 = vmul.f32 %v2473, %v2473
        %v3324 = vmul.f32 %v2475, %v2475
        %v3325 = vmul.f32 %v2666, %v2666
        %v3326 = vmul.f32 %v2668, %v2668
        %v3327 = vmul.f32 %v2859, %v2859
        %v3328 = vmul.f32 %v2861, %v2861
        %v3329 = vmul.f32 %v2284, %v2284
        %v3330 = vmul.f32 %v2286, %v2286
        %v3331 = vmul.f32 %v2477, %v2477
        %v3332 = vmul.f32 %v2479, %v2479
        %v3333 = vmul.f32 %v2670, %v2670
        %v3334 = vmul.f32 %v2672, %v2672
        %v3335 = vmul.f32 %v2863, %v2863
        %v3336 = vmul.f32 %v2865, %v2865
        %v3337 = vmul.f32 %v2290, %v2290
        %v3338 = vmul.f32 %v2292, %v2292
        %v3339 = vmul.f32 %v2483, %v2483
        %v3340 = vmul.f32 %v2485, %v2485
        %v3341 = vmul.f32 %v2676, %v2676
        %v3342 = vmul.f32 %v2678, %v2678
        %v3343 = vmul.f32 %v2869, %v2869
        %v3344 = vmul.f32 %v2871, %v2871
        %v3345 = vmul.f32 %v2294, %v2294
        %v3346 = vmul.f32 %v2296, %v2296
        %v3347 = vmul.f32 %v2487, %v2487
        %v3348 = vmul.f32 %v2489, %v2489
        %v3349 = vmul.f32 %v2680, %v2680
        %v3350 = vmul.f32 %v2682, %v2682
        %v3351 = vmul.f32 %v2873, %v2873
        %v3352 = vmul.f32 %v2875, %v2875
        %v3353 = vmul.f32 %v2300, %v2300
        %v3354 = vmul.f32 %v2302, %v2302
        %v3355 = vmul.f32 %v2493, %v2493
        %v3356 = vmul.f32 %v2495, %v2495
        %v3357 = vmul.f32 %v2686, %v2686
        %v3358 = vmul.f32 %v2688, %v2688
        %v3359 = vmul.f32 %v2879, %v2879
        %v3360 = vmul.f32 %v2881, %v2881
        %v3361 = vmul.f32 %v2304, %v2304
        %v3362 = vmul.f32 %v2306, %v2306
        %v3363 = vmul.f32 %v2497, %v2497
        %v3364 = vmul.f32 %v2499, %v2499
        %v3365 = vmul.f32 %v2690, %v2690
        %v3366 = vmul.f32 %v2692, %v2692
        %v3367 = vmul.f32 %v2883, %v2883
        %v3368 = vmul.f32 %v2885, %v2885
        %v3369 = vmul.f32 %v2310, %v2310
        %v3370 = vmul.f32 %v2312, %v2312
        %v3371 = vmul.f32 %v2503, %v2503
        %v3372 = vmul.f32 %v2505, %v2505
        %v3373 = vmul.f32 %v2696, %v2696
        %v3374 = vmul.f32 %v2698, %v2698
        %v3375 = vmul.f32 %v2889, %v2889
        %v3376 = vmul.f32 %v2891, %v2891
        %v3377 = vmul.f32 %v2314, %v2314
        %v3378 = vmul.f32 %v2316, %v2316
        %v3379 = vmul.f32 %v2507, %v2507
        %v3380 = vmul.f32 %v2509, %v2509
        %v3381 = vmul.f32 %v2700, %v2700
        %v3382 = vmul.f32 %v2702, %v2702
        %v3383 = vmul.f32 %v2893, %v2893
        %v3384 = vmul.f32 %v2895, %v2895
        %v3385 = vmul.f32 %v2320, %v2320
        %v3386 = vmul.f32 %v2322, %v2322
        %v3387 = vmul.f32 %v2513, %v2513
        %v3388 = vmul.f32 %v2515, %v2515
        %v3389 = vmul.f32 %v2706, %v2706
        %v3390 = vmul.f32 %v2708, %v2708
        %v3391 = vmul.f32 %v2899, %v2899
        %v3392 = vmul.f32 %v2901, %v2901
        %v3393 = vmul.f32 %v2324, %v2324
        %v3394 = vmul.f32 %v2326, %v2326
        %v3395 = vmul.f32 %v2517, %v2517
        %v3396 = vmul.f32 %v2519, %v2519
        %v3397 = vmul.f32 %v2710, %v2710
        %v3398 = vmul.f32 %v2712, %v2712
        %v3399 = vmul.f32 %v2903, %v2903
        %v3400 = vmul.f32 %v2905, %v2905
        %v3401 = vmul.f32 %v2330, %v2330
        %v3402 = vmul.f32 %v2332, %v2332
        %v3403 = vmul.f32 %v2523, %v2523
        %v3404 = vmul.f32 %v2525, %v2525
        %v3405 = vmul.f32 %v2716, %v2716
        %v3406 = vmul.f32 %v2718, %v2718
        %v3407 = vmul.f32 %v2909, %v2909
        %v3408 = vmul.f32 %v2911, %v2911
        %v3409 = vmul.f32 %v2334, %v2334
        %v3410 = vmul.f32 %v2336, %v2336
        %v3411 = vmul.f32 %v2527, %v2527
        %v3412 = vmul.f32 %v2529, %v2529
        %v3413 = vmul.f32 %v2720, %v2720
        %v3414 = vmul.f32 %v2722, %v2722
        %v3415 = vmul.f32 %v2913, %v2913
        %v3416 = vmul.f32 %v2915, %v2915
        %v3417 = vmul.f32 %v2340, %v2340
        %v3418 = vmul.f32 %v2342, %v2342
        %v3419 = vmul.f32 %v2533, %v2533
        %v3420 = vmul.f32 %v2535, %v2535
        %v3421 = vmul.f32 %v2726, %v2726
        %v3422 = vmul.f32 %v2728, %v2728
        %v3423 = vmul.f32 %v2919, %v2919
        %v3424 = vmul.f32 %v2921, %v2921
        %v3425 = vmul.f32 %v2344, %v2344
        %v3426 = vmul.f32 %v2346, %v2346
        %v3427 = vmul.f32 %v2537, %v2537
        %v3428 = vmul.f32 %v2539, %v2539
        %v3429 = vmul.f32 %v2730, %v2730
        %v3430 = vmul.f32 %v2732, %v2732
        %v3431 = vmul.f32 %v2923, %v2923
        %v3432 = vmul.f32 %v2925, %v2925
        %v3433 = vmul.f32 %v2350, %v2350
        %v3434 = vmul.f32 %v2352, %v2352
        %v3435 = vmul.f32 %v2543, %v2543
        %v3436 = vmul.f32 %v2545, %v2545
        %v3437 = vmul.f32 %v2736, %v2736
        %v3438 = vmul.f32 %v2738, %v2738
        %v3439 = vmul.f32 %v2929, %v2929
        %v3440 = vmul.f32 %v2931, %v2931
        %v3441 = vmul.f32 %v2354, %v2354
        %v3442 = vmul.f32 %v2356, %v2356
        %v3443 = vmul.f32 %v2547, %v2547
        %v3444 = vmul.f32 %v2549, %v2549
        %v3445 = vmul.f32 %v2740, %v2740
        %v3446 = vmul.f32 %v2742, %v2742
        %v3447 = vmul.f32 %v2933, %v2933
        %v3448 = vmul.f32 %v2935, %v2935
        %v3449 = vmul.f32 %v2360, %v2360
        %v3450 = vmul.f32 %v2362, %v2362
        %v3451 = vmul.f32 %v2553, %v2553
        %v3452 = vmul.f32 %v2555, %v2555
        %v3453 = vmul.f32 %v2746, %v2746
        %v3454 = vmul.f32 %v2748, %v2748
        %v3455 = vmul.f32 %v2939, %v2939
        %v3456 = vmul.f32 %v2941, %v2941
        %v3457 = vmul.f32 %v2364, %v2364
        %v3458 = vmul.f32 %v2366, %v2366
        %v3459 = vmul.f32 %v2557, %v2557
        %v3460 = vmul.f32 %v2559, %v2559
        %v3461 = vmul.f32 %v2750, %v2750
        %v3462 = vmul.f32 %v2752, %v2752
        %v3463 = vmul.f32 %v2943, %v2943
        %v3464 = vmul.f32 %v2945, %v2945
        %v3465 = vmul.f32 %v2370, %v2370
        %v3466 = vmul.f32 %v2372, %v2372
        %v3467 = vmul.f32 %v2563, %v2563
        %v3468 = vmul.f32 %v2565, %v2565
        %v3469 = vmul.f32 %v2756, %v2756
        %v3470 = vmul.f32 %v2758, %v2758
        %v3471 = vmul.f32 %v2949, %v2949
        %v3472 = vmul.f32 %v2951, %v2951
        %v3473 = vmul.f32 %v2374, %v2374
        %v3474 = vmul.f32 %v2376, %v2376
        %v3475 = vmul.f32 %v2567, %v2567
        %v3476 = vmul.f32 %v2569, %v2569
        %v3477 = vmul.f32 %v2760, %v2760
        %v3478 = vmul.f32 %v2762, %v2762
        %v3479 = vmul.f32 %v2953, %v2953
        %v3480 = vmul.f32 %v2955, %v2955
        %v3481 = vmul.f32 %v2380, %v2380
        %v3482 = vmul.f32 %v2382, %v2382
        %v3483 = vmul.f32 %v2573, %v2573
        %v3484 = vmul.f32 %v2575, %v2575
        %v3485 = vmul.f32 %v2766, %v2766
        %v3486 = vmul.f32 %v2768, %v2768
        %v3487 = vmul.f32 %v2959, %v2959
        %v3488 = vmul.f32 %v2961, %v2961
        %v3489 = vmul.f32 %v2384, %v2384
        %v3490 = vmul.f32 %v2386, %v2386
        %v3491 = vmul.f32 %v2577, %v2577
        %v3492 = vmul.f32 %v2579, %v2579
        %v3493 = vmul.f32 %v2770, %v2770
        %v3494 = vmul.f32 %v2772, %v2772
        %v3495 = vmul.f32 %v2963, %v2963
        %v3496 = vmul.f32 %v2965, %v2965
        %v3497 = vmul.f32 %v2390, %v2390
        %v3498 = vmul.f32 %v2392, %v2392
        %v3499 = vmul.f32 %v2583, %v2583
        %v3500 = vmul.f32 %v2585, %v2585
        %v3501 = vmul.f32 %v2776, %v2776
        %v3502 = vmul.f32 %v2778, %v2778
        %v3503 = vmul.f32 %v2969, %v2969
        %v3504 = vmul.f32 %v2971, %v2971
        %v3505 = vmul.f32 %v2394, %v2394
        %v3506 = vmul.f32 %v2396, %v2396
        %v3507 = vmul.f32 %v2587, %v2587
        %v3508 = vmul.f32 %v2589, %v2589
        %v3509 = vmul.f32 %v2780, %v2780
        %v3510 = vmul.f32 %v2782, %v2782
        %v3511 = vmul.f32 %v2973, %v2973
        %v3512 = vmul.f32 %v2975, %v2975
        %v3513 = vmul.f32 %v2400, %v2400
        %v3514 = vmul.f32 %v2402, %v2402
        %v3515 = vmul.f32 %v2593, %v2593
        %v3516 = vmul.f32 %v2595, %v2595
        %v3517 = vmul.f32 %v2786, %v2786
        %v3518 = vmul.f32 %v2788, %v2788
        %v3519 = vmul.f32 %v2979, %v2979
        %v3520 = vmul.f32 %v2981, %v2981
        %v3521 = vmul.f32 %v2404, %v2404
        %v3522 = vmul.f32 %v2406, %v2406
        %v3523 = vmul.f32 %v2597, %v2597
        %v3524 = vmul.f32 %v2599, %v2599
        %v3525 = vmul.f32 %v2790, %v2790
        %v3526 = vmul.f32 %v2792, %v2792
        %v3527 = vmul.f32 %v2983, %v2983
        %v3528 = vmul.f32 %v2985, %v2985
        %v3529 = vmul.f32 %v2410, %v2410
        %v3530 = vmul.f32 %v2412, %v2412
        %v3531 = vmul.f32 %v2603, %v2603
        %v3532 = vmul.f32 %v2605, %v2605
        %v3533 = vmul.f32 %v2796, %v2796
        %v3534 = vmul.f32 %v2798, %v2798
        %v3535 = vmul.f32 %v2989, %v2989
        %v3536 = vmul.f32 %v2991, %v2991
        %v3537 = vmul.f32 %v2414, %v2414
        %v3538 = vmul.f32 %v2416, %v2416
        %v3539 = vmul.f32 %v2607, %v2607
        %v3540 = vmul.f32 %v2609, %v2609
        %v3541 = vmul.f32 %v2800, %v2800
        %v3542 = vmul.f32 %v2802, %v2802
        %v3543 = vmul.f32 %v2993, %v2993
        %v3544 = vmul.f32 %v2995, %v2995
        %v3545 = vmul.f32 %v2420, %v2420
        %v3546 = vmul.f32 %v2422, %v2422
        %v3547 = vmul.f32 %v2613, %v2613
        %v3548 = vmul.f32 %v2615, %v2615
        %v3549 = vmul.f32 %v2806, %v2806
        %v3550 = vmul.f32 %v2808, %v2808
        %v3551 = vmul.f32 %v2999, %v2999
        %v3552 = vmul.f32 %v3001, %v3001
        %v3553 = vmul.f32 %v2424, %v2424
        %v3554 = vmul.f32 %v2426, %v2426
        %v3555 = vmul.f32 %v2617, %v2617
        %v3556 = vmul.f32 %v2619, %v2619
        %v3557 = vmul.f32 %v2810, %v2810
        %v3558 = vmul.f32 %v2812, %v2812
        %v3559 = vmul.f32 %v3003, %v3003
        %v3560 = vmul.f32 %v3005, %v3005
        %v3561 = vmul.f32 %v2430, %v2430
        %v3562 = vmul.f32 %v2432, %v2432
        %v3563 = vmul.f32 %v2623, %v2623
        %v3564 = vmul.f32 %v2625, %v2625
        %v3565 = vmul.f32 %v2816, %v2816
        %v3566 = vmul.f32 %v2818, %v2818
        %v3567 = vmul.f32 %v3009, %v3009
        %v3568 = vmul.f32 %v3011, %v3011
        %v3569 = vmul.f32 %v2434, %v2434
        %v3570 = vmul.f32 %v2436, %v2436
        %v3571 = vmul.f32 %v2627, %v2627
        %v3572 = vmul.f32 %v2629, %v2629
        %v3573 = vmul.f32 %v2820, %v2820
        %v3574 = vmul.f32 %v2822, %v2822
        %v3575 = vmul.f32 %v3013, %v3013
        %v3576 = vmul.f32 %v3015, %v3015
        %v3577 = vadd.f32 %v3321, %v3329
        %v3578 = vadd.f32 %v3577, %v3337
        %v3579 = vadd.f32 %v3578, %v3345
        %v3580 = vadd.f32 %v3579, %v3353
        %v3581 = vadd.f32 %v3580, %v3361
        %v3582 = vadd.f32 %v3581, %v3369
        %v3583 = vadd.f32 %v3582, %v3377
        %v3584 = vadd.f32 %v3583, %v3385
        %v3585 = vadd.f32 %v3584, %v3393
        %v3586 = vadd.f32 %v3585, %v3401
        %v3587 = vadd.f32 %v3586, %v3409
        %v3588 = vadd.f32 %v3587, %v3417
        %v3589 = vadd.f32 %v3588, %v3425
        %v3590 = vadd.f32 %v3589, %v3433
        %v3591 = vadd.f32 %v3590, %v3441
        %v3592 = vadd.f32 %v3591, %v3449
        %v3593 = vadd.f32 %v3592, %v3457
        %v3594 = vadd.f32 %v3593, %v3465
        %v3595 = vadd.f32 %v3594, %v3473
        %v3596 = vadd.f32 %v3595, %v3481
        %v3597 = vadd.f32 %v3596, %v3489
        %v3598 = vadd.f32 %v3597, %v3497
        %v3599 = vadd.f32 %v3598, %v3505
        %v3600 = vadd.f32 %v3599, %v3513
        %v3601 = vadd.f32 %v3600, %v3521
        %v3602 = vadd.f32 %v3601, %v3529
        %v3603 = vadd.f32 %v3602, %v3537
        %v3604 = vadd.f32 %v3603, %v3545
        %v3605 = vadd.f32 %v3604, %v3553
        %v3606 = vadd.f32 %v3605, %v3561
        %v3607 = vadd.f32 %v3606, %v3569
        %v3608 = vrot.slane %v3607, 4
        %v3609 = vadd.f32 %v3607, %v3608
        %v3610 = vrot.slane %v3609, 2
        %v3611 = vadd.f32 %v3609, %v3610
        %v3612 = vrot.slane %v3611, 1
        %v3613 = vadd.f32 %v3611, %v3612
        %v3614 = vadd.f32 %v3322, %v3330
        %v3615 = vadd.f32 %v3614, %v3338
        %v3616 = vadd.f32 %v3615, %v3346
        %v3617 = vadd.f32 %v3616, %v3354
        %v3618 = vadd.f32 %v3617, %v3362
        %v3619 = vadd.f32 %v3618, %v3370
        %v3620 = vadd.f32 %v3619, %v3378
        %v3621 = vadd.f32 %v3620, %v3386
        %v3622 = vadd.f32 %v3621, %v3394
        %v3623 = vadd.f32 %v3622, %v3402
        %v3624 = vadd.f32 %v3623, %v3410
        %v3625 = vadd.f32 %v3624, %v3418
        %v3626 = vadd.f32 %v3625, %v3426
        %v3627 = vadd.f32 %v3626, %v3434
        %v3628 = vadd.f32 %v3627, %v3442
        %v3629 = vadd.f32 %v3628, %v3450
        %v3630 = vadd.f32 %v3629, %v3458
        %v3631 = vadd.f32 %v3630, %v3466
        %v3632 = vadd.f32 %v3631, %v3474
        %v3633 = vadd.f32 %v3632, %v3482
        %v3634 = vadd.f32 %v3633, %v3490
        %v3635 = vadd.f32 %v3634, %v3498
        %v3636 = vadd.f32 %v3635, %v3506
        %v3637 = vadd.f32 %v3636, %v3514
        %v3638 = vadd.f32 %v3637, %v3522
        %v3639 = vadd.f32 %v3638, %v3530
        %v3640 = vadd.f32 %v3639, %v3538
        %v3641 = vadd.f32 %v3640, %v3546
        %v3642 = vadd.f32 %v3641, %v3554
        %v3643 = vadd.f32 %v3642, %v3562
        %v3644 = vadd.f32 %v3643, %v3570
        %v3645 = vrot.slane %v3644, 4
        %v3646 = vadd.f32 %v3644, %v3645
        %v3647 = vrot.slane %v3646, 2
        %v3648 = vadd.f32 %v3646, %v3647
        %v3649 = vrot.slane %v3648, 1
        %v3650 = vadd.f32 %v3648, %v3649
        %v3651 = vadd.f32 %v3323, %v3331
        %v3652 = vadd.f32 %v3651, %v3339
        %v3653 = vadd.f32 %v3652, %v3347
        %v3654 = vadd.f32 %v3653, %v3355
        %v3655 = vadd.f32 %v3654, %v3363
        %v3656 = vadd.f32 %v3655, %v3371
        %v3657 = vadd.f32 %v3656, %v3379
        %v3658 = vadd.f32 %v3657, %v3387
        %v3659 = vadd.f32 %v3658, %v3395
        %v3660 = vadd.f32 %v3659, %v3403
        %v3661 = vadd.f32 %v3660, %v3411
        %v3662 = vadd.f32 %v3661, %v3419
        %v3663 = vadd.f32 %v3662, %v3427
        %v3664 = vadd.f32 %v3663, %v3435
        %v3665 = vadd.f32 %v3664, %v3443
        %v3666 = vadd.f32 %v3665, %v3451
        %v3667 = vadd.f32 %v3666, %v3459
        %v3668 = vadd.f32 %v3667, %v3467
        %v3669 = vadd.f32 %v3668, %v3475
        %v3670 = vadd.f32 %v3669, %v3483
        %v3671 = vadd.f32 %v3670, %v3491
        %v3672 = vadd.f32 %v3671, %v3499
        %v3673 = vadd.f32 %v3672, %v3507
        %v3674 = vadd.f32 %v3673, %v3515
        %v3675 = vadd.f32 %v3674, %v3523
        %v3676 = vadd.f32 %v3675, %v3531
        %v3677 = vadd.f32 %v3676, %v3539
        %v3678 = vadd.f32 %v3677, %v3547
        %v3679 = vadd.f32 %v3678, %v3555
        %v3680 = vadd.f32 %v3679, %v3563
        %v3681 = vadd.f32 %v3680, %v3571
        %v3682 = vrot.slane %v3681, 4
        %v3683 = vadd.f32 %v3681, %v3682
        %v3684 = vrot.slane %v3683, 2
        %v3685 = vadd.f32 %v3683, %v3684
        %v3686 = vrot.slane %v3685, 1
        %v3687 = vadd.f32 %v3685, %v3686
        %v3688 = vadd.f32 %v3324, %v3332
        %v3689 = vadd.f32 %v3688, %v3340
        %v3690 = vadd.f32 %v3689, %v3348
        %v3691 = vadd.f32 %v3690, %v3356
        %v3692 = vadd.f32 %v3691, %v3364
        %v3693 = vadd.f32 %v3692, %v3372
        %v3694 = vadd.f32 %v3693, %v3380
        %v3695 = vadd.f32 %v3694, %v3388
        %v3696 = vadd.f32 %v3695, %v3396
        %v3697 = vadd.f32 %v3696, %v3404
        %v3698 = vadd.f32 %v3697, %v3412
        %v3699 = vadd.f32 %v3698, %v3420
        %v3700 = vadd.f32 %v3699, %v3428
        %v3701 = vadd.f32 %v3700, %v3436
        %v3702 = vadd.f32 %v3701, %v3444
        %v3703 = vadd.f32 %v3702, %v3452
        %v3704 = vadd.f32 %v3703, %v3460
        %v3705 = vadd.f32 %v3704, %v3468
        %v3706 = vadd.f32 %v3705, %v3476
        %v3707 = vadd.f32 %v3706, %v3484
        %v3708 = vadd.f32 %v3707, %v3492
        %v3709 = vadd.f32 %v3708, %v3500
        %v3710 = vadd.f32 %v3709, %v3508
        %v3711 = vadd.f32 %v3710, %v3516
        %v3712 = vadd.f32 %v3711, %v3524
        %v3713 = vadd.f32 %v3712, %v3532
        %v3714 = vadd.f32 %v3713, %v3540
        %v3715 = vadd.f32 %v3714, %v3548
        %v3716 = vadd.f32 %v3715, %v3556
        %v3717 = vadd.f32 %v3716, %v3564
        %v3718 = vadd.f32 %v3717, %v3572
        %v3719 = vrot.slane %v3718, 4
        %v3720 = vadd.f32 %v3718, %v3719
        %v3721 = vrot.slane %v3720, 2
        %v3722 = vadd.f32 %v3720, %v3721
        %v3723 = vrot.slane %v3722, 1
        %v3724 = vadd.f32 %v3722, %v3723
        %v3725 = vadd.f32 %v3325, %v3333
        %v3726 = vadd.f32 %v3725, %v3341
        %v3727 = vadd.f32 %v3726, %v3349
        %v3728 = vadd.f32 %v3727, %v3357
        %v3729 = vadd.f32 %v3728, %v3365
        %v3730 = vadd.f32 %v3729, %v3373
        %v3731 = vadd.f32 %v3730, %v3381
        %v3732 = vadd.f32 %v3731, %v3389
        %v3733 = vadd.f32 %v3732, %v3397
        %v3734 = vadd.f32 %v3733, %v3405
        %v3735 = vadd.f32 %v3734, %v3413
        %v3736 = vadd.f32 %v3735, %v3421
        %v3737 = vadd.f32 %v3736, %v3429
        %v3738 = vadd.f32 %v3737, %v3437
        %v3739 = vadd.f32 %v3738, %v3445
        %v3740 = vadd.f32 %v3739, %v3453
        %v3741 = vadd.f32 %v3740, %v3461
        %v3742 = vadd.f32 %v3741, %v3469
        %v3743 = vadd.f32 %v3742, %v3477
        %v3744 = vadd.f32 %v3743, %v3485
        %v3745 = vadd.f32 %v3744, %v3493
        %v3746 = vadd.f32 %v3745, %v3501
        %v3747 = vadd.f32 %v3746, %v3509
        %v3748 = vadd.f32 %v3747, %v3517
        %v3749 = vadd.f32 %v3748, %v3525
        %v3750 = vadd.f32 %v3749, %v3533
        %v3751 = vadd.f32 %v3750, %v3541
        %v3752 = vadd.f32 %v3751, %v3549
        %v3753 = vadd.f32 %v3752, %v3557
        %v3754 = vadd.f32 %v3753, %v3565
        %v3755 = vadd.f32 %v3754, %v3573
        %v3756 = vrot.slane %v3755, 4
        %v3757 = vadd.f32 %v3755, %v3756
        %v3758 = vrot.slane %v3757, 2
        %v3759 = vadd.f32 %v3757, %v3758
        %v3760 = vrot.slane %v3759, 1
        %v3761 = vadd.f32 %v3759, %v3760
        %v3762 = vadd.f32 %v3326, %v3334
        %v3763 = vadd.f32 %v3762, %v3342
        %v3764 = vadd.f32 %v3763, %v3350
        %v3765 = vadd.f32 %v3764, %v3358
        %v3766 = vadd.f32 %v3765, %v3366
        %v3767 = vadd.f32 %v3766, %v3374
        %v3768 = vadd.f32 %v3767, %v3382
        %v3769 = vadd.f32 %v3768, %v3390
        %v3770 = vadd.f32 %v3769, %v3398
        %v3771 = vadd.f32 %v3770, %v3406
        %v3772 = vadd.f32 %v3771, %v3414
        %v3773 = vadd.f32 %v3772, %v3422
        %v3774 = vadd.f32 %v3773, %v3430
        %v3775 = vadd.f32 %v3774, %v3438
        %v3776 = vadd.f32 %v3775, %v3446
        %v3777 = vadd.f32 %v3776, %v3454
        %v3778 = vadd.f32 %v3777, %v3462
        %v3779 = vadd.f32 %v3778, %v3470
        %v3780 = vadd.f32 %v3779, %v3478
        %v3781 = vadd.f32 %v3780, %v3486
        %v3782 = vadd.f32 %v3781, %v3494
        %v3783 = vadd.f32 %v3782, %v3502
        %v3784 = vadd.f32 %v3783, %v3510
        %v3785 = vadd.f32 %v3784, %v3518
        %v3786 = vadd.f32 %v3785, %v3526
        %v3787 = vadd.f32 %v3786, %v3534
        %v3788 = vadd.f32 %v3787, %v3542
        %v3789 = vadd.f32 %v3788, %v3550
        %v3790 = vadd.f32 %v3789, %v3558
        %v3791 = vadd.f32 %v3790, %v3566
        %v3792 = vadd.f32 %v3791, %v3574
        %v3793 = vrot.slane %v3792, 4
        %v3794 = vadd.f32 %v3792, %v3793
        %v3795 = vrot.slane %v3794, 2
        %v3796 = vadd.f32 %v3794, %v3795
        %v3797 = vrot.slane %v3796, 1
        %v3798 = vadd.f32 %v3796, %v3797
        %v3799 = vadd.f32 %v3327, %v3335
        %v3800 = vadd.f32 %v3799, %v3343
        %v3801 = vadd.f32 %v3800, %v3351
        %v3802 = vadd.f32 %v3801, %v3359
        %v3803 = vadd.f32 %v3802, %v3367
        %v3804 = vadd.f32 %v3803, %v3375
        %v3805 = vadd.f32 %v3804, %v3383
        %v3806 = vadd.f32 %v3805, %v3391
        %v3807 = vadd.f32 %v3806, %v3399
        %v3808 = vadd.f32 %v3807, %v3407
        %v3809 = vadd.f32 %v3808, %v3415
        %v3810 = vadd.f32 %v3809, %v3423
        %v3811 = vadd.f32 %v3810, %v3431
        %v3812 = vadd.f32 %v3811, %v3439
        %v3813 = vadd.f32 %v3812, %v3447
        %v3814 = vadd.f32 %v3813, %v3455
        %v3815 = vadd.f32 %v3814, %v3463
        %v3816 = vadd.f32 %v3815, %v3471
        %v3817 = vadd.f32 %v3816, %v3479
        %v3818 = vadd.f32 %v3817, %v3487
        %v3819 = vadd.f32 %v3818, %v3495
        %v3820 = vadd.f32 %v3819, %v3503
        %v3821 = vadd.f32 %v3820, %v3511
        %v3822 = vadd.f32 %v3821, %v3519
        %v3823 = vadd.f32 %v3822, %v3527
        %v3824 = vadd.f32 %v3823, %v3535
        %v3825 = vadd.f32 %v3824, %v3543
        %v3826 = vadd.f32 %v3825, %v3551
        %v3827 = vadd.f32 %v3826, %v3559
        %v3828 = vadd.f32 %v3827, %v3567
        %v3829 = vadd.f32 %v3828, %v3575
        %v3830 = vrot.slane %v3829, 4
        %v3831 = vadd.f32 %v3829, %v3830
        %v3832 = vrot.slane %v3831, 2
        %v3833 = vadd.f32 %v3831, %v3832
        %v3834 = vrot.slane %v3833, 1
        %v3835 = vadd.f32 %v3833, %v3834
        %v3836 = vadd.f32 %v3328, %v3336
        %v3837 = vadd.f32 %v3836, %v3344
        %v3838 = vadd.f32 %v3837, %v3352
        %v3839 = vadd.f32 %v3838, %v3360
        %v3840 = vadd.f32 %v3839, %v3368
        %v3841 = vadd.f32 %v3840, %v3376
        %v3842 = vadd.f32 %v3841, %v3384
        %v3843 = vadd.f32 %v3842, %v3392
        %v3844 = vadd.f32 %v3843, %v3400
        %v3845 = vadd.f32 %v3844, %v3408
        %v3846 = vadd.f32 %v3845, %v3416
        %v3847 = vadd.f32 %v3846, %v3424
        %v3848 = vadd.f32 %v3847, %v3432
        %v3849 = vadd.f32 %v3848, %v3440
        %v3850 = vadd.f32 %v3849, %v3448
        %v3851 = vadd.f32 %v3850, %v3456
        %v3852 = vadd.f32 %v3851, %v3464
        %v3853 = vadd.f32 %v3852, %v3472
        %v3854 = vadd.f32 %v3853, %v3480
        %v3855 = vadd.f32 %v3854, %v3488
        %v3856 = vadd.f32 %v3855, %v3496
        %v3857 = vadd.f32 %v3856, %v3504
        %v3858 = vadd.f32 %v3857, %v3512
        %v3859 = vadd.f32 %v3858, %v3520
        %v3860 = vadd.f32 %v3859, %v3528
        %v3861 = vadd.f32 %v3860, %v3536
        %v3862 = vadd.f32 %v3861, %v3544
        %v3863 = vadd.f32 %v3862, %v3552
        %v3864 = vadd.f32 %v3863, %v3560
        %v3865 = vadd.f32 %v3864, %v3568
        %v3866 = vadd.f32 %v3865, %v3576
        %v3867 = vrot.slane %v3866, 4
        %v3868 = vadd.f32 %v3866, %v3867
        %v3869 = vrot.slane %v3868, 2
        %v3870 = vadd.f32 %v3868, %v3869
        %v3871 = vrot.slane %v3870, 1
        %v3872 = vadd.f32 %v3870, %v3871
        %v3873 = vadd.f32 %v3613, 0.0
        %v3874 = vadd.f32 %v3650, 0.0
        %v3875 = vadd.f32 %v3687, 0.0
        %v3876 = vadd.f32 %v3724, 0.0
        %v3877 = vadd.f32 %v3761, 0.0
        %v3878 = vadd.f32 %v3798, 0.0
        %v3879 = vadd.f32 %v3835, 0.0
        %v3880 = vadd.f32 %v3872, 0.0
        %v3881 = vmax.f32 %v2280, %v2284
        %v3882 = vmax.f32 %v3881, %v2290
        %v3883 = vmax.f32 %v3882, %v2294
        %v3884 = vmax.f32 %v3883, %v2300
        %v3885 = vmax.f32 %v3884, %v2304
        %v3886 = vmax.f32 %v3885, %v2310
        %v3887 = vmax.f32 %v3886, %v2314
        %v3888 = vmax.f32 %v3887, %v2320
        %v3889 = vmax.f32 %v3888, %v2324
        %v3890 = vmax.f32 %v3889, %v2330
        %v3891 = vmax.f32 %v3890, %v2334
        %v3892 = vmax.f32 %v3891, %v2340
        %v3893 = vmax.f32 %v3892, %v2344
        %v3894 = vmax.f32 %v3893, %v2350
        %v3895 = vmax.f32 %v3894, %v2354
        %v3896 = vmax.f32 %v3895, %v2360
        %v3897 = vmax.f32 %v3896, %v2364
        %v3898 = vmax.f32 %v3897, %v2370
        %v3899 = vmax.f32 %v3898, %v2374
        %v3900 = vmax.f32 %v3899, %v2380
        %v3901 = vmax.f32 %v3900, %v2384
        %v3902 = vmax.f32 %v3901, %v2390
        %v3903 = vmax.f32 %v3902, %v2394
        %v3904 = vmax.f32 %v3903, %v2400
        %v3905 = vmax.f32 %v3904, %v2404
        %v3906 = vmax.f32 %v3905, %v2410
        %v3907 = vmax.f32 %v3906, %v2414
        %v3908 = vmax.f32 %v3907, %v2420
        %v3909 = vmax.f32 %v3908, %v2424
        %v3910 = vmax.f32 %v3909, %v2430
        %v3911 = vmax.f32 %v3910, %v2434
        %v3912 = vrot.slane %v3911, 4
        %v3913 = vmax.f32 %v3911, %v3912
        %v3914 = vrot.slane %v3913, 2
        %v3915 = vmax.f32 %v3913, %v3914
        %v3916 = vrot.slane %v3915, 1
        %v3917 = vmax.f32 %v3915, %v3916
        %v3918 = vmax.f32 %v2282, %v2286
        %v3919 = vmax.f32 %v3918, %v2292
        %v3920 = vmax.f32 %v3919, %v2296
        %v3921 = vmax.f32 %v3920, %v2302
        %v3922 = vmax.f32 %v3921, %v2306
        %v3923 = vmax.f32 %v3922, %v2312
        %v3924 = vmax.f32 %v3923, %v2316
        %v3925 = vmax.f32 %v3924, %v2322
        %v3926 = vmax.f32 %v3925, %v2326
        %v3927 = vmax.f32 %v3926, %v2332
        %v3928 = vmax.f32 %v3927, %v2336
        %v3929 = vmax.f32 %v3928, %v2342
        %v3930 = vmax.f32 %v3929, %v2346
        %v3931 = vmax.f32 %v3930, %v2352
        %v3932 = vmax.f32 %v3931, %v2356
        %v3933 = vmax.f32 %v3932, %v2362
        %v3934 = vmax.f32 %v3933, %v2366
        %v3935 = vmax.f32 %v3934, %v2372
        %v3936 = vmax.f32 %v3935, %v2376
        %v3937 = vmax.f32 %v3936, %v2382
        %v3938 = vmax.f32 %v3937, %v2386
        %v3939 = vmax.f32 %v3938, %v2392
        %v3940 = vmax.f32 %v3939, %v2396
        %v3941 = vmax.f32 %v3940, %v2402
        %v3942 = vmax.f32 %v3941, %v2406
        %v3943 = vmax.f32 %v3942, %v2412
        %v3944 = vmax.f32 %v3943, %v2416
        %v3945 = vmax.f32 %v3944, %v2422
        %v3946 = vmax.f32 %v3945, %v2426
        %v3947 = vmax.f32 %v3946, %v2432
        %v3948 = vmax.f32 %v3947, %v2436
        %v3949 = vrot.slane %v3948, 4
        %v3950 = vmax.f32 %v3948, %v3949
        %v3951 = vrot.slane %v3950, 2
        %v3952 = vmax.f32 %v3950, %v3951
        %v3953 = vrot.slane %v3952, 1
        %v3954 = vmax.f32 %v3952, %v3953
        %v3955 = vmax.f32 %v2473, %v2477
        %v3956 = vmax.f32 %v3955, %v2483
        %v3957 = vmax.f32 %v3956, %v2487
        %v3958 = vmax.f32 %v3957, %v2493
        %v3959 = vmax.f32 %v3958, %v2497
        %v3960 = vmax.f32 %v3959, %v2503
        %v3961 = vmax.f32 %v3960, %v2507
        %v3962 = vmax.f32 %v3961, %v2513
        %v3963 = vmax.f32 %v3962, %v2517
        %v3964 = vmax.f32 %v3963, %v2523
        %v3965 = vmax.f32 %v3964, %v2527
        %v3966 = vmax.f32 %v3965, %v2533
        %v3967 = vmax.f32 %v3966, %v2537
        %v3968 = vmax.f32 %v3967, %v2543
        %v3969 = vmax.f32 %v3968, %v2547
        %v3970 = vmax.f32 %v3969, %v2553
        %v3971 = vmax.f32 %v3970, %v2557
        %v3972 = vmax.f32 %v3971, %v2563
        %v3973 = vmax.f32 %v3972, %v2567
        %v3974 = vmax.f32 %v3973, %v2573
        %v3975 = vmax.f32 %v3974, %v2577
        %v3976 = vmax.f32 %v3975, %v2583
        %v3977 = vmax.f32 %v3976, %v2587
        %v3978 = vmax.f32 %v3977, %v2593
        %v3979 = vmax.f32 %v3978, %v2597
        %v3980 = vmax.f32 %v3979, %v2603
        %v3981 = vmax.f32 %v3980, %v2607
        %v3982 = vmax.f32 %v3981, %v2613
        %v3983 = vmax.f32 %v3982, %v2617
        %v3984 = vmax.f32 %v3983, %v2623
        %v3985 = vmax.f32 %v3984, %v2627
        %v3986 = vrot.slane %v3985, 4
        %v3987 = vmax.f32 %v3985, %v3986
        %v3988 = vrot.slane %v3987, 2
        %v3989 = vmax.f32 %v3987, %v3988
        %v3990 = vrot.slane %v3989, 1
        %v3991 = vmax.f32 %v3989, %v3990
        %v3992 = vmax.f32 %v2475, %v2479
        %v3993 = vmax.f32 %v3992, %v2485
        %v3994 = vmax.f32 %v3993, %v2489
        %v3995 = vmax.f32 %v3994, %v2495
        %v3996 = vmax.f32 %v3995, %v2499
        %v3997 = vmax.f32 %v3996, %v2505
        %v3998 = vmax.f32 %v3997, %v2509
        %v3999 = vmax.f32 %v3998, %v2515
        %v4000 = vmax.f32 %v3999, %v2519
        %v4001 = vmax.f32 %v4000, %v2525
        %v4002 = vmax.f32 %v4001, %v2529
        %v4003 = vmax.f32 %v4002, %v2535
        %v4004 = vmax.f32 %v4003, %v2539
        %v4005 = vmax.f32 %v4004, %v2545
        %v4006 = vmax.f32 %v4005, %v2549
        %v4007 = vmax.f32 %v4006, %v2555
        %v4008 = vmax.f32 %v4007, %v2559
        %v4009 = vmax.f32 %v4008, %v2565
        %v4010 = vmax.f32 %v4009, %v2569
        %v4011 = vmax.f32 %v4010, %v2575
        %v4012 = vmax.f32 %v4011, %v2579
        %v4013 = vmax.f32 %v4012, %v2585
        %v4014 = vmax.f32 %v4013, %v2589
        %v4015 = vmax.f32 %v4014, %v2595
        %v4016 = vmax.f32 %v4015, %v2599
        %v4017 = vmax.f32 %v4016, %v2605
        %v4018 = vmax.f32 %v4017, %v2609
        %v4019 = vmax.f32 %v4018, %v2615
        %v4020 = vmax.f32 %v4019, %v2619
        %v4021 = vmax.f32 %v4020, %v2625
        %v4022 = vmax.f32 %v4021, %v2629
        %v4023 = vrot.slane %v4022, 4
        %v4024 = vmax.f32 %v4022, %v4023
        %v4025 = vrot.slane %v4024, 2
        %v4026 = vmax.f32 %v4024, %v4025
        %v4027 = vrot.slane %v4026, 1
        %v4028 = vmax.f32 %v4026, %v4027
        %v4029 = vmax.f32 %v2666, %v2670
        %v4030 = vmax.f32 %v4029, %v2676
        %v4031 = vmax.f32 %v4030, %v2680
        %v4032 = vmax.f32 %v4031, %v2686
        %v4033 = vmax.f32 %v4032, %v2690
        %v4034 = vmax.f32 %v4033, %v2696
        %v4035 = vmax.f32 %v4034, %v2700
        %v4036 = vmax.f32 %v4035, %v2706
        %v4037 = vmax.f32 %v4036, %v2710
        %v4038 = vmax.f32 %v4037, %v2716
        %v4039 = vmax.f32 %v4038, %v2720
        %v4040 = vmax.f32 %v4039, %v2726
        %v4041 = vmax.f32 %v4040, %v2730
        %v4042 = vmax.f32 %v4041, %v2736
        %v4043 = vmax.f32 %v4042, %v2740
        %v4044 = vmax.f32 %v4043, %v2746
        %v4045 = vmax.f32 %v4044, %v2750
        %v4046 = vmax.f32 %v4045, %v2756
        %v4047 = vmax.f32 %v4046, %v2760
        %v4048 = vmax.f32 %v4047, %v2766
        %v4049 = vmax.f32 %v4048, %v2770
        %v4050 = vmax.f32 %v4049, %v2776
        %v4051 = vmax.f32 %v4050, %v2780
        %v4052 = vmax.f32 %v4051, %v2786
        %v4053 = vmax.f32 %v4052, %v2790
        %v4054 = vmax.f32 %v4053, %v2796
        %v4055 = vmax.f32 %v4054, %v2800
        %v4056 = vmax.f32 %v4055, %v2806
        %v4057 = vmax.f32 %v4056, %v2810
        %v4058 = vmax.f32 %v4057, %v2816
        %v4059 = vmax.f32 %v4058, %v2820
        %v4060 = vrot.slane %v4059, 4
        %v4061 = vmax.f32 %v4059, %v4060
        %v4062 = vrot.slane %v4061, 2
        %v4063 = vmax.f32 %v4061, %v4062
        %v4064 = vrot.slane %v4063, 1
        %v4065 = vmax.f32 %v4063, %v4064
        %v4066 = vmax.f32 %v2668, %v2672
        %v4067 = vmax.f32 %v4066, %v2678
        %v4068 = vmax.f32 %v4067, %v2682
        %v4069 = vmax.f32 %v4068, %v2688
        %v4070 = vmax.f32 %v4069, %v2692
        %v4071 = vmax.f32 %v4070, %v2698
        %v4072 = vmax.f32 %v4071, %v2702
        %v4073 = vmax.f32 %v4072, %v2708
        %v4074 = vmax.f32 %v4073, %v2712
        %v4075 = vmax.f32 %v4074, %v2718
        %v4076 = vmax.f32 %v4075, %v2722
        %v4077 = vmax.f32 %v4076, %v2728
        %v4078 = vmax.f32 %v4077, %v2732
        %v4079 = vmax.f32 %v4078, %v2738
        %v4080 = vmax.f32 %v4079, %v2742
        %v4081 = vmax.f32 %v4080, %v2748
        %v4082 = vmax.f32 %v4081, %v2752
        %v4083 = vmax.f32 %v4082, %v2758
        %v4084 = vmax.f32 %v4083, %v2762
        %v4085 = vmax.f32 %v4084, %v2768
        %v4086 = vmax.f32 %v4085, %v2772
        %v4087 = vmax.f32 %v4086, %v2778
        %v4088 = vmax.f32 %v4087, %v2782
        %v4089 = vmax.f32 %v4088, %v2788
        %v4090 = vmax.f32 %v4089, %v2792
        %v4091 = vmax.f32 %v4090, %v2798
        %v4092 = vmax.f32 %v4091, %v2802
        %v4093 = vmax.f32 %v4092, %v2808
        %v4094 = vmax.f32 %v4093, %v2812
        %v4095 = vmax.f32 %v4094, %v2818
        %v4096 = vmax.f32 %v4095, %v2822
        %v4097 = vrot.slane %v4096, 4
        %v4098 = vmax.f32 %v4096, %v4097
        %v4099 = vrot.slane %v4098, 2
        %v4100 = vmax.f32 %v4098, %v4099
        %v4101 = vrot.slane %v4100, 1
        %v4102 = vmax.f32 %v4100, %v4101
        %v4103 = vmax.f32 %v2859, %v2863
        %v4104 = vmax.f32 %v4103, %v2869
        %v4105 = vmax.f32 %v4104, %v2873
        %v4106 = vmax.f32 %v4105, %v2879
        %v4107 = vmax.f32 %v4106, %v2883
        %v4108 = vmax.f32 %v4107, %v2889
        %v4109 = vmax.f32 %v4108, %v2893
        %v4110 = vmax.f32 %v4109, %v2899
        %v4111 = vmax.f32 %v4110, %v2903
        %v4112 = vmax.f32 %v4111, %v2909
        %v4113 = vmax.f32 %v4112, %v2913
        %v4114 = vmax.f32 %v4113, %v2919
        %v4115 = vmax.f32 %v4114, %v2923
        %v4116 = vmax.f32 %v4115, %v2929
        %v4117 = vmax.f32 %v4116, %v2933
        %v4118 = vmax.f32 %v4117, %v2939
        %v4119 = vmax.f32 %v4118, %v2943
        %v4120 = vmax.f32 %v4119, %v2949
        %v4121 = vmax.f32 %v4120, %v2953
        %v4122 = vmax.f32 %v4121, %v2959
        %v4123 = vmax.f32 %v4122, %v2963
        %v4124 = vmax.f32 %v4123, %v2969
        %v4125 = vmax.f32 %v4124, %v2973
        %v4126 = vmax.f32 %v4125, %v2979
        %v4127 = vmax.f32 %v4126, %v2983
        %v4128 = vmax.f32 %v4127, %v2989
        %v4129 = vmax.f32 %v4128, %v2993
        %v4130 = vmax.f32 %v4129, %v2999
        %v4131 = vmax.f32 %v4130, %v3003
        %v4132 = vmax.f32 %v4131, %v3009
        %v4133 = vmax.f32 %v4132, %v3013
        %v4134 = vrot.slane %v4133, 4
        %v4135 = vmax.f32 %v4133, %v4134
        %v4136 = vrot.slane %v4135, 2
        %v4137 = vmax.f32 %v4135, %v4136
        %v4138 = vrot.slane %v4137, 1
        %v4139 = vmax.f32 %v4137, %v4138
        %v4140 = vmax.f32 %v2861, %v2865
        %v4141 = vmax.f32 %v4140, %v2871
        %v4142 = vmax.f32 %v4141, %v2875
        %v4143 = vmax.f32 %v4142, %v2881
        %v4144 = vmax.f32 %v4143, %v2885
        %v4145 = vmax.f32 %v4144, %v2891
        %v4146 = vmax.f32 %v4145, %v2895
        %v4147 = vmax.f32 %v4146, %v2901
        %v4148 = vmax.f32 %v4147, %v2905
        %v4149 = vmax.f32 %v4148, %v2911
        %v4150 = vmax.f32 %v4149, %v2915
        %v4151 = vmax.f32 %v4150, %v2921
        %v4152 = vmax.f32 %v4151, %v2925
        %v4153 = vmax.f32 %v4152, %v2931
        %v4154 = vmax.f32 %v4153, %v2935
        %v4155 = vmax.f32 %v4154, %v2941
        %v4156 = vmax.f32 %v4155, %v2945
        %v4157 = vmax.f32 %v4156, %v2951
        %v4158 = vmax.f32 %v4157, %v2955
        %v4159 = vmax.f32 %v4158, %v2961
        %v4160 = vmax.f32 %v4159, %v2965
        %v4161 = vmax.f32 %v4160, %v2971
        %v4162 = vmax.f32 %v4161, %v2975
        %v4163 = vmax.f32 %v4162, %v2981
        %v4164 = vmax.f32 %v4163, %v2985
        %v4165 = vmax.f32 %v4164, %v2991
        %v4166 = vmax.f32 %v4165, %v2995
        %v4167 = vmax.f32 %v4166, %v3001
        %v4168 = vmax.f32 %v4167, %v3005
        %v4169 = vmax.f32 %v4168, %v3011
        %v4170 = vmax.f32 %v4169, %v3015
        %v4171 = vrot.slane %v4170, 4
        %v4172 = vmax.f32 %v4170, %v4171
        %v4173 = vrot.slane %v4172, 2
        %v4174 = vmax.f32 %v4172, %v4173
        %v4175 = vrot.slane %v4174, 1
        %v4176 = vmax.f32 %v4174, %v4175
        %v4177 = vmul.f32 %v3313, 0.00390625
        %v4178 = vmul.f32 %v3314, 0.00390625
        %v4179 = vmul.f32 %v3315, 0.00390625
        %v4180 = vmul.f32 %v3316, 0.00390625
        %v4181 = vmul.f32 %v3317, 0.00390625
        %v4182 = vmul.f32 %v3318, 0.00390625
        %v4183 = vmul.f32 %v3319, 0.00390625
        %v4184 = vmul.f32 %v3320, 0.00390625
        %v4185 = vmul.f32 %v3873, 0.00390625
        %v4186 = vmul.f32 %v3874, 0.00390625
        %v4187 = vmul.f32 %v3875, 0.00390625
        %v4188 = vmul.f32 %v3876, 0.00390625
        %v4189 = vmul.f32 %v3877, 0.00390625
        %v4190 = vmul.f32 %v3878, 0.00390625
        %v4191 = vmul.f32 %v3879, 0.00390625
        %v4192 = vmul.f32 %v3880, 0.00390625
        %v4193 = vmul.f32 %v4177, %v4177
        %v4194 = vmul.f32 %v4178, %v4178
        %v4195 = vmul.f32 %v4179, %v4179
        %v4196 = vmul.f32 %v4180, %v4180
        %v4197 = vmul.f32 %v4181, %v4181
        %v4198 = vmul.f32 %v4182, %v4182
        %v4199 = vmul.f32 %v4183, %v4183
        %v4200 = vmul.f32 %v4184, %v4184
        %v4201 = vsub.f32 %v4185, %v4193
        %v4202 = vsub.f32 %v4186, %v4194
        %v4203 = vsub.f32 %v4187, %v4195
        %v4204 = vsub.f32 %v4188, %v4196
        %v4205 = vsub.f32 %v4189, %v4197
        %v4206 = vsub.f32 %v4190, %v4198
        %v4207 = vsub.f32 %v4191, %v4199
        %v4208 = vsub.f32 %v4192, %v4200
        %v4209 = vmax.f32 %v4201, 0.0
        %v4210 = vmax.f32 %v4202, 0.0
        %v4211 = vmax.f32 %v4203, 0.0
        %v4212 = vmax.f32 %v4204, 0.0
        %v4213 = vmax.f32 %v4205, 0.0
        %v4214 = vmax.f32 %v4206, 0.0
        %v4215 = vmax.f32 %v4207, 0.0
        %v4216 = vmax.f32 %v4208, 0.0
        %v4217 = vsub.f32 %v3917, %v4177
        %v4218 = vsub.f32 %v3954, %v4178
        %v4219 = vsub.f32 %v3991, %v4179
        %v4220 = vsub.f32 %v4028, %v4180
        %v4221 = vsub.f32 %v4065, %v4181
        %v4222 = vsub.f32 %v4102, %v4182
        %v4223 = vsub.f32 %v4139, %v4183
        %v4224 = vsub.f32 %v4176, %v4184
        %v4225 = vadd.f32 %v4209, 1e-05
        %v4226 = vadd.f32 %v4210, 1e-05
        %v4227 = vadd.f32 %v4211, 1e-05
        %v4228 = vadd.f32 %v4212, 1e-05
        %v4229 = vadd.f32 %v4213, 1e-05
        %v4230 = vadd.f32 %v4214, 1e-05
        %v4231 = vadd.f32 %v4215, 1e-05
        %v4232 = vadd.f32 %v4216, 1e-05
        %v4233 = vrsqrt.pop %v4225
        %v4234 = vrsqrt.pop %v4226
        %v4235 = vrsqrt.pop %v4227
        %v4236 = vrsqrt.pop %v4228
        %v4237 = vrsqrt.pop %v4229
        %v4238 = vrsqrt.pop %v4230
        %v4239 = vrsqrt.pop %v4231
        %v4240 = vrsqrt.pop %v4232
        %v4241 = vmul.f32 %v4217, %v4233
        %v4242 = vmul.f32 %v4218, %v4234
        %v4243 = vmul.f32 %v4219, %v4235
        %v4244 = vmul.f32 %v4220, %v4236
        %v4245 = vmul.f32 %v4221, %v4237
        %v4246 = vmul.f32 %v4222, %v4238
        %v4247 = vmul.f32 %v4223, %v4239
        %v4248 = vmul.f32 %v4224, %v4240
        %v4249 = vmax.f32 %v4241, 0.0
        %v4250 = vmax.f32 %v4242, 0.0
        %v4251 = vmax.f32 %v4243, 0.0
        %v4252 = vmax.f32 %v4244, 0.0
        %v4253 = vmax.f32 %v4245, 0.0
        %v4254 = vmax.f32 %v4246, 0.0
        %v4255 = vmax.f32 %v4247, 0.0
        %v4256 = vmax.f32 %v4248, 0.0
        %v4265 = vcombine.low %v4249, %v4250
        %v4266 = vcombine.low %v4251, %v4252
        %v4267 = vcombine.low %v4253, %v4254
        %v4268 = vcombine.low %v4255, %v4256
        %v4270 = vunpack.c.l.s4 1966171168
        %v4271 = vunpack.c.0.s8 %v4270
        %v4272 = vlaneseq
        %v4273 = vshrl.u32 %v4272, 7
        %v4274 = vsub.s32 %v4271, %v4273
        %v4275 = vrot.slane %v4265, %v4274
        %v4277 = vunpack.c.l.s4 1966171168
        %v4278 = vunpack.c.0.s8 %v4277
        %v4279 = vlaneseq
        %v4280 = vshrl.u32 %v4279, 7
        %v4281 = vsub.s32 %v4278, %v4280
        %v4282 = vrot.slane %v4266, %v4281
        %v4284 = vunpack.c.l.s4 1966171168
        %v4285 = vunpack.c.0.s8 %v4284
        %v4286 = vlaneseq
        %v4287 = vshrl.u32 %v4286, 7
        %v4288 = vsub.s32 %v4285, %v4287
        %v4289 = vrot.slane %v4267, %v4288
        %v4291 = vunpack.c.l.s4 1966171168
        %v4292 = vunpack.c.0.s8 %v4291
        %v4293 = vlaneseq
        %v4294 = vshrl.u32 %v4293, 7
        %v4295 = vsub.s32 %v4292, %v4294
        %v4296 = vrot.slane %v4268, %v4295
        %v4297 = vcombine.low %v4275, %v4282
        %v4298 = vcombine.low %v4289, %v4296
        %v4300 = vunpack.c.l.s4 1966171168
        %v4301 = vunpack.c.0.s8 %v4300
        %v4302 = vlaneseq
        %v4303 = vshrl.u32 %v4302, 7
        %v4304 = vsub.s32 %v4301, %v4303
        %v4305 = vrot.slane %v4297, %v4304
        %v4307 = vunpack.c.l.s4 1966171168
        %v4308 = vunpack.c.0.s8 %v4307
        %v4309 = vlaneseq
        %v4310 = vshrl.u32 %v4309, 7
        %v4311 = vsub.s32 %v4308, %v4310
        %v4312 = vrot.slane %v4298, %v4311
        %v4313 = vcombine.low %v4305, %v4312
        %4315 = vst [vmem:[%s205] sm:$0xff] %v4313
        %s4316 = sand.u32 %s116, 1
        %s4317 = scalar_lea.sflag [#allocation5], %s4316
        %s4318 = sand.u32 %s116, 1
        %s4319 = smul.addr %s4318, 8
        %s4320 = scalar_lea.vmem [#allocation6], %s4319
        // Predicated region
        $region41: #{tpu_custom_call.1} parent=35 // pred_check
          %p4321 = pneg %p126
        $region42: #{tpu_custom_call.1} parent=35 // pred_check_branch
          %4323 = sbr.rel (%p4321) target = $region44
        $region43: #{tpu_custom_call.1} parent=35 // pred_region
          %s4325 = ssub.s32 128, 128
          %4326 = vsyncadd %s4317, %s4325
          %s4327 = smul.addr %s19, 8
          %s4328 = smul.addr %s4327, 16
          %s4329 = scalar_lea.hbm %s4, %s4328
          %s4331 = sshll.u32 %s4320, 4
          %s4332 = int_to_ptr.vmem [resolvable:$true] %s4331
          %4334 = dma.vmem_to_hbm [thread:$0]  %s4332, 128, %s4329, %s4317
        $region44: #{tpu_custom_call.1} parent=35 // pred_fallthru
          _
      $region36: #{tpu_custom_call.1} parent=5 // pred_fallthru
        _
      %p4335 = scmp.le.s32.totalorder 2, %s14
      // Predicated region
      $region45: #{tpu_custom_call.1} parent=5 // pred_check
        %p4336 = pneg %p4335
      $region46: #{tpu_custom_call.1} parent=5 // pred_check_branch
        %4338 = sbr.rel (%p4336) target = $region48
      $region47: #{tpu_custom_call.1} parent=5 // pred_region
        %s4339 = ssub.s32 %s14, 2
        // Predicated region
        $region49: #{tpu_custom_call.1} parent=47 // pred_check
          %p4340 = pneg %p132
        $region50: #{tpu_custom_call.1} parent=47 // pred_check_branch
          %4342 = sbr.rel (%p4340) target = $region52
        $region51: #{tpu_custom_call.1} parent=47 // pred_region
          %s4343 = sand.u32 %s117, 1
          %s4344 = scalar_lea.sflag [#allocation5], %s4343
          %s4345 = sand.u32 %s117, 1
          %s4346 = smul.addr %s4345, 8
          %s4347 = scalar_lea.vmem [#allocation6], %s4346
          %4348 = dma.done %s4344, 128
        $region52: #{tpu_custom_call.1} parent=47 // pred_fallthru
          _
      $region48: #{tpu_custom_call.1} parent=5 // pred_fallthru
        _
    $region6: #{tpu_custom_call.1} parent=1 // loop_footer
      %s18 = sadd.s32 1, %s14
    $region7: #{tpu_custom_call.1} parent=1 // loop_footer_branch
      %13 = sbr.rel target = $region3
    $region8: #{tpu_custom_call.1} parent=1 // loop_exit
      _
    %4349 = vsyncpa [#allocation4], 1
    %s4350 = scalar_lea.sflag [#allocation4], 1
    %4351 = vsyncpa %s4350, 1
    %4352 = vsyncpa [#allocation5], 1
    %s4353 = scalar_lea.sflag [#allocation5], 1
    %4354 = vsyncpa %s4353, 1

</llo_original>
